<compile_context>
chip_gen: v7x
topology: tpu7x:2x2x1
jax: 0.10.0
libtpu: 0.0.40
codegen_flags: <defaults>
</compile_context>

<pallas_src>
import functools
import numpy as np
import jax
import jax.numpy as jnp
from jax import lax
from jax.experimental import pallas as pl
from jax.experimental.pallas import tpu as pltpu


_LANES = 128


def _round_up(v, m):
    return (v + m - 1) // m * m


# ---------------------------------------------------------------------------
# Fused single-stage kernel
# ---------------------------------------------------------------------------

def _stage_kernel(x_ref, w_in_ref, b_in_ref, wd_ref, bd_ref, w1_ref, b1_ref,
                  w_out_ref, b_out_ref, o_ref, *, dilations, compute_dtype):
    # x_ref:  (1, T, Pin)       activation for this batch element
    # w_in:   (Pin, P)          input 1x1 conv
    # wd:     (L, 3P, P)        stacked dilated convs, rows [tap(t-d); tap(t); tap(t+d)]
    # w1:     (L, P, P)         stacked per-layer 1x1 convs
    # w_out:  (P, P)            output 1x1 conv (classes zero-padded to P lanes)
    T = x_ref.shape[1]
    P = o_ref.shape[2]
    f32 = jnp.float32

    # ---- input 1x1 projection (MXU, f32 accumulation) ----
    act = (jnp.dot(x_ref[0], w_in_ref[...], preferred_element_type=f32)
           + b_in_ref[...])                                        # (T, P) f32

    # ---- dilated residual layers, fully unrolled; activation stays on-chip ----
    for l, d in enumerate(dilations):
        if d >= T:
            # Receptive field exceeds the sequence: both shifted taps are pure
            # zero padding (matches PyTorch's zero-padded Conv1d for d >= T).
            x_prev = jnp.zeros_like(act)
            x_next = jnp.zeros_like(act)
        else:
            # x[t-d] / x[t+d] via static sublane slice + zero pad (exactly the
            # zero-padded Conv1d taps; no rotate-direction ambiguity).
            zpad = jnp.zeros((d, P), f32)
            x_prev = jnp.concatenate([zpad, act[:T - d, :]], axis=0)   # x[t-d]
            x_next = jnp.concatenate([act[d:, :], zpad], axis=0)       # x[t+d]
        # Single K=3P MXU matmul for all three taps (lane-axis concat).
        x_cat = jnp.concatenate([x_prev, act, x_next], axis=-1)     # (T, 3P) f32
        h = (jnp.dot(x_cat.astype(compute_dtype), wd_ref[l],
                     preferred_element_type=f32) + bd_ref[l])
        h = jnp.maximum(h, 0.0)                                     # ReLU
        # TODO(synk): Dropout(0.3) identity in eval mode; not emitted.
        y = (jnp.dot(h.astype(compute_dtype), w1_ref[l],
                     preferred_element_type=f32) + b1_ref[l])
        act = act + y                                               # residual (f32)

    # ---- output 1x1 projection ----
    out = (jnp.dot(act.astype(compute_dtype), w_out_ref[...],
                   preferred_element_type=f32) + b_out_ref[...])
    o_ref[0] = out.astype(o_ref.dtype)


def stage_forward(x, p, compute_dtype):
    """One SingleStageTCN as a single fused pallas_call.  x: (N, T, Pin)."""
    N, T, Pin = x.shape
    P = p["w_in"].shape[1]
    L = p["wd"].shape[0]
    dilations = tuple(2 ** i for i in range(L))
    cd = compute_dtype

    kernel = functools.partial(_stage_kernel, dilations=dilations,
                               compute_dtype=cd)
    return pl.pallas_call(
        kernel,
        out_shape=jax.ShapeDtypeStruct((N, T, P), cd),
        grid=(N,),
        in_specs=[
            pl.BlockSpec((1, T, Pin), lambda n: (n, 0, 0)),    # activation
            pl.BlockSpec((Pin, P), lambda n: (0, 0)),          # w_in
            pl.BlockSpec((1, P), lambda n: (0, 0)),            # b_in
            pl.BlockSpec((L, 3 * P, P), lambda n: (0, 0, 0)),  # stacked dilated w
            pl.BlockSpec((L, 1, P), lambda n: (0, 0, 0)),      # stacked dilated b
            pl.BlockSpec((L, P, P), lambda n: (0, 0, 0)),      # stacked 1x1 w
            pl.BlockSpec((L, 1, P), lambda n: (0, 0, 0)),      # stacked 1x1 b
            pl.BlockSpec((P, P), lambda n: (0, 0)),            # w_out
            pl.BlockSpec((1, P), lambda n: (0, 0)),            # b_out
        ],
        out_specs=pl.BlockSpec((1, T, P), lambda n: (n, 0, 0)),
        compiler_params=pltpu.CompilerParams(
            dimension_semantics=("parallel",)),
    )(x.astype(cd), p["w_in"].astype(cd), p["b_in"],
      p["wd"].astype(cd), p["bd"], p["w1"].astype(cd), p["b1"],
      p["w_out"].astype(cd), p["b_out"])


# ---------------------------------------------------------------------------
# Parameters: synthetic init (torch layout semantics) + lane-padded packing
# ---------------------------------------------------------------------------

def init_params(key, num_stages, num_layers, num_f_maps, input_dim, num_classes):
    """Unpadded weights: 1x1 -> (Cin, Cout); k=3 -> (K, Cin, Cout)."""
    def nxt(k):
        return jax.random.split(k)

    def dense(k, cin, cout):
        return jax.random.normal(k, (cin, cout), jnp.float32) / np.sqrt(cin)

    params = []
    for s in range(num_stages):
        d_in = input_dim if s == 0 else num_classes
        F = num_f_maps
        key, k = nxt(key); w_in = dense(k, d_in, F)
        key, k = nxt(key); b_in = 0.01 * jax.random.normal(k, (1, F), jnp.float32)
        layers = []
        for _ in range(num_layers):
            key, k = nxt(key); wd = (jax.random.normal(k, (3, F, F), jnp.float32)
                                     / np.sqrt(3 * F))
            key, k = nxt(key); bd = 0.01 * jax.random.normal(k, (1, F), jnp.float32)
            key, k = nxt(key); w1 = dense(k, F, F)
            key, k = nxt(key); b1 = 0.01 * jax.random.normal(k, (1, F), jnp.float32)
            layers.append(dict(wd=wd, bd=bd, w1=w1, b1=b1))
        key, k = nxt(key); w_out = dense(k, F, num_classes)
        key, k = nxt(key); b_out = 0.01 * jax.random.normal(k, (1, num_classes),
                                                            jnp.float32)
        params.append(dict(w_in=w_in, b_in=b_in, layers=layers,
                           w_out=w_out, b_out=b_out))
    return params


def pack_params(raw_params, input_dim, num_f_maps, num_classes):
    """Zero-pad channel dims to 128 lanes and stack per-layer weights."""
    P = _round_up(max(num_f_maps, num_classes), _LANES)
    Pin0 = _round_up(input_dim, _LANES)
    F = num_f_maps
    packed = []
    for s, p in enumerate(raw_params):
        d_in = input_dim if s == 0 else num_classes
        Pin = Pin0 if s == 0 else P
        w_in = jnp.zeros((Pin, P), jnp.float32).at[:d_in, :F].set(p["w_in"])
        b_in = jnp.zeros((1, P), jnp.float32).at[:, :F].set(p["b_in"])
        L = len(p["layers"])
        wd = jnp.zeros((L, 3, P, P), jnp.float32)
        bd = jnp.zeros((L, 1, P), jnp.float32)
        w1 = jnp.zeros((L, P, P), jnp.float32)
        b1 = jnp.zeros((L, 1, P), jnp.float32)
        for l, lp in enumerate(p["layers"]):
            wd = wd.at[l, :, :F, :F].set(lp["wd"])
            bd = bd.at[l, :, :F].set(lp["bd"])
            w1 = w1.at[l, :F, :F].set(lp["w1"])
            b1 = b1.at[l, :, :F].set(lp["b1"])
        # (L, 3, P, P) -> (L, 3P, P): row order [tap(t-d); tap(t); tap(t+d)]
        # matches the kernel's [x_prev | x | x_next] lane concat.
        wd = wd.reshape(L, 3 * P, P)
        w_out = jnp.zeros((P, P), jnp.float32).at[:F, :num_classes].set(p["w_out"])
        b_out = jnp.zeros((1, P), jnp.float32).at[:, :num_classes].set(p["b_out"])
        packed.append(dict(w_in=w_in, b_in=b_in, wd=wd, bd=bd, w1=w1, b1=b1,
                           w_out=w_out, b_out=b_out))
    return packed


# ---------------------------------------------------------------------------
# Full MS_TCN forward
# ---------------------------------------------------------------------------

@functools.partial(jax.jit, static_argnames=("num_classes", "compute_dtype"))
def ms_tcn_forward(x_nct, kparams, *, num_classes, compute_dtype=jnp.float32):
    """x_nct: (N, C_in, T) (PyTorch layout) -> (num_stages, N, num_classes, T)."""
    N, Cin, T = x_nct.shape
    Pin = kparams[0]["w_in"].shape[0]
    x = jnp.transpose(x_nct, (0, 2, 1))                      # (N, T, Cin)
    x = jnp.pad(x, ((0, 0), (0, 0), (0, Pin - Cin)))         # lane-pad channels
    outs = []
    for p in kparams:
        x = stage_forward(x, p, compute_dtype)               # (N, T, P), padded
        outs.append(x)
    outs = [jnp.transpose(o[..., :num_classes].astype(jnp.float32), (0, 2, 1))
            for o in outs]
    return jnp.stack(outs, axis=0)


# ---------------------------------------------------------------------------
# Pure-JAX reference (lax conv, unpadded weights) for correctness checking
# ---------------------------------------------------------------------------

def _ref_conv1d(x_nct, w_pallas, b, dilation=1, ksize=1):
    if ksize == 1:
        w = jnp.transpose(w_pallas, (1, 0))[:, :, None]      # (Cout, Cin, 1)
        pad = 0
    else:
        w = jnp.transpose(w_pallas, (2, 1, 0))               # (Cout, Cin, K)
        pad = dilation
    y = lax.conv_general_dilated(x_nct, w, (1,), [(pad, pad)],
                                 rhs_dilation=(dilation,),
                                 dimension_numbers=("NCH", "OIH", "NCH"))
    return y + b.reshape(1, -1, 1)


def _ref_stage(x_nct, p):
    out = _ref_conv1d(x_nct, p["w_in"], p["b_in"])
    for i, lp in enumerate(p["layers"]):
        d = 2 ** i
        h = jnp.maximum(_ref_conv1d(out, lp["wd"], lp["bd"], d, ksize=3), 0.0)
        h = _ref_conv1d(h, lp["w1"], lp["b1"])
        out = h + out
    return _ref_conv1d(out, p["w_out"], p["b_out"])


def _ref_ms_tcn(x_nct, params):
    outs = []
    out = _ref_stage(x_nct, params[0])
    outs.append(out)
    for p in params[1:]:
        out = _ref_stage(out, p)
        outs.append(out)
    return jnp.stack(outs, axis=0)


# ---------------------------------------------------------------------------

if __name__ == "__main__":
    # MS_TCN(num_stages=2, num_layers=3, num_f_maps=32, input_dim=16,
    #        num_classes=8); batch=2, T=64.
    num_stages, num_layers, num_f_maps, input_dim, num_classes = 2, 3, 32, 16, 8
    N, T = 2, 64

    key = jax.random.PRNGKey(0)
    kx, kp = jax.random.split(key)
    x = jax.random.normal(kx, (N, input_dim, T), jnp.float32)     # (N, C_in, T)
    raw_params = init_params(kp, num_stages, num_layers, num_f_maps,
                             input_dim, num_classes)
    kparams = pack_params(raw_params, input_dim, num_f_maps, num_classes)

    # f32 path: strict check against the lax-conv reference.
    out = jax.block_until_ready(
        ms_tcn_forward(x, kparams, num_classes=num_classes,
                       compute_dtype=jnp.float32))
    assert out.shape == (num_stages, N, num_classes, T), out.shape

    ref = jax.block_until_ready(_ref_ms_tcn(x, raw_params))
    np.testing.assert_allclose(np.asarray(out), np.asarray(ref),
                               rtol=2e-4, atol=2e-4)

    print("KERNEL_OK")
</pallas_src>

<mosaic_0001>
module attributes {stable_mosaic.version = 11 : i64} {
  func.func @_stage_kernel(%arg0: i32, %arg1: memref<1x64x128xf32, #tpu.memory_space<vmem>>, %arg2: memref<128x128xf32, #tpu.memory_space<vmem>>, %arg3: memref<1x128xf32, #tpu.memory_space<vmem>>, %arg4: memref<3x384x128xf32, #tpu.memory_space<vmem>>, %arg5: memref<3x1x128xf32, #tpu.memory_space<vmem>>, %arg6: memref<3x128x128xf32, #tpu.memory_space<vmem>>, %arg7: memref<3x1x128xf32, #tpu.memory_space<vmem>>, %arg8: memref<128x128xf32, #tpu.memory_space<vmem>>, %arg9: memref<1x128xf32, #tpu.memory_space<vmem>>, %arg10: memref<1x64x128xf32, #tpu.memory_space<vmem>>) attributes {dimension_semantics = [#tpu.dimension_semantics<parallel>], iteration_bounds = array<i64: 2>, scalar_prefetch = 0 : i64, scratch_operands = 0 : i64, tpu.core_type = #tpu.core_type<tc>, window_params = [{transform_indices = @transform_0, window_bounds = array<i64: 1, 64, 128>}, {pipeline_mode = #tpu.pipeline_mode<synchronous>, transform_indices = @transform_1, window_bounds = array<i64: 128, 128>}, {pipeline_mode = #tpu.pipeline_mode<synchronous>, transform_indices = @transform_2, window_bounds = array<i64: 1, 128>}, {pipeline_mode = #tpu.pipeline_mode<synchronous>, transform_indices = @transform_3, window_bounds = array<i64: 3, 384, 128>}, {pipeline_mode = #tpu.pipeline_mode<synchronous>, transform_indices = @transform_4, window_bounds = array<i64: 3, 1, 128>}, {pipeline_mode = #tpu.pipeline_mode<synchronous>, transform_indices = @transform_5, window_bounds = array<i64: 3, 128, 128>}, {pipeline_mode = #tpu.pipeline_mode<synchronous>, transform_indices = @transform_6, window_bounds = array<i64: 3, 1, 128>}, {pipeline_mode = #tpu.pipeline_mode<synchronous>, transform_indices = @transform_7, window_bounds = array<i64: 128, 128>}, {pipeline_mode = #tpu.pipeline_mode<synchronous>, transform_indices = @transform_8, window_bounds = array<i64: 1, 128>}, {transform_indices = @transform_9, window_bounds = array<i64: 1, 64, 128>}]} {
    %c0 = arith.constant 0 : index
    %c0_0 = arith.constant 0 : index
    %c0_1 = arith.constant 0 : index
    %0 = vector.load %arg1[%c0, %c0_0, %c0_1] : memref<1x64x128xf32, #tpu.memory_space<vmem>>, vector<1x64x128xf32>
    %1 = vector.shape_cast %0 : vector<1x64x128xf32> to vector<64x128xf32>
    %c0_2 = arith.constant 0 : index
    %c0_3 = arith.constant 0 : index
    %2 = vector.load %arg2[%c0_2, %c0_3] : memref<128x128xf32, #tpu.memory_space<vmem>>, vector<128x128xf32>
    %cst = arith.constant dense<0.000000e+00> : vector<64x128xf32>
    %3 = tpu.matmul %1, %2, %cst {dimension_numbers = #tpu.dot_dimension_numbers<[1], [0], [0], [1], [0, 0, 1, 1], [], []>} : vector<64x128xf32>, vector<128x128xf32>, vector<64x128xf32> -> vector<64x128xf32>
    %c0_4 = arith.constant 0 : index
    %c0_5 = arith.constant 0 : index
    %4 = vector.load %arg3[%c0_4, %c0_5] : memref<1x128xf32, #tpu.memory_space<vmem>>, vector<1x128xf32>
    %5 = vector.broadcast %4 : vector<1x128xf32> to vector<64x128xf32>
    %6 = arith.addf %3, %5 : vector<64x128xf32>
    %cst_6 = arith.constant 0.000000e+00 : f32
    %7 = vector.broadcast %cst_6 : f32 to vector<1x128xf32>
    %8 = vector.extract_strided_slice %6 {offsets = [0, 0], sizes = [63, 128], strides = [1, 1]} : vector<64x128xf32> to vector<63x128xf32>
    %9 = tpu.concatenate %7, %8 in 0 : vector<1x128xf32>, vector<63x128xf32> -> vector<64x128xf32>
    %10 = vector.extract_strided_slice %6 {offsets = [1, 0], sizes = [63, 128], strides = [1, 1]} : vector<64x128xf32> to vector<63x128xf32>
    %11 = tpu.concatenate %10, %7 in 0 : vector<63x128xf32>, vector<1x128xf32> -> vector<64x128xf32>
    %12 = tpu.concatenate %9, %6, %11 in 1 : vector<64x128xf32>, vector<64x128xf32>, vector<64x128xf32> -> vector<64x384xf32>
    %c0_7 = arith.constant 0 : index
    %c0_8 = arith.constant 0 : index
    %c0_9 = arith.constant 0 : index
    %13 = vector.load %arg4[%c0_7, %c0_8, %c0_9] : memref<3x384x128xf32, #tpu.memory_space<vmem>>, vector<1x384x128xf32>
    %14 = vector.shape_cast %13 : vector<1x384x128xf32> to vector<384x128xf32>
    %cst_10 = arith.constant dense<0.000000e+00> : vector<64x128xf32>
    %15 = tpu.matmul %12, %14, %cst_10 {dimension_numbers = #tpu.dot_dimension_numbers<[1], [0], [0], [1], [0, 0, 1, 1], [], []>} : vector<64x384xf32>, vector<384x128xf32>, vector<64x128xf32> -> vector<64x128xf32>
    %c0_11 = arith.constant 0 : index
    %c0_12 = arith.constant 0 : index
    %c0_13 = arith.constant 0 : index
    %16 = vector.load %arg5[%c0_11, %c0_12, %c0_13] : memref<3x1x128xf32, #tpu.memory_space<vmem>>, vector<1x1x128xf32>
    %17 = vector.shape_cast %16 : vector<1x1x128xf32> to vector<1x128xf32>
    %18 = vector.broadcast %17 : vector<1x128xf32> to vector<64x128xf32>
    %19 = arith.addf %15, %18 : vector<64x128xf32>
    %cst_14 = arith.constant 0.000000e+00 : f32
    %20 = vector.broadcast %cst_14 : f32 to vector<64x128xf32>
    %21 = arith.maximumf %19, %20 : vector<64x128xf32>
    %c0_15 = arith.constant 0 : index
    %c0_16 = arith.constant 0 : index
    %c0_17 = arith.constant 0 : index
    %22 = vector.load %arg6[%c0_15, %c0_16, %c0_17] : memref<3x128x128xf32, #tpu.memory_space<vmem>>, vector<1x128x128xf32>
    %23 = vector.shape_cast %22 : vector<1x128x128xf32> to vector<128x128xf32>
    %cst_18 = arith.constant dense<0.000000e+00> : vector<64x128xf32>
    %24 = tpu.matmul %21, %23, %cst_18 {dimension_numbers = #tpu.dot_dimension_numbers<[1], [0], [0], [1], [0, 0, 1, 1], [], []>} : vector<64x128xf32>, vector<128x128xf32>, vector<64x128xf32> -> vector<64x128xf32>
    %c0_19 = arith.constant 0 : index
    %c0_20 = arith.constant 0 : index
    %c0_21 = arith.constant 0 : index
    %25 = vector.load %arg7[%c0_19, %c0_20, %c0_21] : memref<3x1x128xf32, #tpu.memory_space<vmem>>, vector<1x1x128xf32>
    %26 = vector.shape_cast %25 : vector<1x1x128xf32> to vector<1x128xf32>
    %27 = vector.broadcast %26 : vector<1x128xf32> to vector<64x128xf32>
    %28 = arith.addf %24, %27 : vector<64x128xf32>
    %29 = arith.addf %6, %28 : vector<64x128xf32>
    %cst_22 = arith.constant 0.000000e+00 : f32
    %30 = vector.broadcast %cst_22 : f32 to vector<2x128xf32>
    %31 = vector.extract_strided_slice %29 {offsets = [0, 0], sizes = [62, 128], strides = [1, 1]} : vector<64x128xf32> to vector<62x128xf32>
    %32 = tpu.concatenate %30, %31 in 0 : vector<2x128xf32>, vector<62x128xf32> -> vector<64x128xf32>
    %33 = vector.extract_strided_slice %29 {offsets = [2, 0], sizes = [62, 128], strides = [1, 1]} : vector<64x128xf32> to vector<62x128xf32>
    %34 = tpu.concatenate %33, %30 in 0 : vector<62x128xf32>, vector<2x128xf32> -> vector<64x128xf32>
    %35 = tpu.concatenate %32, %29, %34 in 1 : vector<64x128xf32>, vector<64x128xf32>, vector<64x128xf32> -> vector<64x384xf32>
    %c1 = arith.constant 1 : index
    %c0_23 = arith.constant 0 : index
    %c0_24 = arith.constant 0 : index
    %36 = vector.load %arg4[%c1, %c0_23, %c0_24] : memref<3x384x128xf32, #tpu.memory_space<vmem>>, vector<1x384x128xf32>
    %37 = vector.shape_cast %36 : vector<1x384x128xf32> to vector<384x128xf32>
    %cst_25 = arith.constant dense<0.000000e+00> : vector<64x128xf32>
    %38 = tpu.matmul %35, %37, %cst_25 {dimension_numbers = #tpu.dot_dimension_numbers<[1], [0], [0], [1], [0, 0, 1, 1], [], []>} : vector<64x384xf32>, vector<384x128xf32>, vector<64x128xf32> -> vector<64x128xf32>
    %c1_26 = arith.constant 1 : index
    %c0_27 = arith.constant 0 : index
    %c0_28 = arith.constant 0 : index
    %39 = vector.load %arg5[%c1_26, %c0_27, %c0_28] : memref<3x1x128xf32, #tpu.memory_space<vmem>>, vector<1x1x128xf32>
    %40 = vector.shape_cast %39 : vector<1x1x128xf32> to vector<1x128xf32>
    %41 = vector.broadcast %40 : vector<1x128xf32> to vector<64x128xf32>
    %42 = arith.addf %38, %41 : vector<64x128xf32>
    %cst_29 = arith.constant 0.000000e+00 : f32
    %43 = vector.broadcast %cst_29 : f32 to vector<64x128xf32>
    %44 = arith.maximumf %42, %43 : vector<64x128xf32>
    %c1_30 = arith.constant 1 : index
    %c0_31 = arith.constant 0 : index
    %c0_32 = arith.constant 0 : index
    %45 = vector.load %arg6[%c1_30, %c0_31, %c0_32] : memref<3x128x128xf32, #tpu.memory_space<vmem>>, vector<1x128x128xf32>
    %46 = vector.shape_cast %45 : vector<1x128x128xf32> to vector<128x128xf32>
    %cst_33 = arith.constant dense<0.000000e+00> : vector<64x128xf32>
    %47 = tpu.matmul %44, %46, %cst_33 {dimension_numbers = #tpu.dot_dimension_numbers<[1], [0], [0], [1], [0, 0, 1, 1], [], []>} : vector<64x128xf32>, vector<128x128xf32>, vector<64x128xf32> -> vector<64x128xf32>
    %c1_34 = arith.constant 1 : index
    %c0_35 = arith.constant 0 : index
    %c0_36 = arith.constant 0 : index
    %48 = vector.load %arg7[%c1_34, %c0_35, %c0_36] : memref<3x1x128xf32, #tpu.memory_space<vmem>>, vector<1x1x128xf32>
    %49 = vector.shape_cast %48 : vector<1x1x128xf32> to vector<1x128xf32>
    %50 = vector.broadcast %49 : vector<1x128xf32> to vector<64x128xf32>
    %51 = arith.addf %47, %50 : vector<64x128xf32>
    %52 = arith.addf %29, %51 : vector<64x128xf32>
    %cst_37 = arith.constant 0.000000e+00 : f32
    %53 = vector.broadcast %cst_37 : f32 to vector<4x128xf32>
    %54 = vector.extract_strided_slice %52 {offsets = [0, 0], sizes = [60, 128], strides = [1, 1]} : vector<64x128xf32> to vector<60x128xf32>
    %55 = tpu.concatenate %53, %54 in 0 : vector<4x128xf32>, vector<60x128xf32> -> vector<64x128xf32>
    %56 = vector.extract_strided_slice %52 {offsets = [4, 0], sizes = [60, 128], strides = [1, 1]} : vector<64x128xf32> to vector<60x128xf32>
    %57 = tpu.concatenate %56, %53 in 0 : vector<60x128xf32>, vector<4x128xf32> -> vector<64x128xf32>
    %58 = tpu.concatenate %55, %52, %57 in 1 : vector<64x128xf32>, vector<64x128xf32>, vector<64x128xf32> -> vector<64x384xf32>
    %c2 = arith.constant 2 : index
    %c0_38 = arith.constant 0 : index
    %c0_39 = arith.constant 0 : index
    %59 = vector.load %arg4[%c2, %c0_38, %c0_39] : memref<3x384x128xf32, #tpu.memory_space<vmem>>, vector<1x384x128xf32>
    %60 = vector.shape_cast %59 : vector<1x384x128xf32> to vector<384x128xf32>
    %cst_40 = arith.constant dense<0.000000e+00> : vector<64x128xf32>
    %61 = tpu.matmul %58, %60, %cst_40 {dimension_numbers = #tpu.dot_dimension_numbers<[1], [0], [0], [1], [0, 0, 1, 1], [], []>} : vector<64x384xf32>, vector<384x128xf32>, vector<64x128xf32> -> vector<64x128xf32>
    %c2_41 = arith.constant 2 : index
    %c0_42 = arith.constant 0 : index
    %c0_43 = arith.constant 0 : index
    %62 = vector.load %arg5[%c2_41, %c0_42, %c0_43] : memref<3x1x128xf32, #tpu.memory_space<vmem>>, vector<1x1x128xf32>
    %63 = vector.shape_cast %62 : vector<1x1x128xf32> to vector<1x128xf32>
    %64 = vector.broadcast %63 : vector<1x128xf32> to vector<64x128xf32>
    %65 = arith.addf %61, %64 : vector<64x128xf32>
    %cst_44 = arith.constant 0.000000e+00 : f32
    %66 = vector.broadcast %cst_44 : f32 to vector<64x128xf32>
    %67 = arith.maximumf %65, %66 : vector<64x128xf32>
    %c2_45 = arith.constant 2 : index
    %c0_46 = arith.constant 0 : index
    %c0_47 = arith.constant 0 : index
    %68 = vector.load %arg6[%c2_45, %c0_46, %c0_47] : memref<3x128x128xf32, #tpu.memory_space<vmem>>, vector<1x128x128xf32>
    %69 = vector.shape_cast %68 : vector<1x128x128xf32> to vector<128x128xf32>
    %cst_48 = arith.constant dense<0.000000e+00> : vector<64x128xf32>
    %70 = tpu.matmul %67, %69, %cst_48 {dimension_numbers = #tpu.dot_dimension_numbers<[1], [0], [0], [1], [0, 0, 1, 1], [], []>} : vector<64x128xf32>, vector<128x128xf32>, vector<64x128xf32> -> vector<64x128xf32>
    %c2_49 = arith.constant 2 : index
    %c0_50 = arith.constant 0 : index
    %c0_51 = arith.constant 0 : index
    %71 = vector.load %arg7[%c2_49, %c0_50, %c0_51] : memref<3x1x128xf32, #tpu.memory_space<vmem>>, vector<1x1x128xf32>
    %72 = vector.shape_cast %71 : vector<1x1x128xf32> to vector<1x128xf32>
    %73 = vector.broadcast %72 : vector<1x128xf32> to vector<64x128xf32>
    %74 = arith.addf %70, %73 : vector<64x128xf32>
    %75 = arith.addf %52, %74 : vector<64x128xf32>
    %c0_52 = arith.constant 0 : index
    %c0_53 = arith.constant 0 : index
    %76 = vector.load %arg8[%c0_52, %c0_53] : memref<128x128xf32, #tpu.memory_space<vmem>>, vector<128x128xf32>
    %cst_54 = arith.constant dense<0.000000e+00> : vector<64x128xf32>
    %77 = tpu.matmul %75, %76, %cst_54 {dimension_numbers = #tpu.dot_dimension_numbers<[1], [0], [0], [1], [0, 0, 1, 1], [], []>} : vector<64x128xf32>, vector<128x128xf32>, vector<64x128xf32> -> vector<64x128xf32>
    %c0_55 = arith.constant 0 : index
    %c0_56 = arith.constant 0 : index
    %78 = vector.load %arg9[%c0_55, %c0_56] : memref<1x128xf32, #tpu.memory_space<vmem>>, vector<1x128xf32>
    %79 = vector.broadcast %78 : vector<1x128xf32> to vector<64x128xf32>
    %80 = arith.addf %77, %79 : vector<64x128xf32>
    %c0_57 = arith.constant 0 : index
    %c0_58 = arith.constant 0 : index
    %c0_59 = arith.constant 0 : index
    %81 = vector.load %arg10[%c0_57, %c0_58, %c0_59] : memref<1x64x128xf32, #tpu.memory_space<vmem>>, vector<1x64x128xf32>
    %82 = vector.shape_cast %81 : vector<1x64x128xf32> to vector<64x128xf32>
    %83 = vector.shape_cast %80 : vector<64x128xf32> to vector<1x64x128xf32>
    tpu.vector_store %arg10[%c0_57, %c0_58, %c0_59], %83 {strides = array<i32>} : memref<1x64x128xf32, #tpu.memory_space<vmem>>, vector<1x64x128xf32>,
    return
  }
  func.func @transform_0(%arg0: i32) -> (i32, i32, i32) {
    %c0_i32 = arith.constant 0 : i32
    %c0_i32_0 = arith.constant 0 : i32
    %c0_i32_1 = arith.constant 0 : i32
    return %arg0, %c0_i32, %c0_i32_0 : i32, i32, i32
  }
  func.func @transform_1(%arg0: i32) -> (i32, i32) {
    %c0_i32 = arith.constant 0 : i32
    %c0_i32_0 = arith.constant 0 : i32
    %c0_i32_1 = arith.constant 0 : i32
    return %c0_i32, %c0_i32_0 : i32, i32
  }
  func.func @transform_2(%arg0: i32) -> (i32, i32) {
    %c0_i32 = arith.constant 0 : i32
    %c0_i32_0 = arith.constant 0 : i32
    %c0_i32_1 = arith.constant 0 : i32
    return %c0_i32, %c0_i32_0 : i32, i32
  }
  func.func @transform_3(%arg0: i32) -> (i32, i32, i32) {
    %c0_i32 = arith.constant 0 : i32
    %c0_i32_0 = arith.constant 0 : i32
    %c0_i32_1 = arith.constant 0 : i32
    %c0_i32_2 = arith.constant 0 : i32
    return %c0_i32, %c0_i32_0, %c0_i32_1 : i32, i32, i32
  }
  func.func @transform_4(%arg0: i32) -> (i32, i32, i32) {
    %c0_i32 = arith.constant 0 : i32
    %c0_i32_0 = arith.constant 0 : i32
    %c0_i32_1 = arith.constant 0 : i32
    %c0_i32_2 = arith.constant 0 : i32
    return %c0_i32, %c0_i32_0, %c0_i32_1 : i32, i32, i32
  }
  func.func @transform_5(%arg0: i32) -> (i32, i32, i32) {
    %c0_i32 = arith.constant 0 : i32
    %c0_i32_0 = arith.constant 0 : i32
    %c0_i32_1 = arith.constant 0 : i32
    %c0_i32_2 = arith.constant 0 : i32
    return %c0_i32, %c0_i32_0, %c0_i32_1 : i32, i32, i32
  }
  func.func @transform_6(%arg0: i32) -> (i32, i32, i32) {
    %c0_i32 = arith.constant 0 : i32
    %c0_i32_0 = arith.constant 0 : i32
    %c0_i32_1 = arith.constant 0 : i32
    %c0_i32_2 = arith.constant 0 : i32
    return %c0_i32, %c0_i32_0, %c0_i32_1 : i32, i32, i32
  }
  func.func @transform_7(%arg0: i32) -> (i32, i32) {
    %c0_i32 = arith.constant 0 : i32
    %c0_i32_0 = arith.constant 0 : i32
    %c0_i32_1 = arith.constant 0 : i32
    return %c0_i32, %c0_i32_0 : i32, i32
  }
  func.func @transform_8(%arg0: i32) -> (i32, i32) {
    %c0_i32 = arith.constant 0 : i32
    %c0_i32_0 = arith.constant 0 : i32
    %c0_i32_1 = arith.constant 0 : i32
    return %c0_i32, %c0_i32_0 : i32, i32
  }
  func.func @transform_9(%arg0: i32) -> (i32, i32, i32) {
    %c0_i32 = arith.constant 0 : i32
    %c0_i32_0 = arith.constant 0 : i32
    %c0_i32_1 = arith.constant 0 : i32
    return %arg0, %c0_i32, %c0_i32_0 : i32, i32, i32
  }
}

module attributes {stable_mosaic.version = 11 : i64} {
  func.func @_stage_kernel(%arg0: i32, %arg1: memref<1x64x128xf32, #tpu.memory_space<vmem>>, %arg2: memref<128x128xf32, #tpu.memory_space<vmem>>, %arg3: memref<1x128xf32, #tpu.memory_space<vmem>>, %arg4: memref<3x384x128xf32, #tpu.memory_space<vmem>>, %arg5: memref<3x1x128xf32, #tpu.memory_space<vmem>>, %arg6: memref<3x128x128xf32, #tpu.memory_space<vmem>>, %arg7: memref<3x1x128xf32, #tpu.memory_space<vmem>>, %arg8: memref<128x128xf32, #tpu.memory_space<vmem>>, %arg9: memref<1x128xf32, #tpu.memory_space<vmem>>, %arg10: memref<1x64x128xf32, #tpu.memory_space<vmem>>) attributes {dimension_semantics = [#tpu.dimension_semantics<parallel>], iteration_bounds = array<i64: 2>, scalar_prefetch = 0 : i64, scratch_operands = 0 : i64, tpu.core_type = #tpu.core_type<tc>, window_params = [{transform_indices = @transform_0, window_bounds = array<i64: 1, 64, 128>}, {pipeline_mode = #tpu.pipeline_mode<synchronous>, transform_indices = @transform_1, window_bounds = array<i64: 128, 128>}, {pipeline_mode = #tpu.pipeline_mode<synchronous>, transform_indices = @transform_2, window_bounds = array<i64: 1, 128>}, {pipeline_mode = #tpu.pipeline_mode<synchronous>, transform_indices = @transform_3, window_bounds = array<i64: 3, 384, 128>}, {pipeline_mode = #tpu.pipeline_mode<synchronous>, transform_indices = @transform_4, window_bounds = array<i64: 3, 1, 128>}, {pipeline_mode = #tpu.pipeline_mode<synchronous>, transform_indices = @transform_5, window_bounds = array<i64: 3, 128, 128>}, {pipeline_mode = #tpu.pipeline_mode<synchronous>, transform_indices = @transform_6, window_bounds = array<i64: 3, 1, 128>}, {pipeline_mode = #tpu.pipeline_mode<synchronous>, transform_indices = @transform_7, window_bounds = array<i64: 128, 128>}, {pipeline_mode = #tpu.pipeline_mode<synchronous>, transform_indices = @transform_8, window_bounds = array<i64: 1, 128>}, {transform_indices = @transform_9, window_bounds = array<i64: 1, 64, 128>}]} {
    %c0 = arith.constant 0 : index
    %c0_0 = arith.constant 0 : index
    %c0_1 = arith.constant 0 : index
    %0 = vector.load %arg1[%c0, %c0_0, %c0_1] : memref<1x64x128xf32, #tpu.memory_space<vmem>>, vector<1x64x128xf32>
    %1 = vector.shape_cast %0 : vector<1x64x128xf32> to vector<64x128xf32>
    %c0_2 = arith.constant 0 : index
    %c0_3 = arith.constant 0 : index
    %2 = vector.load %arg2[%c0_2, %c0_3] : memref<128x128xf32, #tpu.memory_space<vmem>>, vector<128x128xf32>
    %cst = arith.constant dense<0.000000e+00> : vector<64x128xf32>
    %3 = tpu.matmul %1, %2, %cst {dimension_numbers = #tpu.dot_dimension_numbers<[1], [0], [0], [1], [0, 0, 1, 1], [], []>} : vector<64x128xf32>, vector<128x128xf32>, vector<64x128xf32> -> vector<64x128xf32>
    %c0_4 = arith.constant 0 : index
    %c0_5 = arith.constant 0 : index
    %4 = vector.load %arg3[%c0_4, %c0_5] : memref<1x128xf32, #tpu.memory_space<vmem>>, vector<1x128xf32>
    %5 = vector.broadcast %4 : vector<1x128xf32> to vector<64x128xf32>
    %6 = arith.addf %3, %5 : vector<64x128xf32>
    %cst_6 = arith.constant 0.000000e+00 : f32
    %7 = vector.broadcast %cst_6 : f32 to vector<1x128xf32>
    %8 = vector.extract_strided_slice %6 {offsets = [0, 0], sizes = [63, 128], strides = [1, 1]} : vector<64x128xf32> to vector<63x128xf32>
    %9 = tpu.concatenate %7, %8 in 0 : vector<1x128xf32>, vector<63x128xf32> -> vector<64x128xf32>
    %10 = vector.extract_strided_slice %6 {offsets = [1, 0], sizes = [63, 128], strides = [1, 1]} : vector<64x128xf32> to vector<63x128xf32>
    %11 = tpu.concatenate %10, %7 in 0 : vector<63x128xf32>, vector<1x128xf32> -> vector<64x128xf32>
    %12 = tpu.concatenate %9, %6, %11 in 1 : vector<64x128xf32>, vector<64x128xf32>, vector<64x128xf32> -> vector<64x384xf32>
    %c0_7 = arith.constant 0 : index
    %c0_8 = arith.constant 0 : index
    %c0_9 = arith.constant 0 : index
    %13 = vector.load %arg4[%c0_7, %c0_8, %c0_9] : memref<3x384x128xf32, #tpu.memory_space<vmem>>, vector<1x384x128xf32>
    %14 = vector.shape_cast %13 : vector<1x384x128xf32> to vector<384x128xf32>
    %cst_10 = arith.constant dense<0.000000e+00> : vector<64x128xf32>
    %15 = tpu.matmul %12, %14, %cst_10 {dimension_numbers = #tpu.dot_dimension_numbers<[1], [0], [0], [1], [0, 0, 1, 1], [], []>} : vector<64x384xf32>, vector<384x128xf32>, vector<64x128xf32> -> vector<64x128xf32>
    %c0_11 = arith.constant 0 : index
    %c0_12 = arith.constant 0 : index
    %c0_13 = arith.constant 0 : index
    %16 = vector.load %arg5[%c0_11, %c0_12, %c0_13] : memref<3x1x128xf32, #tpu.memory_space<vmem>>, vector<1x1x128xf32>
    %17 = vector.shape_cast %16 : vector<1x1x128xf32> to vector<1x128xf32>
    %18 = vector.broadcast %17 : vector<1x128xf32> to vector<64x128xf32>
    %19 = arith.addf %15, %18 : vector<64x128xf32>
    %cst_14 = arith.constant 0.000000e+00 : f32
    %20 = vector.broadcast %cst_14 : f32 to vector<64x128xf32>
    %21 = arith.maximumf %19, %20 : vector<64x128xf32>
    %c0_15 = arith.constant 0 : index
    %c0_16 = arith.constant 0 : index
    %c0_17 = arith.constant 0 : index
    %22 = vector.load %arg6[%c0_15, %c0_16, %c0_17] : memref<3x128x128xf32, #tpu.memory_space<vmem>>, vector<1x128x128xf32>
    %23 = vector.shape_cast %22 : vector<1x128x128xf32> to vector<128x128xf32>
    %cst_18 = arith.constant dense<0.000000e+00> : vector<64x128xf32>
    %24 = tpu.matmul %21, %23, %cst_18 {dimension_numbers = #tpu.dot_dimension_numbers<[1], [0], [0], [1], [0, 0, 1, 1], [], []>} : vector<64x128xf32>, vector<128x128xf32>, vector<64x128xf32> -> vector<64x128xf32>
    %c0_19 = arith.constant 0 : index
    %c0_20 = arith.constant 0 : index
    %c0_21 = arith.constant 0 : index
    %25 = vector.load %arg7[%c0_19, %c0_20, %c0_21] : memref<3x1x128xf32, #tpu.memory_space<vmem>>, vector<1x1x128xf32>
    %26 = vector.shape_cast %25 : vector<1x1x128xf32> to vector<1x128xf32>
    %27 = vector.broadcast %26 : vector<1x128xf32> to vector<64x128xf32>
    %28 = arith.addf %24, %27 : vector<64x128xf32>
    %29 = arith.addf %6, %28 : vector<64x128xf32>
    %cst_22 = arith.constant 0.000000e+00 : f32
    %30 = vector.broadcast %cst_22 : f32 to vector<2x128xf32>
    %31 = vector.extract_strided_slice %29 {offsets = [0, 0], sizes = [62, 128], strides = [1, 1]} : vector<64x128xf32> to vector<62x128xf32>
    %32 = tpu.concatenate %30, %31 in 0 : vector<2x128xf32>, vector<62x128xf32> -> vector<64x128xf32>
    %33 = vector.extract_strided_slice %29 {offsets = [2, 0], sizes = [62, 128], strides = [1, 1]} : vector<64x128xf32> to vector<62x128xf32>
    %34 = tpu.concatenate %33, %30 in 0 : vector<62x128xf32>, vector<2x128xf32> -> vector<64x128xf32>
    %35 = tpu.concatenate %32, %29, %34 in 1 : vector<64x128xf32>, vector<64x128xf32>, vector<64x128xf32> -> vector<64x384xf32>
    %c1 = arith.constant 1 : index
    %c0_23 = arith.constant 0 : index
    %c0_24 = arith.constant 0 : index
    %36 = vector.load %arg4[%c1, %c0_23, %c0_24] : memref<3x384x128xf32, #tpu.memory_space<vmem>>, vector<1x384x128xf32>
    %37 = vector.shape_cast %36 : vector<1x384x128xf32> to vector<384x128xf32>
    %cst_25 = arith.constant dense<0.000000e+00> : vector<64x128xf32>
    %38 = tpu.matmul %35, %37, %cst_25 {dimension_numbers = #tpu.dot_dimension_numbers<[1], [0], [0], [1], [0, 0, 1, 1], [], []>} : vector<64x384xf32>, vector<384x128xf32>, vector<64x128xf32> -> vector<64x128xf32>
    %c1_26 = arith.constant 1 : index
    %c0_27 = arith.constant 0 : index
    %c0_28 = arith.constant 0 : index
    %39 = vector.load %arg5[%c1_26, %c0_27, %c0_28] : memref<3x1x128xf32, #tpu.memory_space<vmem>>, vector<1x1x128xf32>
    %40 = vector.shape_cast %39 : vector<1x1x128xf32> to vector<1x128xf32>
    %41 = vector.broadcast %40 : vector<1x128xf32> to vector<64x128xf32>
    %42 = arith.addf %38, %41 : vector<64x128xf32>
    %cst_29 = arith.constant 0.000000e+00 : f32
    %43 = vector.broadcast %cst_29 : f32 to vector<64x128xf32>
    %44 = arith.maximumf %42, %43 : vector<64x128xf32>
    %c1_30 = arith.constant 1 : index
    %c0_31 = arith.constant 0 : index
    %c0_32 = arith.constant 0 : index
    %45 = vector.load %arg6[%c1_30, %c0_31, %c0_32] : memref<3x128x128xf32, #tpu.memory_space<vmem>>, vector<1x128x128xf32>
    %46 = vector.shape_cast %45 : vector<1x128x128xf32> to vector<128x128xf32>
    %cst_33 = arith.constant dense<0.000000e+00> : vector<64x128xf32>
    %47 = tpu.matmul %44, %46, %cst_33 {dimension_numbers = #tpu.dot_dimension_numbers<[1], [0], [0], [1], [0, 0, 1, 1], [], []>} : vector<64x128xf32>, vector<128x128xf32>, vector<64x128xf32> -> vector<64x128xf32>
    %c1_34 = arith.constant 1 : index
    %c0_35 = arith.constant 0 : index
    %c0_36 = arith.constant 0 : index
    %48 = vector.load %arg7[%c1_34, %c0_35, %c0_36] : memref<3x1x128xf32, #tpu.memory_space<vmem>>, vector<1x1x128xf32>
    %49 = vector.shape_cast %48 : vector<1x1x128xf32> to vector<1x128xf32>
    %50 = vector.broadcast %49 : vector<1x128xf32> to vector<64x128xf32>
    %51 = arith.addf %47, %50 : vector<64x128xf32>
    %52 = arith.addf %29, %51 : vector<64x128xf32>
    %cst_37 = arith.constant 0.000000e+00 : f32
    %53 = vector.broadcast %cst_37 : f32 to vector<4x128xf32>
    %54 = vector.extract_strided_slice %52 {offsets = [0, 0], sizes = [60, 128], strides = [1, 1]} : vector<64x128xf32> to vector<60x128xf32>
    %55 = tpu.concatenate %53, %54 in 0 : vector<4x128xf32>, vector<60x128xf32> -> vector<64x128xf32>
    %56 = vector.extract_strided_slice %52 {offsets = [4, 0], sizes = [60, 128], strides = [1, 1]} : vector<64x128xf32> to vector<60x128xf32>
    %57 = tpu.concatenate %56, %53 in 0 : vector<60x128xf32>, vector<4x128xf32> -> vector<64x128xf32>
    %58 = tpu.concatenate %55, %52, %57 in 1 : vector<64x128xf32>, vector<64x128xf32>, vector<64x128xf32> -> vector<64x384xf32>
    %c2 = arith.constant 2 : index
    %c0_38 = arith.constant 0 : index
    %c0_39 = arith.constant 0 : index
    %59 = vector.load %arg4[%c2, %c0_38, %c0_39] : memref<3x384x128xf32, #tpu.memory_space<vmem>>, vector<1x384x128xf32>
    %60 = vector.shape_cast %59 : vector<1x384x128xf32> to vector<384x128xf32>
    %cst_40 = arith.constant dense<0.000000e+00> : vector<64x128xf32>
    %61 = tpu.matmul %58, %60, %cst_40 {dimension_numbers = #tpu.dot_dimension_numbers<[1], [0], [0], [1], [0, 0, 1, 1], [], []>} : vector<64x384xf32>, vector<384x128xf32>, vector<64x128xf32> -> vector<64x128xf32>
    %c2_41 = arith.constant 2 : index
    %c0_42 = arith.constant 0 : index
    %c0_43 = arith.constant 0 : index
    %62 = vector.load %arg5[%c2_41, %c0_42, %c0_43] : memref<3x1x128xf32, #tpu.memory_space<vmem>>, vector<1x1x128xf32>
    %63 = vector.shape_cast %62 : vector<1x1x128xf32> to vector<1x128xf32>
    %64 = vector.broadcast %63 : vector<1x128xf32> to vector<64x128xf32>
    %65 = arith.addf %61, %64 : vector<64x128xf32>
    %cst_44 = arith.constant 0.000000e+00 : f32
    %66 = vector.broadcast %cst_44 : f32 to vector<64x128xf32>
    %67 = arith.maximumf %65, %66 : vector<64x128xf32>
    %c2_45 = arith.constant 2 : index
    %c0_46 = arith.constant 0 : index
    %c0_47 = arith.constant 0 : index
    %68 = vector.load %arg6[%c2_45, %c0_46, %c0_47] : memref<3x128x128xf32, #tpu.memory_space<vmem>>, vector<1x128x128xf32>
    %69 = vector.shape_cast %68 : vector<1x128x128xf32> to vector<128x128xf32>
    %cst_48 = arith.constant dense<0.000000e+00> : vector<64x128xf32>
    %70 = tpu.matmul %67, %69, %cst_48 {dimension_numbers = #tpu.dot_dimension_numbers<[1], [0], [0], [1], [0, 0, 1, 1], [], []>} : vector<64x128xf32>, vector<128x128xf32>, vector<64x128xf32> -> vector<64x128xf32>
    %c2_49 = arith.constant 2 : index
    %c0_50 = arith.constant 0 : index
    %c0_51 = arith.constant 0 : index
    %71 = vector.load %arg7[%c2_49, %c0_50, %c0_51] : memref<3x1x128xf32, #tpu.memory_space<vmem>>, vector<1x1x128xf32>
    %72 = vector.shape_cast %71 : vector<1x1x128xf32> to vector<1x128xf32>
    %73 = vector.broadcast %72 : vector<1x128xf32> to vector<64x128xf32>
    %74 = arith.addf %70, %73 : vector<64x128xf32>
    %75 = arith.addf %52, %74 : vector<64x128xf32>
    %c0_52 = arith.constant 0 : index
    %c0_53 = arith.constant 0 : index
    %76 = vector.load %arg8[%c0_52, %c0_53] : memref<128x128xf32, #tpu.memory_space<vmem>>, vector<128x128xf32>
    %cst_54 = arith.constant dense<0.000000e+00> : vector<64x128xf32>
    %77 = tpu.matmul %75, %76, %cst_54 {dimension_numbers = #tpu.dot_dimension_numbers<[1], [0], [0], [1], [0, 0, 1, 1], [], []>} : vector<64x128xf32>, vector<128x128xf32>, vector<64x128xf32> -> vector<64x128xf32>
    %c0_55 = arith.constant 0 : index
    %c0_56 = arith.constant 0 : index
    %78 = vector.load %arg9[%c0_55, %c0_56] : memref<1x128xf32, #tpu.memory_space<vmem>>, vector<1x128xf32>
    %79 = vector.broadcast %78 : vector<1x128xf32> to vector<64x128xf32>
    %80 = arith.addf %77, %79 : vector<64x128xf32>
    %c0_57 = arith.constant 0 : index
    %c0_58 = arith.constant 0 : index
    %c0_59 = arith.constant 0 : index
    %81 = vector.load %arg10[%c0_57, %c0_58, %c0_59] : memref<1x64x128xf32, #tpu.memory_space<vmem>>, vector<1x64x128xf32>
    %82 = vector.shape_cast %81 : vector<1x64x128xf32> to vector<64x128xf32>
    %83 = vector.shape_cast %80 : vector<64x128xf32> to vector<1x64x128xf32>
    tpu.vector_store %arg10[%c0_57, %c0_58, %c0_59], %83 {strides = array<i32>} : memref<1x64x128xf32, #tpu.memory_space<vmem>>, vector<1x64x128xf32>,
    return
  }
  func.func @transform_0(%arg0: i32) -> (i32, i32, i32) {
    %c0_i32 = arith.constant 0 : i32
    %c0_i32_0 = arith.constant 0 : i32
    %c0_i32_1 = arith.constant 0 : i32
    return %arg0, %c0_i32, %c0_i32_0 : i32, i32, i32
  }
  func.func @transform_1(%arg0: i32) -> (i32, i32) {
    %c0_i32 = arith.constant 0 : i32
    %c0_i32_0 = arith.constant 0 : i32
    %c0_i32_1 = arith.constant 0 : i32
    return %c0_i32, %c0_i32_0 : i32, i32
  }
  func.func @transform_2(%arg0: i32) -> (i32, i32) {
    %c0_i32 = arith.constant 0 : i32
    %c0_i32_0 = arith.constant 0 : i32
    %c0_i32_1 = arith.constant 0 : i32
    return %c0_i32, %c0_i32_0 : i32, i32
  }
  func.func @transform_3(%arg0: i32) -> (i32, i32, i32) {
    %c0_i32 = arith.constant 0 : i32
    %c0_i32_0 = arith.constant 0 : i32
    %c0_i32_1 = arith.constant 0 : i32
    %c0_i32_2 = arith.constant 0 : i32
    return %c0_i32, %c0_i32_0, %c0_i32_1 : i32, i32, i32
  }
  func.func @transform_4(%arg0: i32) -> (i32, i32, i32) {
    %c0_i32 = arith.constant 0 : i32
    %c0_i32_0 = arith.constant 0 : i32
    %c0_i32_1 = arith.constant 0 : i32
    %c0_i32_2 = arith.constant 0 : i32
    return %c0_i32, %c0_i32_0, %c0_i32_1 : i32, i32, i32
  }
  func.func @transform_5(%arg0: i32) -> (i32, i32, i32) {
    %c0_i32 = arith.constant 0 : i32
    %c0_i32_0 = arith.constant 0 : i32
    %c0_i32_1 = arith.constant 0 : i32
    %c0_i32_2 = arith.constant 0 : i32
    return %c0_i32, %c0_i32_0, %c0_i32_1 : i32, i32, i32
  }
  func.func @transform_6(%arg0: i32) -> (i32, i32, i32) {
    %c0_i32 = arith.constant 0 : i32
    %c0_i32_0 = arith.constant 0 : i32
    %c0_i32_1 = arith.constant 0 : i32
    %c0_i32_2 = arith.constant 0 : i32
    return %c0_i32, %c0_i32_0, %c0_i32_1 : i32, i32, i32
  }
  func.func @transform_7(%arg0: i32) -> (i32, i32) {
    %c0_i32 = arith.constant 0 : i32
    %c0_i32_0 = arith.constant 0 : i32
    %c0_i32_1 = arith.constant 0 : i32
    return %c0_i32, %c0_i32_0 : i32, i32
  }
  func.func @transform_8(%arg0: i32) -> (i32, i32) {
    %c0_i32 = arith.constant 0 : i32
    %c0_i32_0 = arith.constant 0 : i32
    %c0_i32_1 = arith.constant 0 : i32
    return %c0_i32, %c0_i32_0 : i32, i32
  }
  func.func @transform_9(%arg0: i32) -> (i32, i32, i32) {
    %c0_i32 = arith.constant 0 : i32
    %c0_i32_0 = arith.constant 0 : i32
    %c0_i32_1 = arith.constant 0 : i32
    return %arg0, %c0_i32, %c0_i32_0 : i32, i32, i32
  }
}

</mosaic_0001>

<llo_original>
// kernel: ms_tcn_forward.3
$region0: #{ms_tcn_forward.3}
  #allocation0 [shape = 'u32[]', space=smem, size = 0x4, offset = 0x4, fixed_abs, tag = 'smem constant byte address 0x4 - core index']
  #allocation1 [shape = 'u32[144,128]{1,0:T(1,128)}', space=vmem, size = 0x12000, scoped, tag = 'internal scratch']
  %s0 = inlined_call_operand.vmem [shape: f32[2,64,128], index: 0, kind: input, shape index: {}]
  %s1 = inlined_call_operand.vmem [shape: f32[128,128], index: 1, kind: input, shape index: {}]
  %s2 = inlined_call_operand.vmem [shape: f32[1,128], index: 2, kind: input, shape index: {}]
  %s3 = inlined_call_operand.vmem [shape: f32[3,384,128], index: 3, kind: input, shape index: {}]
  %s4 = inlined_call_operand.vmem [shape: f32[3,1,128], index: 4, kind: input, shape index: {}]
  %s5 = inlined_call_operand.vmem [shape: f32[3,128,128], index: 5, kind: input, shape index: {}]
  %s6 = inlined_call_operand.vmem [shape: f32[3,1,128], index: 6, kind: input, shape index: {}]
  %s7 = inlined_call_operand.vmem [shape: f32[128,128], index: 7, kind: input, shape index: {}]
  %s8 = inlined_call_operand.vmem [shape: f32[1,128], index: 8, kind: input, shape index: {}]
  %s9 = inlined_call_operand.vmem [shape: f32[2,64,128], index: 9, kind: output, shape index: {}]
  %s10 = sld [smem:[#allocation0]]
  $region69: #{ms_tcn_forward.3} parent=0
    _
  %s12 = ssub.s32 1, %s10
  %s13 = scalar_select 0, %s12, %s10
  loop: start=0, step=1, limit=4
  $region2: #{ms_tcn_forward.3} parent=0 // loop_pre_header
    _
  $region3: #{ms_tcn_forward.3} parent=0 // loop_header
    %s15 = sphi 0, %s19
    %p16 = scmp.ge.s32.totalorder %s15, 4
    %s25 = sphi 0, %s27
    %s28 = sphi 0, %s25
    %s29 = sphi 0, %s28
    %s45 = sphi 0, %s29
    %s49 = sphi 0, %s49
    %s51 = sphi 0, %s49
    %s52 = sphi 0, %s51
    %s66 = sphi 0, %s52
    %s70 = sphi 0, %s70
    %s72 = sphi 0, %s70
    %s73 = sphi 0, %s72
    %s87 = sphi 0, %s73
    %s91 = sphi 0, %s91
    %s93 = sphi 0, %s91
    %s94 = sphi 0, %s93
    %s108 = sphi 0, %s94
    %s112 = sphi 0, %s112
    %s114 = sphi 0, %s112
    %s115 = sphi 0, %s114
    %s129 = sphi 0, %s115
    %s133 = sphi 0, %s133
    %s135 = sphi 0, %s133
    %s136 = sphi 0, %s135
    %s150 = sphi 0, %s136
    %s154 = sphi 0, %s154
    %s156 = sphi 0, %s154
    %s157 = sphi 0, %s156
    %s171 = sphi 0, %s157
    %s175 = sphi 0, %s175
    %s177 = sphi 0, %s175
    %s178 = sphi 0, %s177
    %s192 = sphi 0, %s178
    %s196 = sphi 0, %s196
    %s198 = sphi 0, %s196
    %s199 = sphi 0, %s198
    %s213 = sphi 0, %s199
    %s219 = sphi 0, %s221
    %s222 = sphi 0, %s219
    %s223 = sphi 0, %s222
    %s239 = sphi 0, %s223
  $region4: #{ms_tcn_forward.3} parent=0 // loop_header_branch
    %18 = sbr.rel (%p16) target = $region8
  $region5: #{ms_tcn_forward.3} parent=0 // loop_body
    %s20 = ssub.s32 %s15, 1
    %s21 = ssub.s32 %s15, 2
    %s22 = sadd.s32 %s15, 1
    %s23 = ssub.s32 %s15, %s22
    %p24 = scmp.eq.s32.totalorder %s23, 0
    %s26 = sadd.s32 %s25, 1
    %s27 = scalar_select %p24, %s25, %s26
    %p30 = pneg %p24
    %p31 = scmp.eq.s32.totalorder %s15, 1
    %p32 = por %p30, %p31
    %p33 = scmp.ne.s32.totalorder %s25, %s28
    %p34 = scmp.eq.s32.totalorder %s15, 0
    %p35 = por %p33, %p34
    %p36 = scmp.ne.s32.totalorder %s25, %s28
    %p37 = scmp.eq.s32.totalorder %s20, 1
    %p38 = por %p36, %p37
    %p39 = scmp.ne.s32.totalorder %s28, %s29
    %p40 = scmp.eq.s32.totalorder %s20, 0
    %p41 = por %p39, %p40
    %p42 = scmp.ne.s32.totalorder %s28, %s29
    %p43 = scmp.eq.s32.totalorder %s21, 1
    %p44 = por %p42, %p43
    %p46 = scmp.ne.s32.totalorder %s29, %s45
    %p47 = scmp.eq.s32.totalorder %s21, 0
    %p48 = por %p46, %p47
    %s50 = sadd.s32 %s49, 1
    %p53 = scmp.eq.s32.totalorder %s15, 1
    %p54 = scmp.ne.s32.totalorder %s49, %s51
    %p55 = scmp.eq.s32.totalorder %s15, 0
    %p56 = por %p54, %p55
    %p57 = scmp.ne.s32.totalorder %s49, %s51
    %p58 = scmp.eq.s32.totalorder %s20, 1
    %p59 = por %p57, %p58
    %p60 = scmp.ne.s32.totalorder %s51, %s52
    %p61 = scmp.eq.s32.totalorder %s20, 0
    %p62 = por %p60, %p61
    %p63 = scmp.ne.s32.totalorder %s51, %s52
    %p64 = scmp.eq.s32.totalorder %s21, 1
    %p65 = por %p63, %p64
    %p67 = scmp.ne.s32.totalorder %s52, %s66
    %p68 = scmp.eq.s32.totalorder %s21, 0
    %p69 = por %p67, %p68
    %s71 = sadd.s32 %s70, 1
    %p74 = scmp.eq.s32.totalorder %s15, 1
    %p75 = scmp.ne.s32.totalorder %s70, %s72
    %p76 = scmp.eq.s32.totalorder %s15, 0
    %p77 = por %p75, %p76
    %p78 = scmp.ne.s32.totalorder %s70, %s72
    %p79 = scmp.eq.s32.totalorder %s20, 1
    %p80 = por %p78, %p79
    %p81 = scmp.ne.s32.totalorder %s72, %s73
    %p82 = scmp.eq.s32.totalorder %s20, 0
    %p83 = por %p81, %p82
    %p84 = scmp.ne.s32.totalorder %s72, %s73
    %p85 = scmp.eq.s32.totalorder %s21, 1
    %p86 = por %p84, %p85
    %p88 = scmp.ne.s32.totalorder %s73, %s87
    %p89 = scmp.eq.s32.totalorder %s21, 0
    %p90 = por %p88, %p89
    %s92 = sadd.s32 %s91, 1
    %p95 = scmp.eq.s32.totalorder %s15, 1
    %p96 = scmp.ne.s32.totalorder %s91, %s93
    %p97 = scmp.eq.s32.totalorder %s15, 0
    %p98 = por %p96, %p97
    %p99 = scmp.ne.s32.totalorder %s91, %s93
    %p100 = scmp.eq.s32.totalorder %s20, 1
    %p101 = por %p99, %p100
    %p102 = scmp.ne.s32.totalorder %s93, %s94
    %p103 = scmp.eq.s32.totalorder %s20, 0
    %p104 = por %p102, %p103
    %p105 = scmp.ne.s32.totalorder %s93, %s94
    %p106 = scmp.eq.s32.totalorder %s21, 1
    %p107 = por %p105, %p106
    %p109 = scmp.ne.s32.totalorder %s94, %s108
    %p110 = scmp.eq.s32.totalorder %s21, 0
    %p111 = por %p109, %p110
    %s113 = sadd.s32 %s112, 1
    %p116 = scmp.eq.s32.totalorder %s15, 1
    %p117 = scmp.ne.s32.totalorder %s112, %s114
    %p118 = scmp.eq.s32.totalorder %s15, 0
    %p119 = por %p117, %p118
    %p120 = scmp.ne.s32.totalorder %s112, %s114
    %p121 = scmp.eq.s32.totalorder %s20, 1
    %p122 = por %p120, %p121
    %p123 = scmp.ne.s32.totalorder %s114, %s115
    %p124 = scmp.eq.s32.totalorder %s20, 0
    %p125 = por %p123, %p124
    %p126 = scmp.ne.s32.totalorder %s114, %s115
    %p127 = scmp.eq.s32.totalorder %s21, 1
    %p128 = por %p126, %p127
    %p130 = scmp.ne.s32.totalorder %s115, %s129
    %p131 = scmp.eq.s32.totalorder %s21, 0
    %p132 = por %p130, %p131
    %s134 = sadd.s32 %s133, 1
    %p137 = scmp.eq.s32.totalorder %s15, 1
    %p138 = scmp.ne.s32.totalorder %s133, %s135
    %p139 = scmp.eq.s32.totalorder %s15, 0
    %p140 = por %p138, %p139
    %p141 = scmp.ne.s32.totalorder %s133, %s135
    %p142 = scmp.eq.s32.totalorder %s20, 1
    %p143 = por %p141, %p142
    %p144 = scmp.ne.s32.totalorder %s135, %s136
    %p145 = scmp.eq.s32.totalorder %s20, 0
    %p146 = por %p144, %p145
    %p147 = scmp.ne.s32.totalorder %s135, %s136
    %p148 = scmp.eq.s32.totalorder %s21, 1
    %p149 = por %p147, %p148
    %p151 = scmp.ne.s32.totalorder %s136, %s150
    %p152 = scmp.eq.s32.totalorder %s21, 0
    %p153 = por %p151, %p152
    %s155 = sadd.s32 %s154, 1
    %p158 = scmp.eq.s32.totalorder %s15, 1
    %p159 = scmp.ne.s32.totalorder %s154, %s156
    %p160 = scmp.eq.s32.totalorder %s15, 0
    %p161 = por %p159, %p160
    %p162 = scmp.ne.s32.totalorder %s154, %s156
    %p163 = scmp.eq.s32.totalorder %s20, 1
    %p164 = por %p162, %p163
    %p165 = scmp.ne.s32.totalorder %s156, %s157
    %p166 = scmp.eq.s32.totalorder %s20, 0
    %p167 = por %p165, %p166
    %p168 = scmp.ne.s32.totalorder %s156, %s157
    %p169 = scmp.eq.s32.totalorder %s21, 1
    %p170 = por %p168, %p169
    %p172 = scmp.ne.s32.totalorder %s157, %s171
    %p173 = scmp.eq.s32.totalorder %s21, 0
    %p174 = por %p172, %p173
    %s176 = sadd.s32 %s175, 1
    %p179 = scmp.eq.s32.totalorder %s15, 1
    %p180 = scmp.ne.s32.totalorder %s175, %s177
    %p181 = scmp.eq.s32.totalorder %s15, 0
    %p182 = por %p180, %p181
    %p183 = scmp.ne.s32.totalorder %s175, %s177
    %p184 = scmp.eq.s32.totalorder %s20, 1
    %p185 = por %p183, %p184
    %p186 = scmp.ne.s32.totalorder %s177, %s178
    %p187 = scmp.eq.s32.totalorder %s20, 0
    %p188 = por %p186, %p187
    %p189 = scmp.ne.s32.totalorder %s177, %s178
    %p190 = scmp.eq.s32.totalorder %s21, 1
    %p191 = por %p189, %p190
    %p193 = scmp.ne.s32.totalorder %s178, %s192
    %p194 = scmp.eq.s32.totalorder %s21, 0
    %p195 = por %p193, %p194
    %s197 = sadd.s32 %s196, 1
    %p200 = scmp.eq.s32.totalorder %s15, 1
    %p201 = scmp.ne.s32.totalorder %s196, %s198
    %p202 = scmp.eq.s32.totalorder %s15, 0
    %p203 = por %p201, %p202
    %p204 = scmp.ne.s32.totalorder %s196, %s198
    %p205 = scmp.eq.s32.totalorder %s20, 1
    %p206 = por %p204, %p205
    %p207 = scmp.ne.s32.totalorder %s198, %s199
    %p208 = scmp.eq.s32.totalorder %s20, 0
    %p209 = por %p207, %p208
    %p210 = scmp.ne.s32.totalorder %s198, %s199
    %p211 = scmp.eq.s32.totalorder %s21, 1
    %p212 = por %p210, %p211
    %p214 = scmp.ne.s32.totalorder %s199, %s213
    %p215 = scmp.eq.s32.totalorder %s21, 0
    %p216 = por %p214, %p215
    %s217 = ssub.s32 %s15, %s22
    %p218 = scmp.eq.s32.totalorder %s217, 0
    %s220 = sadd.s32 %s219, 1
    %s221 = scalar_select %p218, %s219, %s220
    %p224 = pneg %p218
    %p225 = scmp.eq.s32.totalorder %s15, 1
    %p226 = por %p224, %p225
    %p227 = scmp.ne.s32.totalorder %s219, %s222
    %p228 = scmp.eq.s32.totalorder %s15, 0
    %p229 = por %p227, %p228
    %p230 = scmp.ne.s32.totalorder %s219, %s222
    %p231 = scmp.eq.s32.totalorder %s20, 1
    %p232 = por %p230, %p231
    %p233 = scmp.ne.s32.totalorder %s222, %s223
    %p234 = scmp.eq.s32.totalorder %s20, 0
    %p235 = por %p233, %p234
    %p236 = scmp.ne.s32.totalorder %s222, %s223
    %p237 = scmp.eq.s32.totalorder %s21, 1
    %p238 = por %p236, %p237
    %p240 = scmp.ne.s32.totalorder %s223, %s239
    %p241 = scmp.eq.s32.totalorder %s21, 0
    %p242 = por %p240, %p241
    %p243 = scmp.le.s32.totalorder 1, %s15
    %p244 = scmp.lt.s32.totalorder %s15, 3
    %p245 = pnand %p243, %p244
    %p246 = pneg %p245
    // Predicated region
    $region9: #{ms_tcn_forward.3} parent=5 // pred_check
      _
    $region10: #{ms_tcn_forward.3} parent=5 // pred_check_branch
      %248 = sbr.rel (%p245) target = $region12
    $region11: #{ms_tcn_forward.3} parent=5 // pred_region
      %s249 = ssub.s32 %s15, 1
      // Predicated region
      $region13: #{ms_tcn_forward.3} parent=11 // pred_check
        %p250 = pneg %p62
      $region14: #{ms_tcn_forward.3} parent=11 // pred_check_branch
        %252 = sbr.rel (%p250) target = $region16
      $region15: #{ms_tcn_forward.3} parent=11 // pred_region
        _
      $region16: #{ms_tcn_forward.3} parent=11 // pred_fallthru
        _
      // Predicated region
      $region17: #{ms_tcn_forward.3} parent=11 // pred_check
        %p253 = pneg %p83
      $region18: #{ms_tcn_forward.3} parent=11 // pred_check_branch
        %255 = sbr.rel (%p253) target = $region20
      $region19: #{ms_tcn_forward.3} parent=11 // pred_region
        _
      $region20: #{ms_tcn_forward.3} parent=11 // pred_fallthru
        _
      // Predicated region
      $region21: #{ms_tcn_forward.3} parent=11 // pred_check
        %p256 = pneg %p104
      $region22: #{ms_tcn_forward.3} parent=11 // pred_check_branch
        %258 = sbr.rel (%p256) target = $region24
      $region23: #{ms_tcn_forward.3} parent=11 // pred_region
        _
      $region24: #{ms_tcn_forward.3} parent=11 // pred_fallthru
        _
      // Predicated region
      $region25: #{ms_tcn_forward.3} parent=11 // pred_check
        %p259 = pneg %p125
      $region26: #{ms_tcn_forward.3} parent=11 // pred_check_branch
        %261 = sbr.rel (%p259) target = $region28
      $region27: #{ms_tcn_forward.3} parent=11 // pred_region
        _
      $region28: #{ms_tcn_forward.3} parent=11 // pred_fallthru
        _
      // Predicated region
      $region29: #{ms_tcn_forward.3} parent=11 // pred_check
        %p262 = pneg %p146
      $region30: #{ms_tcn_forward.3} parent=11 // pred_check_branch
        %264 = sbr.rel (%p262) target = $region32
      $region31: #{ms_tcn_forward.3} parent=11 // pred_region
        _
      $region32: #{ms_tcn_forward.3} parent=11 // pred_fallthru
        _
      // Predicated region
      $region33: #{ms_tcn_forward.3} parent=11 // pred_check
        %p265 = pneg %p167
      $region34: #{ms_tcn_forward.3} parent=11 // pred_check_branch
        %267 = sbr.rel (%p265) target = $region36
      $region35: #{ms_tcn_forward.3} parent=11 // pred_region
        _
      $region36: #{ms_tcn_forward.3} parent=11 // pred_fallthru
        _
      // Predicated region
      $region37: #{ms_tcn_forward.3} parent=11 // pred_check
        %p268 = pneg %p188
      $region38: #{ms_tcn_forward.3} parent=11 // pred_check_branch
        %270 = sbr.rel (%p268) target = $region40
      $region39: #{ms_tcn_forward.3} parent=11 // pred_region
        _
      $region40: #{ms_tcn_forward.3} parent=11 // pred_fallthru
        _
      // Predicated region
      $region41: #{ms_tcn_forward.3} parent=11 // pred_check
        %p271 = pneg %p209
      $region42: #{ms_tcn_forward.3} parent=11 // pred_check_branch
        %273 = sbr.rel (%p271) target = $region44
      $region43: #{ms_tcn_forward.3} parent=11 // pred_region
        _
      $region44: #{ms_tcn_forward.3} parent=11 // pred_fallthru
        _
    $region12: #{ms_tcn_forward.3} parent=5 // pred_fallthru
      _
    %p274 = scmp.lt.s32.totalorder %s15, 2
    // Predicated region
    $region45: #{ms_tcn_forward.3} parent=5 // pred_check
      %p275 = pneg %p274
    $region46: #{ms_tcn_forward.3} parent=5 // pred_check_branch
      %277 = sbr.rel (%p275) target = $region48
    $region47: #{ms_tcn_forward.3} parent=5 // pred_region
      // Predicated region
      $region49: #{ms_tcn_forward.3} parent=47 // pred_check
        %p278 = pneg %p35
      $region50: #{ms_tcn_forward.3} parent=47 // pred_check_branch
        %280 = sbr.rel (%p278) target = $region52
      $region51: #{ms_tcn_forward.3} parent=47 // pred_region
        %p281 = scmp.lt.s32.totalorder %s15, 1
        %s282 = scalar_select %p281, %s15, 1
        %s283 = smul.addr %s282, 8
        %s284 = smul.addr %s283, 8
        %s285 = scalar_lea.vmem %s0, %s284
      $region52: #{ms_tcn_forward.3} parent=47 // pred_fallthru
        _
    $region48: #{ms_tcn_forward.3} parent=5 // pred_fallthru
      _
    %p286 = scmp.le.s32.totalorder 1, %s15
    %p287 = scmp.lt.s32.totalorder %s15, 3
    %p288 = pnand %p286, %p287
    %p289 = pneg %p288
    // Predicated region
    $region53: #{ms_tcn_forward.3} parent=5 // pred_check
      _
    $region54: #{ms_tcn_forward.3} parent=5 // pred_check_branch
      %291 = sbr.rel (%p288) target = $region56
    $region55: #{ms_tcn_forward.3} parent=5 // pred_region
      %s292 = ssub.s32 %s15, 1
      %p293 = scmp.lt.s32.totalorder %s20, 1
      %s294 = scalar_select %p293, %s20, 1
      %s295 = smul.addr %s294, 8
      %s296 = smul.addr %s295, 8
      %s297 = scalar_lea.vmem %s0, %s296
      %p298 = pneg %p41
      %p299 = pneg %p38
      %p300 = pneg %p62
      %p301 = pneg %p59
      %p302 = pneg %p83
      %p303 = pneg %p80
      %p304 = pneg %p104
      %p305 = pneg %p101
      %p306 = pneg %p125
      %p307 = pneg %p122
      %p308 = pneg %p146
      %p309 = pneg %p143
      %p310 = pneg %p167
      %p311 = pneg %p164
      %p312 = pneg %p188
      %p313 = pneg %p185
      %p314 = pneg %p209
      %p315 = pneg %p206
      %p316 = pneg %p235
      %p317 = pneg %p232
      %p318 = scmp.lt.s32.totalorder %s20, 1
      %s319 = scalar_select %p318, %s20, 1
      %s320 = smul.addr %s319, 8
      %s321 = smul.addr %s320, 8
      %s322 = scalar_lea.vmem %s9, %s321
      %p323 = scmp.lt.s32.totalorder %s20, 1
      %s324 = scalar_select %p323, %s20, 1
      %s325 = smul.addr %s324, 8
      %s326 = smul.addr %s325, 8
      %s327 = scalar_lea.vmem %s0, %s326
      %p328 = scmp.lt.s32.totalorder %s20, 1
      %s329 = scalar_select %p328, %s20, 1
      %s330 = smul.addr %s329, 8
      %s331 = smul.addr %s330, 8
      %s332 = scalar_lea.vmem %s9, %s331
      %v333 = vld [vmem:[%s327] sm:$0xff]
      %v334 = vld [vmem:[%s327 + $0x8] sm:$0xff]
      %v335 = vld [vmem:[%s327 + $0x10] sm:$0xff]
      %v336 = vld [vmem:[%s327 + $0x18] sm:$0xff]
      %v337 = vld [vmem:[%s327 + $0x20] sm:$0xff]
      %v338 = vld [vmem:[%s327 + $0x28] sm:$0xff]
      %v339 = vld [vmem:[%s327 + $0x30] sm:$0xff]
      %v340 = vld [vmem:[%s327 + $0x38] sm:$0xff]
      %v341 = vld [vmem:[%s1] sm:$0xff]
      %v342 = vld [vmem:[%s1 + $0x8] sm:$0xff]
      %v343 = vld [vmem:[%s1 + $0x10] sm:$0xff]
      %v344 = vld [vmem:[%s1 + $0x18] sm:$0xff]
      %v345 = vld [vmem:[%s1 + $0x20] sm:$0xff]
      %v346 = vld [vmem:[%s1 + $0x28] sm:$0xff]
      %v347 = vld [vmem:[%s1 + $0x30] sm:$0xff]
      %v348 = vld [vmem:[%s1 + $0x38] sm:$0xff]
      %v349 = vld [vmem:[%s1 + $0x40] sm:$0xff]
      %v350 = vld [vmem:[%s1 + $0x48] sm:$0xff]
      %v351 = vld [vmem:[%s1 + $0x50] sm:$0xff]
      %v352 = vld [vmem:[%s1 + $0x58] sm:$0xff]
      %v353 = vld [vmem:[%s1 + $0x60] sm:$0xff]
      %v354 = vld [vmem:[%s1 + $0x68] sm:$0xff]
      %v355 = vld [vmem:[%s1 + $0x70] sm:$0xff]
      %v356 = vld [vmem:[%s1 + $0x78] sm:$0xff]
      %v357 = vld [vmem:[%s2] sm:$0x1]
      %v359 = vlaneseq
      %v360 = vshrl.u32 %v359, 7
      %v361 = vsub.s32 0, %v360
      %v362 = vrot.slane %v357, %v361
      %364 = vmatprep.subr.mxu0 0.0
      %365 = vmatpush1.msra.mxu0 %v341
      %366 = vmatprep.subr.mxu0 0.0
      %367 = vmatpush1.msra.mxu0 %v342
      %368 = vmatprep.subr.mxu0 0.0
      %369 = vmatpush1.msra.mxu0 %v343
      %370 = vmatprep.subr.mxu0 0.0
      %371 = vmatpush1.msra.mxu0 %v344
      %372 = vmatprep.subr.mxu0 0.0
      %373 = vmatpush1.msra.mxu0 %v345
      %374 = vmatprep.subr.mxu0 0.0
      %375 = vmatpush1.msra.mxu0 %v346
      %376 = vmatprep.subr.mxu0 0.0
      %377 = vmatpush1.msra.mxu0 %v347
      %378 = vmatprep.subr.mxu0 0.0
      %379 = vmatpush1.msra.mxu0 %v348
      %380 = vmatprep.subr.mxu0 0.0
      %381 = vmatpush1.msra.mxu0 %v349
      %382 = vmatprep.subr.mxu0 0.0
      %383 = vmatpush1.msra.mxu0 %v350
      %384 = vmatprep.subr.mxu0 0.0
      %385 = vmatpush1.msra.mxu0 %v351
      %386 = vmatprep.subr.mxu0 0.0
      %387 = vmatpush1.msra.mxu0 %v352
      %388 = vmatprep.subr.mxu0 0.0
      %389 = vmatpush1.msra.mxu0 %v353
      %390 = vmatprep.subr.mxu0 0.0
      %391 = vmatpush1.msra.mxu0 %v354
      %392 = vmatprep.subr.mxu0 0.0
      %393 = vmatpush1.msra.mxu0 %v355
      %394 = vmatprep.subr.mxu0 0.0
      %395 = vmatpush1.msra.mxu0 %v356
      %396 = vmatprep.subr.mxu0 0.0
      %397 = vmatpush1.msra.mxu0 0.0
      %398 = vmatprep.subr.mxu0 0.0
      %399 = vmatpush1.msra.mxu0 0.0
      %400 = vmatprep.subr.mxu0 0.0
      %401 = vmatpush1.msra.mxu0 0.0
      %402 = vmatprep.subr.mxu0 0.0
      %403 = vmatpush1.msra.mxu0 0.0
      %404 = vmatprep.subr.mxu0 0.0
      %405 = vmatpush1.msra.mxu0 0.0
      %406 = vmatprep.subr.mxu0 0.0
      %407 = vmatpush1.msra.mxu0 0.0
      %408 = vmatprep.subr.mxu0 0.0
      %409 = vmatpush1.msra.mxu0 0.0
      %410 = vmatprep.subr.mxu0 0.0
      %411 = vmatpush1.msra.mxu0 0.0
      %412 = vmatprep.subr.mxu0 0.0
      %413 = vmatpush1.msra.mxu0 0.0
      %414 = vmatprep.subr.mxu0 0.0
      %415 = vmatpush1.msra.mxu0 0.0
      %416 = vmatprep.subr.mxu0 0.0
      %417 = vmatpush1.msra.mxu0 0.0
      %418 = vmatprep.subr.mxu0 0.0
      %419 = vmatpush1.msra.mxu0 0.0
      %420 = vmatprep.subr.mxu0 0.0
      %421 = vmatpush1.msra.mxu0 0.0
      %422 = vmatprep.subr.mxu0 0.0
      %423 = vmatpush1.msra.mxu0 0.0
      %424 = vmatprep.subr.mxu0 0.0
      %425 = vmatpush1.msra.mxu0 0.0
      %426 = vmatprep.subr.mxu0 0.0
      %427 = vmatpush1.msra.mxu0 0.0
      %428 = vmatprep.mubr.f32.mxu0 0.0
      %429 = vmatmul.mubr.f32.gmra.mrb[0].mxu0 %v333
      %v430 = vpop.f32.mrb[0].mxu0
      %v431 = vadd.f32 %v362, %v430
      %v432 = vpop.f32.mrb[0].mxu0
      %433 = vmatprep.mubr.f32.mxu0 0.0
      %434 = vmatmul.mubr.f32.gmra.mrb[0].mxu0 %v334
      %v435 = vpop.f32.mrb[0].mxu0
      %v436 = vadd.f32 %v362, %v435
      %v437 = vpop.f32.mrb[0].mxu0
      %438 = vmatprep.mubr.f32.mxu0 0.0
      %439 = vmatmul.mubr.f32.gmra.mrb[0].mxu0 %v335
      %v440 = vpop.f32.mrb[0].mxu0
      %v441 = vadd.f32 %v362, %v440
      %v442 = vpop.f32.mrb[0].mxu0
      %443 = vmatprep.mubr.f32.mxu0 0.0
      %444 = vmatmul.mubr.f32.gmra.mrb[0].mxu0 %v336
      %v445 = vpop.f32.mrb[0].mxu0
      %v446 = vadd.f32 %v362, %v445
      %v447 = vpop.f32.mrb[0].mxu0
      %448 = vmatprep.mubr.f32.mxu0 0.0
      %449 = vmatmul.mubr.f32.gmra.mrb[0].mxu0 %v337
      %v450 = vpop.f32.mrb[0].mxu0
      %v451 = vadd.f32 %v362, %v450
      %v452 = vpop.f32.mrb[0].mxu0
      %453 = vmatprep.mubr.f32.mxu0 0.0
      %454 = vmatmul.mubr.f32.gmra.mrb[0].mxu0 %v338
      %v455 = vpop.f32.mrb[0].mxu0
      %v456 = vadd.f32 %v362, %v455
      %v457 = vpop.f32.mrb[0].mxu0
      %458 = vmatprep.mubr.f32.mxu0 0.0
      %459 = vmatmul.mubr.f32.gmra.mrb[0].mxu0 %v339
      %v460 = vpop.f32.mrb[0].mxu0
      %v461 = vadd.f32 %v362, %v460
      %v462 = vpop.f32.mrb[0].mxu0
      %463 = vmatprep.mubr.f32.mxu0 0.0
      %464 = vmatmul.mubr.f32.gmra.mrb[0].mxu0 %v340
      %v465 = vpop.f32.mrb[0].mxu0
      %v466 = vadd.f32 %v362, %v465
      %v467 = vpop.f32.mrb[0].mxu0
      %468 = vdwg.mxu0
      %vm477 = vcmask 1040384
      %v478 = vrot.slane %v431, 7
      %v479 = vrot.slane %v436, 7
      %v480 = vsel %vm477, %v478, %v479
      %v481 = vrot.slane %v441, 7
      %v482 = vsel %vm477, %v479, %v481
      %v483 = vrot.slane %v446, 7
      %v484 = vsel %vm477, %v481, %v483
      %v485 = vrot.slane %v451, 7
      %v486 = vsel %vm477, %v483, %v485
      %v487 = vrot.slane %v456, 7
      %v488 = vsel %vm477, %v485, %v487
      %v489 = vrot.slane %v461, 7
      %v490 = vsel %vm477, %v487, %v489
      %v491 = vrot.slane %v466, 7
      %v492 = vsel %vm477, %v489, %v491
      %v501 = vsel %vm477, 0.0, %v478
      %vm502 = vcmask 1046528
      %v503 = vrot.slane %v431, 1
      %v504 = vrot.slane %v436, 1
      %v505 = vsel %vm502, %v503, %v504
      %v506 = vrot.slane %v441, 1
      %v507 = vsel %vm502, %v504, %v506
      %v508 = vrot.slane %v446, 1
      %v509 = vsel %vm502, %v506, %v508
      %v510 = vrot.slane %v451, 1
      %v511 = vsel %vm502, %v508, %v510
      %v512 = vrot.slane %v456, 1
      %v513 = vsel %vm502, %v510, %v512
      %v514 = vrot.slane %v461, 1
      %v515 = vsel %vm502, %v512, %v514
      %v516 = vrot.slane %v466, 1
      %v517 = vsel %vm502, %v514, %v516
      %v526 = vsel %vm502, %v516, 0.0
      %v527 = vld [vmem:[%s3] sm:$0xff]
      %v528 = vld [vmem:[%s3 + $0x8] sm:$0xff]
      %v529 = vld [vmem:[%s3 + $0x10] sm:$0xff]
      %v530 = vld [vmem:[%s3 + $0x18] sm:$0xff]
      %v531 = vld [vmem:[%s3 + $0x20] sm:$0xff]
      %v532 = vld [vmem:[%s3 + $0x28] sm:$0xff]
      %v533 = vld [vmem:[%s3 + $0x30] sm:$0xff]
      %v534 = vld [vmem:[%s3 + $0x38] sm:$0xff]
      %v535 = vld [vmem:[%s3 + $0x40] sm:$0xff]
      %v536 = vld [vmem:[%s3 + $0x48] sm:$0xff]
      %v537 = vld [vmem:[%s3 + $0x50] sm:$0xff]
      %v538 = vld [vmem:[%s3 + $0x58] sm:$0xff]
      %v539 = vld [vmem:[%s3 + $0x60] sm:$0xff]
      %v540 = vld [vmem:[%s3 + $0x68] sm:$0xff]
      %v541 = vld [vmem:[%s3 + $0x70] sm:$0xff]
      %v542 = vld [vmem:[%s3 + $0x78] sm:$0xff]
      %v543 = vld [vmem:[%s3 + $0x80] sm:$0xff]
      %v544 = vld [vmem:[%s3 + $0x88] sm:$0xff]
      %v545 = vld [vmem:[%s3 + $0x90] sm:$0xff]
      %v546 = vld [vmem:[%s3 + $0x98] sm:$0xff]
      %v547 = vld [vmem:[%s3 + $0xa0] sm:$0xff]
      %v548 = vld [vmem:[%s3 + $0xa8] sm:$0xff]
      %v549 = vld [vmem:[%s3 + $0xb0] sm:$0xff]
      %v550 = vld [vmem:[%s3 + $0xb8] sm:$0xff]
      %v551 = vld [vmem:[%s3 + $0xc0] sm:$0xff]
      %v552 = vld [vmem:[%s3 + $0xc8] sm:$0xff]
      %v553 = vld [vmem:[%s3 + $0xd0] sm:$0xff]
      %v554 = vld [vmem:[%s3 + $0xd8] sm:$0xff]
      %v555 = vld [vmem:[%s3 + $0xe0] sm:$0xff]
      %v556 = vld [vmem:[%s3 + $0xe8] sm:$0xff]
      %v557 = vld [vmem:[%s3 + $0xf0] sm:$0xff]
      %v558 = vld [vmem:[%s3 + $0xf8] sm:$0xff]
      %v559 = vld [vmem:[%s3 + $0x100] sm:$0xff]
      %v560 = vld [vmem:[%s3 + $0x108] sm:$0xff]
      %v561 = vld [vmem:[%s3 + $0x110] sm:$0xff]
      %v562 = vld [vmem:[%s3 + $0x118] sm:$0xff]
      %v563 = vld [vmem:[%s3 + $0x120] sm:$0xff]
      %v564 = vld [vmem:[%s3 + $0x128] sm:$0xff]
      %v565 = vld [vmem:[%s3 + $0x130] sm:$0xff]
      %v566 = vld [vmem:[%s3 + $0x138] sm:$0xff]
      %v567 = vld [vmem:[%s3 + $0x140] sm:$0xff]
      %v568 = vld [vmem:[%s3 + $0x148] sm:$0xff]
      %v569 = vld [vmem:[%s3 + $0x150] sm:$0xff]
      %v570 = vld [vmem:[%s3 + $0x158] sm:$0xff]
      %v571 = vld [vmem:[%s3 + $0x160] sm:$0xff]
      %v572 = vld [vmem:[%s3 + $0x168] sm:$0xff]
      %v573 = vld [vmem:[%s3 + $0x170] sm:$0xff]
      %v574 = vld [vmem:[%s3 + $0x178] sm:$0xff]
      %v575 = vld [vmem:[%s4] sm:$0x1]
      %v577 = vlaneseq
      %v578 = vshrl.u32 %v577, 7
      %v579 = vsub.s32 0, %v578
      %v580 = vrot.slane %v575, %v579
      %582 = vmatprep.subr.mxu0 0.0
      %583 = vmatpush1.msra.mxu0 %v527
      %584 = vmatprep.subr.mxu0 0.0
      %585 = vmatpush1.msra.mxu0 %v528
      %586 = vmatprep.subr.mxu0 0.0
      %587 = vmatpush1.msra.mxu0 %v529
      %588 = vmatprep.subr.mxu0 0.0
      %589 = vmatpush1.msra.mxu0 %v530
      %590 = vmatprep.subr.mxu0 0.0
      %591 = vmatpush1.msra.mxu0 %v531
      %592 = vmatprep.subr.mxu0 0.0
      %593 = vmatpush1.msra.mxu0 %v532
      %594 = vmatprep.subr.mxu0 0.0
      %595 = vmatpush1.msra.mxu0 %v533
      %596 = vmatprep.subr.mxu0 0.0
      %597 = vmatpush1.msra.mxu0 %v534
      %598 = vmatprep.subr.mxu0 0.0
      %599 = vmatpush1.msra.mxu0 %v535
      %600 = vmatprep.subr.mxu0 0.0
      %601 = vmatpush1.msra.mxu0 %v536
      %602 = vmatprep.subr.mxu0 0.0
      %603 = vmatpush1.msra.mxu0 %v537
      %604 = vmatprep.subr.mxu0 0.0
      %605 = vmatpush1.msra.mxu0 %v538
      %606 = vmatprep.subr.mxu0 0.0
      %607 = vmatpush1.msra.mxu0 %v539
      %608 = vmatprep.subr.mxu0 0.0
      %609 = vmatpush1.msra.mxu0 %v540
      %610 = vmatprep.subr.mxu0 0.0
      %611 = vmatpush1.msra.mxu0 %v541
      %612 = vmatprep.subr.mxu0 0.0
      %613 = vmatpush1.msra.mxu0 %v542
      %614 = vmatprep.subr.mxu0 0.0
      %615 = vmatpush1.msra.mxu0 %v543
      %616 = vmatprep.subr.mxu0 0.0
      %617 = vmatpush1.msra.mxu0 %v544
      %618 = vmatprep.subr.mxu0 0.0
      %619 = vmatpush1.msra.mxu0 %v545
      %620 = vmatprep.subr.mxu0 0.0
      %621 = vmatpush1.msra.mxu0 %v546
      %622 = vmatprep.subr.mxu0 0.0
      %623 = vmatpush1.msra.mxu0 %v547
      %624 = vmatprep.subr.mxu0 0.0
      %625 = vmatpush1.msra.mxu0 %v548
      %626 = vmatprep.subr.mxu0 0.0
      %627 = vmatpush1.msra.mxu0 %v549
      %628 = vmatprep.subr.mxu0 0.0
      %629 = vmatpush1.msra.mxu0 %v550
      %630 = vmatprep.subr.mxu0 0.0
      %631 = vmatpush1.msra.mxu0 %v551
      %632 = vmatprep.subr.mxu0 0.0
      %633 = vmatpush1.msra.mxu0 %v552
      %634 = vmatprep.subr.mxu0 0.0
      %635 = vmatpush1.msra.mxu0 %v553
      %636 = vmatprep.subr.mxu0 0.0
      %637 = vmatpush1.msra.mxu0 %v554
      %638 = vmatprep.subr.mxu0 0.0
      %639 = vmatpush1.msra.mxu0 %v555
      %640 = vmatprep.subr.mxu0 0.0
      %641 = vmatpush1.msra.mxu0 %v556
      %642 = vmatprep.subr.mxu0 0.0
      %643 = vmatpush1.msra.mxu0 %v557
      %644 = vmatprep.subr.mxu0 0.0
      %645 = vmatpush1.msra.mxu0 %v558
      %646 = vmatprep.mubr.f32.mxu0 %v431
      %647 = vmatmul.mubr.f32.gmra.mrb[0].mxu0 %v501
      %v648 = vpop.f32.mrb[0].mxu0
      %v649 = vadd.f32 %v580, %v648
      %v650 = vpop.f32.mrb[0].mxu0
      %651 = vmatprep.mubr.f32.mxu0 %v436
      %652 = vmatmul.mubr.f32.gmra.mrb[0].mxu0 %v480
      %v653 = vpop.f32.mrb[0].mxu0
      %v654 = vadd.f32 %v580, %v653
      %v655 = vpop.f32.mrb[0].mxu0
      %656 = vmatprep.mubr.f32.mxu0 %v441
      %657 = vmatmul.mubr.f32.gmra.mrb[0].mxu0 %v482
      %v658 = vpop.f32.mrb[0].mxu0
      %v659 = vadd.f32 %v580, %v658
      %v660 = vpop.f32.mrb[0].mxu0
      %661 = vmatprep.mubr.f32.mxu0 %v446
      %662 = vmatmul.mubr.f32.gmra.mrb[0].mxu0 %v484
      %v663 = vpop.f32.mrb[0].mxu0
      %v664 = vadd.f32 %v580, %v663
      %v665 = vpop.f32.mrb[0].mxu0
      %666 = vmatprep.mubr.f32.mxu0 %v451
      %667 = vmatmul.mubr.f32.gmra.mrb[0].mxu0 %v486
      %v668 = vpop.f32.mrb[0].mxu0
      %v669 = vadd.f32 %v580, %v668
      %v670 = vpop.f32.mrb[0].mxu0
      %671 = vmatprep.mubr.f32.mxu0 %v456
      %672 = vmatmul.mubr.f32.gmra.mrb[0].mxu0 %v488
      %v673 = vpop.f32.mrb[0].mxu0
      %v674 = vadd.f32 %v580, %v673
      %v675 = vpop.f32.mrb[0].mxu0
      %676 = vmatprep.mubr.f32.mxu0 %v461
      %677 = vmatmul.mubr.f32.gmra.mrb[0].mxu0 %v490
      %v678 = vpop.f32.mrb[0].mxu0
      %v679 = vadd.f32 %v580, %v678
      %v680 = vpop.f32.mrb[0].mxu0
      %681 = vmatprep.mubr.f32.mxu0 %v466
      %682 = vmatmul.mubr.f32.gmra.mrb[0].mxu0 %v492
      %v683 = vpop.f32.mrb[0].mxu0
      %v684 = vadd.f32 %v580, %v683
      %v685 = vpop.f32.mrb[0].mxu0
      %686 = vdwg.mxu0
      %687 = vmatprep.subr.mxu0 0.0
      %688 = vmatpush1.msra.mxu0 %v559
      %689 = vmatprep.subr.mxu0 0.0
      %690 = vmatpush1.msra.mxu0 %v560
      %691 = vmatprep.subr.mxu0 0.0
      %692 = vmatpush1.msra.mxu0 %v561
      %693 = vmatprep.subr.mxu0 0.0
      %694 = vmatpush1.msra.mxu0 %v562
      %695 = vmatprep.subr.mxu0 0.0
      %696 = vmatpush1.msra.mxu0 %v563
      %697 = vmatprep.subr.mxu0 0.0
      %698 = vmatpush1.msra.mxu0 %v564
      %699 = vmatprep.subr.mxu0 0.0
      %700 = vmatpush1.msra.mxu0 %v565
      %701 = vmatprep.subr.mxu0 0.0
      %702 = vmatpush1.msra.mxu0 %v566
      %703 = vmatprep.subr.mxu0 0.0
      %704 = vmatpush1.msra.mxu0 %v567
      %705 = vmatprep.subr.mxu0 0.0
      %706 = vmatpush1.msra.mxu0 %v568
      %707 = vmatprep.subr.mxu0 0.0
      %708 = vmatpush1.msra.mxu0 %v569
      %709 = vmatprep.subr.mxu0 0.0
      %710 = vmatpush1.msra.mxu0 %v570
      %711 = vmatprep.subr.mxu0 0.0
      %712 = vmatpush1.msra.mxu0 %v571
      %713 = vmatprep.subr.mxu0 0.0
      %714 = vmatpush1.msra.mxu0 %v572
      %715 = vmatprep.subr.mxu0 0.0
      %716 = vmatpush1.msra.mxu0 %v573
      %717 = vmatprep.subr.mxu0 0.0
      %718 = vmatpush1.msra.mxu0 %v574
      %719 = vmatprep.subr.mxu0 0.0
      %720 = vmatpush1.msra.mxu0 0.0
      %721 = vmatprep.subr.mxu0 0.0
      %722 = vmatpush1.msra.mxu0 0.0
      %723 = vmatprep.subr.mxu0 0.0
      %724 = vmatpush1.msra.mxu0 0.0
      %725 = vmatprep.subr.mxu0 0.0
      %726 = vmatpush1.msra.mxu0 0.0
      %727 = vmatprep.subr.mxu0 0.0
      %728 = vmatpush1.msra.mxu0 0.0
      %729 = vmatprep.subr.mxu0 0.0
      %730 = vmatpush1.msra.mxu0 0.0
      %731 = vmatprep.subr.mxu0 0.0
      %732 = vmatpush1.msra.mxu0 0.0
      %733 = vmatprep.subr.mxu0 0.0
      %734 = vmatpush1.msra.mxu0 0.0
      %735 = vmatprep.subr.mxu0 0.0
      %736 = vmatpush1.msra.mxu0 0.0
      %737 = vmatprep.subr.mxu0 0.0
      %738 = vmatpush1.msra.mxu0 0.0
      %739 = vmatprep.subr.mxu0 0.0
      %740 = vmatpush1.msra.mxu0 0.0
      %741 = vmatprep.subr.mxu0 0.0
      %742 = vmatpush1.msra.mxu0 0.0
      %743 = vmatprep.subr.mxu0 0.0
      %744 = vmatpush1.msra.mxu0 0.0
      %745 = vmatprep.subr.mxu0 0.0
      %746 = vmatpush1.msra.mxu0 0.0
      %747 = vmatprep.subr.mxu0 0.0
      %748 = vmatpush1.msra.mxu0 0.0
      %749 = vmatprep.subr.mxu0 0.0
      %750 = vmatpush1.msra.mxu0 0.0
      %751 = vmatprep.mubr.f32.mxu0 0.0
      %752 = vmatmul.mubr.f32.gmra.mrb[0].mxu0 %v505
      %v753 = vpop.f32.mrb[0].mxu0
      %v754 = vadd.f32 %v649, %v753
      %v755 = vpop.f32.mrb[0].mxu0
      %756 = vmatprep.mubr.f32.mxu0 0.0
      %757 = vmatmul.mubr.f32.gmra.mrb[0].mxu0 %v507
      %v758 = vpop.f32.mrb[0].mxu0
      %v759 = vadd.f32 %v654, %v758
      %v760 = vpop.f32.mrb[0].mxu0
      %761 = vmatprep.mubr.f32.mxu0 0.0
      %762 = vmatmul.mubr.f32.gmra.mrb[0].mxu0 %v509
      %v763 = vpop.f32.mrb[0].mxu0
      %v764 = vadd.f32 %v659, %v763
      %v765 = vpop.f32.mrb[0].mxu0
      %766 = vmatprep.mubr.f32.mxu0 0.0
      %767 = vmatmul.mubr.f32.gmra.mrb[0].mxu0 %v511
      %v768 = vpop.f32.mrb[0].mxu0
      %v769 = vadd.f32 %v664, %v768
      %v770 = vpop.f32.mrb[0].mxu0
      %771 = vmatprep.mubr.f32.mxu0 0.0
      %772 = vmatmul.mubr.f32.gmra.mrb[0].mxu0 %v513
      %v773 = vpop.f32.mrb[0].mxu0
      %v774 = vadd.f32 %v669, %v773
      %v775 = vpop.f32.mrb[0].mxu0
      %776 = vmatprep.mubr.f32.mxu0 0.0
      %777 = vmatmul.mubr.f32.gmra.mrb[0].mxu0 %v515
      %v778 = vpop.f32.mrb[0].mxu0
      %v779 = vadd.f32 %v674, %v778
      %v780 = vpop.f32.mrb[0].mxu0
      %781 = vmatprep.mubr.f32.mxu0 0.0
      %782 = vmatmul.mubr.f32.gmra.mrb[0].mxu0 %v517
      %v783 = vpop.f32.mrb[0].mxu0
      %v784 = vadd.f32 %v679, %v783
      %v785 = vpop.f32.mrb[0].mxu0
      %786 = vmatprep.mubr.f32.mxu0 0.0
      %787 = vmatmul.mubr.f32.gmra.mrb[0].mxu0 %v526
      %v788 = vpop.f32.mrb[0].mxu0
      %v789 = vadd.f32 %v684, %v788
      %v790 = vpop.f32.mrb[0].mxu0
      %791 = vdwg.mxu0
      %v792 = vmax.f32 %v754, 0.0
      %v793 = vmax.f32 %v759, 0.0
      %v794 = vmax.f32 %v764, 0.0
      %v795 = vmax.f32 %v769, 0.0
      %v796 = vmax.f32 %v774, 0.0
      %v797 = vmax.f32 %v779, 0.0
      %v798 = vmax.f32 %v784, 0.0
      %v799 = vmax.f32 %v789, 0.0
      %v800 = vld [vmem:[%s5] sm:$0xff]
      %v801 = vld [vmem:[%s5 + $0x8] sm:$0xff]
      %v802 = vld [vmem:[%s5 + $0x10] sm:$0xff]
      %v803 = vld [vmem:[%s5 + $0x18] sm:$0xff]
      %v804 = vld [vmem:[%s5 + $0x20] sm:$0xff]
      %v805 = vld [vmem:[%s5 + $0x28] sm:$0xff]
      %v806 = vld [vmem:[%s5 + $0x30] sm:$0xff]
      %v807 = vld [vmem:[%s5 + $0x38] sm:$0xff]
      %v808 = vld [vmem:[%s5 + $0x40] sm:$0xff]
      %v809 = vld [vmem:[%s5 + $0x48] sm:$0xff]
      %v810 = vld [vmem:[%s5 + $0x50] sm:$0xff]
      %v811 = vld [vmem:[%s5 + $0x58] sm:$0xff]
      %v812 = vld [vmem:[%s5 + $0x60] sm:$0xff]
      %v813 = vld [vmem:[%s5 + $0x68] sm:$0xff]
      %v814 = vld [vmem:[%s5 + $0x70] sm:$0xff]
      %v815 = vld [vmem:[%s5 + $0x78] sm:$0xff]
      %v816 = vld [vmem:[%s6] sm:$0x1]
      %v818 = vlaneseq
      %v819 = vshrl.u32 %v818, 7
      %v820 = vsub.s32 0, %v819
      %v821 = vrot.slane %v816, %v820
      %823 = vmatprep.subr.mxu0 0.0
      %824 = vmatpush1.msra.mxu0 %v800
      %825 = vmatprep.subr.mxu0 0.0
      %826 = vmatpush1.msra.mxu0 %v801
      %827 = vmatprep.subr.mxu0 0.0
      %828 = vmatpush1.msra.mxu0 %v802
      %829 = vmatprep.subr.mxu0 0.0
      %830 = vmatpush1.msra.mxu0 %v803
      %831 = vmatprep.subr.mxu0 0.0
      %832 = vmatpush1.msra.mxu0 %v804
      %833 = vmatprep.subr.mxu0 0.0
      %834 = vmatpush1.msra.mxu0 %v805
      %835 = vmatprep.subr.mxu0 0.0
      %836 = vmatpush1.msra.mxu0 %v806
      %837 = vmatprep.subr.mxu0 0.0
      %838 = vmatpush1.msra.mxu0 %v807
      %839 = vmatprep.subr.mxu0 0.0
      %840 = vmatpush1.msra.mxu0 %v808
      %841 = vmatprep.subr.mxu0 0.0
      %842 = vmatpush1.msra.mxu0 %v809
      %843 = vmatprep.subr.mxu0 0.0
      %844 = vmatpush1.msra.mxu0 %v810
      %845 = vmatprep.subr.mxu0 0.0
      %846 = vmatpush1.msra.mxu0 %v811
      %847 = vmatprep.subr.mxu0 0.0
      %848 = vmatpush1.msra.mxu0 %v812
      %849 = vmatprep.subr.mxu0 0.0
      %850 = vmatpush1.msra.mxu0 %v813
      %851 = vmatprep.subr.mxu0 0.0
      %852 = vmatpush1.msra.mxu0 %v814
      %853 = vmatprep.subr.mxu0 0.0
      %854 = vmatpush1.msra.mxu0 %v815
      %855 = vmatprep.subr.mxu0 0.0
      %856 = vmatpush1.msra.mxu0 0.0
      %857 = vmatprep.subr.mxu0 0.0
      %858 = vmatpush1.msra.mxu0 0.0
      %859 = vmatprep.subr.mxu0 0.0
      %860 = vmatpush1.msra.mxu0 0.0
      %861 = vmatprep.subr.mxu0 0.0
      %862 = vmatpush1.msra.mxu0 0.0
      %863 = vmatprep.subr.mxu0 0.0
      %864 = vmatpush1.msra.mxu0 0.0
      %865 = vmatprep.subr.mxu0 0.0
      %866 = vmatpush1.msra.mxu0 0.0
      %867 = vmatprep.subr.mxu0 0.0
      %868 = vmatpush1.msra.mxu0 0.0
      %869 = vmatprep.subr.mxu0 0.0
      %870 = vmatpush1.msra.mxu0 0.0
      %871 = vmatprep.subr.mxu0 0.0
      %872 = vmatpush1.msra.mxu0 0.0
      %873 = vmatprep.subr.mxu0 0.0
      %874 = vmatpush1.msra.mxu0 0.0
      %875 = vmatprep.subr.mxu0 0.0
      %876 = vmatpush1.msra.mxu0 0.0
      %877 = vmatprep.subr.mxu0 0.0
      %878 = vmatpush1.msra.mxu0 0.0
      %879 = vmatprep.subr.mxu0 0.0
      %880 = vmatpush1.msra.mxu0 0.0
      %881 = vmatprep.subr.mxu0 0.0
      %882 = vmatpush1.msra.mxu0 0.0
      %883 = vmatprep.subr.mxu0 0.0
      %884 = vmatpush1.msra.mxu0 0.0
      %885 = vmatprep.subr.mxu0 0.0
      %886 = vmatpush1.msra.mxu0 0.0
      %887 = vmatprep.mubr.f32.mxu0 0.0
      %888 = vmatmul.mubr.f32.gmra.mrb[0].mxu0 %v792
      %v889 = vpop.f32.mrb[0].mxu0
      %v890 = vadd.f32 %v821, %v889
      %v891 = vpop.f32.mrb[0].mxu0
      %892 = vmatprep.mubr.f32.mxu0 0.0
      %893 = vmatmul.mubr.f32.gmra.mrb[0].mxu0 %v793
      %v894 = vpop.f32.mrb[0].mxu0
      %v895 = vadd.f32 %v821, %v894
      %v896 = vpop.f32.mrb[0].mxu0
      %897 = vmatprep.mubr.f32.mxu0 0.0
      %898 = vmatmul.mubr.f32.gmra.mrb[0].mxu0 %v794
      %v899 = vpop.f32.mrb[0].mxu0
      %v900 = vadd.f32 %v821, %v899
      %v901 = vpop.f32.mrb[0].mxu0
      %902 = vmatprep.mubr.f32.mxu0 0.0
      %903 = vmatmul.mubr.f32.gmra.mrb[0].mxu0 %v795
      %v904 = vpop.f32.mrb[0].mxu0
      %v905 = vadd.f32 %v821, %v904
      %v906 = vpop.f32.mrb[0].mxu0
      %907 = vmatprep.mubr.f32.mxu0 0.0
      %908 = vmatmul.mubr.f32.gmra.mrb[0].mxu0 %v796
      %v909 = vpop.f32.mrb[0].mxu0
      %v910 = vadd.f32 %v821, %v909
      %v911 = vpop.f32.mrb[0].mxu0
      %912 = vmatprep.mubr.f32.mxu0 0.0
      %913 = vmatmul.mubr.f32.gmra.mrb[0].mxu0 %v797
      %v914 = vpop.f32.mrb[0].mxu0
      %v915 = vadd.f32 %v821, %v914
      %v916 = vpop.f32.mrb[0].mxu0
      %917 = vmatprep.mubr.f32.mxu0 0.0
      %918 = vmatmul.mubr.f32.gmra.mrb[0].mxu0 %v798
      %v919 = vpop.f32.mrb[0].mxu0
      %v920 = vadd.f32 %v821, %v919
      %v921 = vpop.f32.mrb[0].mxu0
      %922 = vmatprep.mubr.f32.mxu0 0.0
      %923 = vmatmul.mubr.f32.gmra.mrb[0].mxu0 %v799
      %v924 = vpop.f32.mrb[0].mxu0
      %v925 = vadd.f32 %v821, %v924
      %v926 = vpop.f32.mrb[0].mxu0
      %927 = vdwg.mxu0
      %v928 = vadd.f32 %v431, %v890
      %v929 = vadd.f32 %v436, %v895
      %v930 = vadd.f32 %v441, %v900
      %v931 = vadd.f32 %v446, %v905
      %v932 = vadd.f32 %v451, %v910
      %v933 = vadd.f32 %v456, %v915
      %v934 = vadd.f32 %v461, %v920
      %v935 = vadd.f32 %v466, %v925
      %vm944 = vcmask 1041408
      %v945 = vrot.slane %v928, 6
      %v946 = vrot.slane %v929, 6
      %v947 = vsel %vm944, %v945, %v946
      %v948 = vrot.slane %v930, 6
      %v949 = vsel %vm944, %v946, %v948
      %v950 = vrot.slane %v931, 6
      %v951 = vsel %vm944, %v948, %v950
      %v952 = vrot.slane %v932, 6
      %v953 = vsel %vm944, %v950, %v952
      %v954 = vrot.slane %v933, 6
      %v955 = vsel %vm944, %v952, %v954
      %v956 = vrot.slane %v934, 6
      %v957 = vsel %vm944, %v954, %v956
      %v958 = vrot.slane %v935, 6
      %v959 = vsel %vm944, %v956, %v958
      %v968 = vsel %vm944, 0.0, %v945
      %vm969 = vcmask 1045504
      %v970 = vrot.slane %v928, 2
      %v971 = vrot.slane %v929, 2
      %v972 = vsel %vm969, %v970, %v971
      %v973 = vrot.slane %v930, 2
      %v974 = vsel %vm969, %v971, %v973
      %v975 = vrot.slane %v931, 2
      %v976 = vsel %vm969, %v973, %v975
      %v977 = vrot.slane %v932, 2
      %v978 = vsel %vm969, %v975, %v977
      %v979 = vrot.slane %v933, 2
      %v980 = vsel %vm969, %v977, %v979
      %v981 = vrot.slane %v934, 2
      %v982 = vsel %vm969, %v979, %v981
      %v983 = vrot.slane %v935, 2
      %v984 = vsel %vm969, %v981, %v983
      %v993 = vsel %vm969, %v983, 0.0
      %s994 = scalar_lea.vmem %s3, 384
      %v995 = vld [vmem:[%s994] sm:$0xff]
      %v996 = vld [vmem:[%s994 + $0x8] sm:$0xff]
      %v997 = vld [vmem:[%s994 + $0x10] sm:$0xff]
      %v998 = vld [vmem:[%s994 + $0x18] sm:$0xff]
      %v999 = vld [vmem:[%s994 + $0x20] sm:$0xff]
      %v1000 = vld [vmem:[%s994 + $0x28] sm:$0xff]
      %v1001 = vld [vmem:[%s994 + $0x30] sm:$0xff]
      %v1002 = vld [vmem:[%s994 + $0x38] sm:$0xff]
      %v1003 = vld [vmem:[%s994 + $0x40] sm:$0xff]
      %v1004 = vld [vmem:[%s994 + $0x48] sm:$0xff]
      %v1005 = vld [vmem:[%s994 + $0x50] sm:$0xff]
      %v1006 = vld [vmem:[%s994 + $0x58] sm:$0xff]
      %v1007 = vld [vmem:[%s994 + $0x60] sm:$0xff]
      %v1008 = vld [vmem:[%s994 + $0x68] sm:$0xff]
      %v1009 = vld [vmem:[%s994 + $0x70] sm:$0xff]
      %v1010 = vld [vmem:[%s994 + $0x78] sm:$0xff]
      %v1011 = vld [vmem:[%s994 + $0x80] sm:$0xff]
      %v1012 = vld [vmem:[%s994 + $0x88] sm:$0xff]
      %v1013 = vld [vmem:[%s994 + $0x90] sm:$0xff]
      %v1014 = vld [vmem:[%s994 + $0x98] sm:$0xff]
      %v1015 = vld [vmem:[%s994 + $0xa0] sm:$0xff]
      %v1016 = vld [vmem:[%s994 + $0xa8] sm:$0xff]
      %v1017 = vld [vmem:[%s994 + $0xb0] sm:$0xff]
      %v1018 = vld [vmem:[%s994 + $0xb8] sm:$0xff]
      %v1019 = vld [vmem:[%s994 + $0xc0] sm:$0xff]
      %v1020 = vld [vmem:[%s994 + $0xc8] sm:$0xff]
      %v1021 = vld [vmem:[%s994 + $0xd0] sm:$0xff]
      %v1022 = vld [vmem:[%s994 + $0xd8] sm:$0xff]
      %v1023 = vld [vmem:[%s994 + $0xe0] sm:$0xff]
      %v1024 = vld [vmem:[%s994 + $0xe8] sm:$0xff]
      %v1025 = vld [vmem:[%s994 + $0xf0] sm:$0xff]
      %v1026 = vld [vmem:[%s994 + $0xf8] sm:$0xff]
      %v1027 = vld [vmem:[%s994 + $0x100] sm:$0xff]
      %v1028 = vld [vmem:[%s994 + $0x108] sm:$0xff]
      %v1029 = vld [vmem:[%s994 + $0x110] sm:$0xff]
      %v1030 = vld [vmem:[%s994 + $0x118] sm:$0xff]
      %v1031 = vld [vmem:[%s994 + $0x120] sm:$0xff]
      %v1032 = vld [vmem:[%s994 + $0x128] sm:$0xff]
      %v1033 = vld [vmem:[%s994 + $0x130] sm:$0xff]
      %v1034 = vld [vmem:[%s994 + $0x138] sm:$0xff]
      %v1035 = vld [vmem:[%s994 + $0x140] sm:$0xff]
      %v1036 = vld [vmem:[%s994 + $0x148] sm:$0xff]
      %v1037 = vld [vmem:[%s994 + $0x150] sm:$0xff]
      %v1038 = vld [vmem:[%s994 + $0x158] sm:$0xff]
      %v1039 = vld [vmem:[%s994 + $0x160] sm:$0xff]
      %v1040 = vld [vmem:[%s994 + $0x168] sm:$0xff]
      %v1041 = vld [vmem:[%s994 + $0x170] sm:$0xff]
      %v1042 = vld [vmem:[%s994 + $0x178] sm:$0xff]
      %s1043 = scalar_lea.vmem %s4, 1
      %v1044 = vld [vmem:[%s1043] sm:$0x1]
      %v1046 = vlaneseq
      %v1047 = vshrl.u32 %v1046, 7
      %v1048 = vsub.s32 0, %v1047
      %v1049 = vrot.slane %v1044, %v1048
      %1051 = vmatprep.subr.mxu0 0.0
      %1052 = vmatpush1.msra.mxu0 %v995
      %1053 = vmatprep.subr.mxu0 0.0
      %1054 = vmatpush1.msra.mxu0 %v996
      %1055 = vmatprep.subr.mxu0 0.0
      %1056 = vmatpush1.msra.mxu0 %v997
      %1057 = vmatprep.subr.mxu0 0.0
      %1058 = vmatpush1.msra.mxu0 %v998
      %1059 = vmatprep.subr.mxu0 0.0
      %1060 = vmatpush1.msra.mxu0 %v999
      %1061 = vmatprep.subr.mxu0 0.0
      %1062 = vmatpush1.msra.mxu0 %v1000
      %1063 = vmatprep.subr.mxu0 0.0
      %1064 = vmatpush1.msra.mxu0 %v1001
      %1065 = vmatprep.subr.mxu0 0.0
      %1066 = vmatpush1.msra.mxu0 %v1002
      %1067 = vmatprep.subr.mxu0 0.0
      %1068 = vmatpush1.msra.mxu0 %v1003
      %1069 = vmatprep.subr.mxu0 0.0
      %1070 = vmatpush1.msra.mxu0 %v1004
      %1071 = vmatprep.subr.mxu0 0.0
      %1072 = vmatpush1.msra.mxu0 %v1005
      %1073 = vmatprep.subr.mxu0 0.0
      %1074 = vmatpush1.msra.mxu0 %v1006
      %1075 = vmatprep.subr.mxu0 0.0
      %1076 = vmatpush1.msra.mxu0 %v1007
      %1077 = vmatprep.subr.mxu0 0.0
      %1078 = vmatpush1.msra.mxu0 %v1008
      %1079 = vmatprep.subr.mxu0 0.0
      %1080 = vmatpush1.msra.mxu0 %v1009
      %1081 = vmatprep.subr.mxu0 0.0
      %1082 = vmatpush1.msra.mxu0 %v1010
      %1083 = vmatprep.subr.mxu0 0.0
      %1084 = vmatpush1.msra.mxu0 %v1011
      %1085 = vmatprep.subr.mxu0 0.0
      %1086 = vmatpush1.msra.mxu0 %v1012
      %1087 = vmatprep.subr.mxu0 0.0
      %1088 = vmatpush1.msra.mxu0 %v1013
      %1089 = vmatprep.subr.mxu0 0.0
      %1090 = vmatpush1.msra.mxu0 %v1014
      %1091 = vmatprep.subr.mxu0 0.0
      %1092 = vmatpush1.msra.mxu0 %v1015
      %1093 = vmatprep.subr.mxu0 0.0
      %1094 = vmatpush1.msra.mxu0 %v1016
      %1095 = vmatprep.subr.mxu0 0.0
      %1096 = vmatpush1.msra.mxu0 %v1017
      %1097 = vmatprep.subr.mxu0 0.0
      %1098 = vmatpush1.msra.mxu0 %v1018
      %1099 = vmatprep.subr.mxu0 0.0
      %1100 = vmatpush1.msra.mxu0 %v1019
      %1101 = vmatprep.subr.mxu0 0.0
      %1102 = vmatpush1.msra.mxu0 %v1020
      %1103 = vmatprep.subr.mxu0 0.0
      %1104 = vmatpush1.msra.mxu0 %v1021
      %1105 = vmatprep.subr.mxu0 0.0
      %1106 = vmatpush1.msra.mxu0 %v1022
      %1107 = vmatprep.subr.mxu0 0.0
      %1108 = vmatpush1.msra.mxu0 %v1023
      %1109 = vmatprep.subr.mxu0 0.0
      %1110 = vmatpush1.msra.mxu0 %v1024
      %1111 = vmatprep.subr.mxu0 0.0
      %1112 = vmatpush1.msra.mxu0 %v1025
      %1113 = vmatprep.subr.mxu0 0.0
      %1114 = vmatpush1.msra.mxu0 %v1026
      %1115 = vmatprep.mubr.f32.mxu0 %v928
      %1116 = vmatmul.mubr.f32.gmra.mrb[0].mxu0 %v968
      %v1117 = vpop.f32.mrb[0].mxu0
      %v1118 = vadd.f32 %v1049, %v1117
      %v1119 = vpop.f32.mrb[0].mxu0
      %1120 = vmatprep.mubr.f32.mxu0 %v929
      %1121 = vmatmul.mubr.f32.gmra.mrb[0].mxu0 %v947
      %v1122 = vpop.f32.mrb[0].mxu0
      %v1123 = vadd.f32 %v1049, %v1122
      %v1124 = vpop.f32.mrb[0].mxu0
      %1125 = vmatprep.mubr.f32.mxu0 %v930
      %1126 = vmatmul.mubr.f32.gmra.mrb[0].mxu0 %v949
      %v1127 = vpop.f32.mrb[0].mxu0
      %v1128 = vadd.f32 %v1049, %v1127
      %v1129 = vpop.f32.mrb[0].mxu0
      %1130 = vmatprep.mubr.f32.mxu0 %v931
      %1131 = vmatmul.mubr.f32.gmra.mrb[0].mxu0 %v951
      %v1132 = vpop.f32.mrb[0].mxu0
      %v1133 = vadd.f32 %v1049, %v1132
      %v1134 = vpop.f32.mrb[0].mxu0
      %1135 = vmatprep.mubr.f32.mxu0 %v932
      %1136 = vmatmul.mubr.f32.gmra.mrb[0].mxu0 %v953
      %v1137 = vpop.f32.mrb[0].mxu0
      %v1138 = vadd.f32 %v1049, %v1137
      %v1139 = vpop.f32.mrb[0].mxu0
      %1140 = vmatprep.mubr.f32.mxu0 %v933
      %1141 = vmatmul.mubr.f32.gmra.mrb[0].mxu0 %v955
      %v1142 = vpop.f32.mrb[0].mxu0
      %v1143 = vadd.f32 %v1049, %v1142
      %v1144 = vpop.f32.mrb[0].mxu0
      %1145 = vmatprep.mubr.f32.mxu0 %v934
      %1146 = vmatmul.mubr.f32.gmra.mrb[0].mxu0 %v957
      %v1147 = vpop.f32.mrb[0].mxu0
      %v1148 = vadd.f32 %v1049, %v1147
      %v1149 = vpop.f32.mrb[0].mxu0
      %1150 = vmatprep.mubr.f32.mxu0 %v935
      %1151 = vmatmul.mubr.f32.gmra.mrb[0].mxu0 %v959
      %v1152 = vpop.f32.mrb[0].mxu0
      %v1153 = vadd.f32 %v1049, %v1152
      %v1154 = vpop.f32.mrb[0].mxu0
      %1155 = vdwg.mxu0
      %1156 = vmatprep.subr.mxu0 0.0
      %1157 = vmatpush1.msra.mxu0 %v1027
      %1158 = vmatprep.subr.mxu0 0.0
      %1159 = vmatpush1.msra.mxu0 %v1028
      %1160 = vmatprep.subr.mxu0 0.0
      %1161 = vmatpush1.msra.mxu0 %v1029
      %1162 = vmatprep.subr.mxu0 0.0
      %1163 = vmatpush1.msra.mxu0 %v1030
      %1164 = vmatprep.subr.mxu0 0.0
      %1165 = vmatpush1.msra.mxu0 %v1031
      %1166 = vmatprep.subr.mxu0 0.0
      %1167 = vmatpush1.msra.mxu0 %v1032
      %1168 = vmatprep.subr.mxu0 0.0
      %1169 = vmatpush1.msra.mxu0 %v1033
      %1170 = vmatprep.subr.mxu0 0.0
      %1171 = vmatpush1.msra.mxu0 %v1034
      %1172 = vmatprep.subr.mxu0 0.0
      %1173 = vmatpush1.msra.mxu0 %v1035
      %1174 = vmatprep.subr.mxu0 0.0
      %1175 = vmatpush1.msra.mxu0 %v1036
      %1176 = vmatprep.subr.mxu0 0.0
      %1177 = vmatpush1.msra.mxu0 %v1037
      %1178 = vmatprep.subr.mxu0 0.0
      %1179 = vmatpush1.msra.mxu0 %v1038
      %1180 = vmatprep.subr.mxu0 0.0
      %1181 = vmatpush1.msra.mxu0 %v1039
      %1182 = vmatprep.subr.mxu0 0.0
      %1183 = vmatpush1.msra.mxu0 %v1040
      %1184 = vmatprep.subr.mxu0 0.0
      %1185 = vmatpush1.msra.mxu0 %v1041
      %1186 = vmatprep.subr.mxu0 0.0
      %1187 = vmatpush1.msra.mxu0 %v1042
      %1188 = vmatprep.subr.mxu0 0.0
      %1189 = vmatpush1.msra.mxu0 0.0
      %1190 = vmatprep.subr.mxu0 0.0
      %1191 = vmatpush1.msra.mxu0 0.0
      %1192 = vmatprep.subr.mxu0 0.0
      %1193 = vmatpush1.msra.mxu0 0.0
      %1194 = vmatprep.subr.mxu0 0.0
      %1195 = vmatpush1.msra.mxu0 0.0
      %1196 = vmatprep.subr.mxu0 0.0
      %1197 = vmatpush1.msra.mxu0 0.0
      %1198 = vmatprep.subr.mxu0 0.0
      %1199 = vmatpush1.msra.mxu0 0.0
      %1200 = vmatprep.subr.mxu0 0.0
      %1201 = vmatpush1.msra.mxu0 0.0
      %1202 = vmatprep.subr.mxu0 0.0
      %1203 = vmatpush1.msra.mxu0 0.0
      %1204 = vmatprep.subr.mxu0 0.0
      %1205 = vmatpush1.msra.mxu0 0.0
      %1206 = vmatprep.subr.mxu0 0.0
      %1207 = vmatpush1.msra.mxu0 0.0
      %1208 = vmatprep.subr.mxu0 0.0
      %1209 = vmatpush1.msra.mxu0 0.0
      %1210 = vmatprep.subr.mxu0 0.0
      %1211 = vmatpush1.msra.mxu0 0.0
      %1212 = vmatprep.subr.mxu0 0.0
      %1213 = vmatpush1.msra.mxu0 0.0
      %1214 = vmatprep.subr.mxu0 0.0
      %1215 = vmatpush1.msra.mxu0 0.0
      %1216 = vmatprep.subr.mxu0 0.0
      %1217 = vmatpush1.msra.mxu0 0.0
      %1218 = vmatprep.subr.mxu0 0.0
      %1219 = vmatpush1.msra.mxu0 0.0
      %1220 = vmatprep.mubr.f32.mxu0 0.0
      %1221 = vmatmul.mubr.f32.gmra.mrb[0].mxu0 %v972
      %v1222 = vpop.f32.mrb[0].mxu0
      %v1223 = vadd.f32 %v1118, %v1222
      %v1224 = vpop.f32.mrb[0].mxu0
      %1225 = vmatprep.mubr.f32.mxu0 0.0
      %1226 = vmatmul.mubr.f32.gmra.mrb[0].mxu0 %v974
      %v1227 = vpop.f32.mrb[0].mxu0
      %v1228 = vadd.f32 %v1123, %v1227
      %v1229 = vpop.f32.mrb[0].mxu0
      %1230 = vmatprep.mubr.f32.mxu0 0.0
      %1231 = vmatmul.mubr.f32.gmra.mrb[0].mxu0 %v976
      %v1232 = vpop.f32.mrb[0].mxu0
      %v1233 = vadd.f32 %v1128, %v1232
      %v1234 = vpop.f32.mrb[0].mxu0
      %1235 = vmatprep.mubr.f32.mxu0 0.0
      %1236 = vmatmul.mubr.f32.gmra.mrb[0].mxu0 %v978
      %v1237 = vpop.f32.mrb[0].mxu0
      %v1238 = vadd.f32 %v1133, %v1237
      %v1239 = vpop.f32.mrb[0].mxu0
      %1240 = vmatprep.mubr.f32.mxu0 0.0
      %1241 = vmatmul.mubr.f32.gmra.mrb[0].mxu0 %v980
      %v1242 = vpop.f32.mrb[0].mxu0
      %v1243 = vadd.f32 %v1138, %v1242
      %v1244 = vpop.f32.mrb[0].mxu0
      %1245 = vmatprep.mubr.f32.mxu0 0.0
      %1246 = vmatmul.mubr.f32.gmra.mrb[0].mxu0 %v982
      %v1247 = vpop.f32.mrb[0].mxu0
      %v1248 = vadd.f32 %v1143, %v1247
      %v1249 = vpop.f32.mrb[0].mxu0
      %1250 = vmatprep.mubr.f32.mxu0 0.0
      %1251 = vmatmul.mubr.f32.gmra.mrb[0].mxu0 %v984
      %v1252 = vpop.f32.mrb[0].mxu0
      %v1253 = vadd.f32 %v1148, %v1252
      %v1254 = vpop.f32.mrb[0].mxu0
      %1255 = vmatprep.mubr.f32.mxu0 0.0
      %1256 = vmatmul.mubr.f32.gmra.mrb[0].mxu0 %v993
      %v1257 = vpop.f32.mrb[0].mxu0
      %v1258 = vadd.f32 %v1153, %v1257
      %v1259 = vpop.f32.mrb[0].mxu0
      %1260 = vdwg.mxu0
      %v1261 = vmax.f32 %v1223, 0.0
      %v1262 = vmax.f32 %v1228, 0.0
      %v1263 = vmax.f32 %v1233, 0.0
      %v1264 = vmax.f32 %v1238, 0.0
      %v1265 = vmax.f32 %v1243, 0.0
      %v1266 = vmax.f32 %v1248, 0.0
      %v1267 = vmax.f32 %v1253, 0.0
      %v1268 = vmax.f32 %v1258, 0.0
      %s1269 = scalar_lea.vmem %s5, 128
      %v1270 = vld [vmem:[%s1269] sm:$0xff]
      %v1271 = vld [vmem:[%s1269 + $0x8] sm:$0xff]
      %v1272 = vld [vmem:[%s1269 + $0x10] sm:$0xff]
      %v1273 = vld [vmem:[%s1269 + $0x18] sm:$0xff]
      %v1274 = vld [vmem:[%s1269 + $0x20] sm:$0xff]
      %v1275 = vld [vmem:[%s1269 + $0x28] sm:$0xff]
      %v1276 = vld [vmem:[%s1269 + $0x30] sm:$0xff]
      %v1277 = vld [vmem:[%s1269 + $0x38] sm:$0xff]
      %v1278 = vld [vmem:[%s1269 + $0x40] sm:$0xff]
      %v1279 = vld [vmem:[%s1269 + $0x48] sm:$0xff]
      %v1280 = vld [vmem:[%s1269 + $0x50] sm:$0xff]
      %v1281 = vld [vmem:[%s1269 + $0x58] sm:$0xff]
      %v1282 = vld [vmem:[%s1269 + $0x60] sm:$0xff]
      %v1283 = vld [vmem:[%s1269 + $0x68] sm:$0xff]
      %v1284 = vld [vmem:[%s1269 + $0x70] sm:$0xff]
      %v1285 = vld [vmem:[%s1269 + $0x78] sm:$0xff]
      %s1286 = scalar_lea.vmem %s6, 1
      %v1287 = vld [vmem:[%s1286] sm:$0x1]
      %v1289 = vlaneseq
      %v1290 = vshrl.u32 %v1289, 7
      %v1291 = vsub.s32 0, %v1290
      %v1292 = vrot.slane %v1287, %v1291
      %1294 = vmatprep.subr.mxu0 0.0
      %1295 = vmatpush1.msra.mxu0 %v1270
      %1296 = vmatprep.subr.mxu0 0.0
      %1297 = vmatpush1.msra.mxu0 %v1271
      %1298 = vmatprep.subr.mxu0 0.0
      %1299 = vmatpush1.msra.mxu0 %v1272
      %1300 = vmatprep.subr.mxu0 0.0
      %1301 = vmatpush1.msra.mxu0 %v1273
      %1302 = vmatprep.subr.mxu0 0.0
      %1303 = vmatpush1.msra.mxu0 %v1274
      %1304 = vmatprep.subr.mxu0 0.0
      %1305 = vmatpush1.msra.mxu0 %v1275
      %1306 = vmatprep.subr.mxu0 0.0
      %1307 = vmatpush1.msra.mxu0 %v1276
      %1308 = vmatprep.subr.mxu0 0.0
      %1309 = vmatpush1.msra.mxu0 %v1277
      %1310 = vmatprep.subr.mxu0 0.0
      %1311 = vmatpush1.msra.mxu0 %v1278
      %1312 = vmatprep.subr.mxu0 0.0
      %1313 = vmatpush1.msra.mxu0 %v1279
      %1314 = vmatprep.subr.mxu0 0.0
      %1315 = vmatpush1.msra.mxu0 %v1280
      %1316 = vmatprep.subr.mxu0 0.0
      %1317 = vmatpush1.msra.mxu0 %v1281
      %1318 = vmatprep.subr.mxu0 0.0
      %1319 = vmatpush1.msra.mxu0 %v1282
      %1320 = vmatprep.subr.mxu0 0.0
      %1321 = vmatpush1.msra.mxu0 %v1283
      %1322 = vmatprep.subr.mxu0 0.0
      %1323 = vmatpush1.msra.mxu0 %v1284
      %1324 = vmatprep.subr.mxu0 0.0
      %1325 = vmatpush1.msra.mxu0 %v1285
      %1326 = vmatprep.subr.mxu0 0.0
      %1327 = vmatpush1.msra.mxu0 0.0
      %1328 = vmatprep.subr.mxu0 0.0
      %1329 = vmatpush1.msra.mxu0 0.0
      %1330 = vmatprep.subr.mxu0 0.0
      %1331 = vmatpush1.msra.mxu0 0.0
      %1332 = vmatprep.subr.mxu0 0.0
      %1333 = vmatpush1.msra.mxu0 0.0
      %1334 = vmatprep.subr.mxu0 0.0
      %1335 = vmatpush1.msra.mxu0 0.0
      %1336 = vmatprep.subr.mxu0 0.0
      %1337 = vmatpush1.msra.mxu0 0.0
      %1338 = vmatprep.subr.mxu0 0.0
      %1339 = vmatpush1.msra.mxu0 0.0
      %1340 = vmatprep.subr.mxu0 0.0
      %1341 = vmatpush1.msra.mxu0 0.0
      %1342 = vmatprep.subr.mxu0 0.0
      %1343 = vmatpush1.msra.mxu0 0.0
      %1344 = vmatprep.subr.mxu0 0.0
      %1345 = vmatpush1.msra.mxu0 0.0
      %1346 = vmatprep.subr.mxu0 0.0
      %1347 = vmatpush1.msra.mxu0 0.0
      %1348 = vmatprep.subr.mxu0 0.0
      %1349 = vmatpush1.msra.mxu0 0.0
      %1350 = vmatprep.subr.mxu0 0.0
      %1351 = vmatpush1.msra.mxu0 0.0
      %1352 = vmatprep.subr.mxu0 0.0
      %1353 = vmatpush1.msra.mxu0 0.0
      %1354 = vmatprep.subr.mxu0 0.0
      %1355 = vmatpush1.msra.mxu0 0.0
      %1356 = vmatprep.subr.mxu0 0.0
      %1357 = vmatpush1.msra.mxu0 0.0
      %1358 = vmatprep.mubr.f32.mxu0 0.0
      %1359 = vmatmul.mubr.f32.gmra.mrb[0].mxu0 %v1261
      %v1360 = vpop.f32.mrb[0].mxu0
      %v1361 = vadd.f32 %v1292, %v1360
      %v1362 = vpop.f32.mrb[0].mxu0
      %1363 = vmatprep.mubr.f32.mxu0 0.0
      %1364 = vmatmul.mubr.f32.gmra.mrb[0].mxu0 %v1262
      %v1365 = vpop.f32.mrb[0].mxu0
      %v1366 = vadd.f32 %v1292, %v1365
      %v1367 = vpop.f32.mrb[0].mxu0
      %1368 = vmatprep.mubr.f32.mxu0 0.0
      %1369 = vmatmul.mubr.f32.gmra.mrb[0].mxu0 %v1263
      %v1370 = vpop.f32.mrb[0].mxu0
      %v1371 = vadd.f32 %v1292, %v1370
      %v1372 = vpop.f32.mrb[0].mxu0
      %1373 = vmatprep.mubr.f32.mxu0 0.0
      %1374 = vmatmul.mubr.f32.gmra.mrb[0].mxu0 %v1264
      %v1375 = vpop.f32.mrb[0].mxu0
      %v1376 = vadd.f32 %v1292, %v1375
      %v1377 = vpop.f32.mrb[0].mxu0
      %1378 = vmatprep.mubr.f32.mxu0 0.0
      %1379 = vmatmul.mubr.f32.gmra.mrb[0].mxu0 %v1265
      %v1380 = vpop.f32.mrb[0].mxu0
      %v1381 = vadd.f32 %v1292, %v1380
      %v1382 = vpop.f32.mrb[0].mxu0
      %1383 = vmatprep.mubr.f32.mxu0 0.0
      %1384 = vmatmul.mubr.f32.gmra.mrb[0].mxu0 %v1266
      %v1385 = vpop.f32.mrb[0].mxu0
      %v1386 = vadd.f32 %v1292, %v1385
      %v1387 = vpop.f32.mrb[0].mxu0
      %1388 = vmatprep.mubr.f32.mxu0 0.0
      %1389 = vmatmul.mubr.f32.gmra.mrb[0].mxu0 %v1267
      %v1390 = vpop.f32.mrb[0].mxu0
      %v1391 = vadd.f32 %v1292, %v1390
      %v1392 = vpop.f32.mrb[0].mxu0
      %1393 = vmatprep.mubr.f32.mxu0 0.0
      %1394 = vmatmul.mubr.f32.gmra.mrb[0].mxu0 %v1268
      %v1395 = vpop.f32.mrb[0].mxu0
      %v1396 = vadd.f32 %v1292, %v1395
      %v1397 = vpop.f32.mrb[0].mxu0
      %1398 = vdwg.mxu0
      %v1399 = vadd.f32 %v928, %v1361
      %v1400 = vadd.f32 %v929, %v1366
      %v1401 = vadd.f32 %v930, %v1371
      %v1402 = vadd.f32 %v931, %v1376
      %v1403 = vadd.f32 %v932, %v1381
      %v1404 = vadd.f32 %v933, %v1386
      %v1405 = vadd.f32 %v934, %v1391
      %v1406 = vadd.f32 %v935, %v1396
      %vm1415 = vcmask 1043456
      %v1416 = vrot.slane %v1399, 4
      %v1417 = vrot.slane %v1400, 4
      %v1418 = vsel %vm1415, %v1416, %v1417
      %v1419 = vrot.slane %v1401, 4
      %v1420 = vsel %vm1415, %v1417, %v1419
      %v1421 = vrot.slane %v1402, 4
      %v1422 = vsel %vm1415, %v1419, %v1421
      %v1423 = vrot.slane %v1403, 4
      %v1424 = vsel %vm1415, %v1421, %v1423
      %v1425 = vrot.slane %v1404, 4
      %v1426 = vsel %vm1415, %v1423, %v1425
      %v1427 = vrot.slane %v1405, 4
      %v1428 = vsel %vm1415, %v1425, %v1427
      %v1429 = vrot.slane %v1406, 4
      %v1430 = vsel %vm1415, %v1427, %v1429
      %v1439 = vsel %vm1415, 0.0, %v1416
      %v1441 = vsel %vm1415, %v1429, 0.0
      %s1442 = scalar_lea.vmem %s3, 768
      %v1443 = vld [vmem:[%s1442] sm:$0xff]
      %v1444 = vld [vmem:[%s1442 + $0x8] sm:$0xff]
      %v1445 = vld [vmem:[%s1442 + $0x10] sm:$0xff]
      %v1446 = vld [vmem:[%s1442 + $0x18] sm:$0xff]
      %v1447 = vld [vmem:[%s1442 + $0x20] sm:$0xff]
      %v1448 = vld [vmem:[%s1442 + $0x28] sm:$0xff]
      %v1449 = vld [vmem:[%s1442 + $0x30] sm:$0xff]
      %v1450 = vld [vmem:[%s1442 + $0x38] sm:$0xff]
      %v1451 = vld [vmem:[%s1442 + $0x40] sm:$0xff]
      %v1452 = vld [vmem:[%s1442 + $0x48] sm:$0xff]
      %v1453 = vld [vmem:[%s1442 + $0x50] sm:$0xff]
      %v1454 = vld [vmem:[%s1442 + $0x58] sm:$0xff]
      %v1455 = vld [vmem:[%s1442 + $0x60] sm:$0xff]
      %v1456 = vld [vmem:[%s1442 + $0x68] sm:$0xff]
      %v1457 = vld [vmem:[%s1442 + $0x70] sm:$0xff]
      %v1458 = vld [vmem:[%s1442 + $0x78] sm:$0xff]
      %v1459 = vld [vmem:[%s1442 + $0x80] sm:$0xff]
      %v1460 = vld [vmem:[%s1442 + $0x88] sm:$0xff]
      %v1461 = vld [vmem:[%s1442 + $0x90] sm:$0xff]
      %v1462 = vld [vmem:[%s1442 + $0x98] sm:$0xff]
      %v1463 = vld [vmem:[%s1442 + $0xa0] sm:$0xff]
      %v1464 = vld [vmem:[%s1442 + $0xa8] sm:$0xff]
      %v1465 = vld [vmem:[%s1442 + $0xb0] sm:$0xff]
      %v1466 = vld [vmem:[%s1442 + $0xb8] sm:$0xff]
      %v1467 = vld [vmem:[%s1442 + $0xc0] sm:$0xff]
      %v1468 = vld [vmem:[%s1442 + $0xc8] sm:$0xff]
      %v1469 = vld [vmem:[%s1442 + $0xd0] sm:$0xff]
      %v1470 = vld [vmem:[%s1442 + $0xd8] sm:$0xff]
      %v1471 = vld [vmem:[%s1442 + $0xe0] sm:$0xff]
      %v1472 = vld [vmem:[%s1442 + $0xe8] sm:$0xff]
      %v1473 = vld [vmem:[%s1442 + $0xf0] sm:$0xff]
      %v1474 = vld [vmem:[%s1442 + $0xf8] sm:$0xff]
      %v1475 = vld [vmem:[%s1442 + $0x100] sm:$0xff]
      %v1476 = vld [vmem:[%s1442 + $0x108] sm:$0xff]
      %v1477 = vld [vmem:[%s1442 + $0x110] sm:$0xff]
      %v1478 = vld [vmem:[%s1442 + $0x118] sm:$0xff]
      %v1479 = vld [vmem:[%s1442 + $0x120] sm:$0xff]
      %v1480 = vld [vmem:[%s1442 + $0x128] sm:$0xff]
      %v1481 = vld [vmem:[%s1442 + $0x130] sm:$0xff]
      %v1482 = vld [vmem:[%s1442 + $0x138] sm:$0xff]
      %v1483 = vld [vmem:[%s1442 + $0x140] sm:$0xff]
      %v1484 = vld [vmem:[%s1442 + $0x148] sm:$0xff]
      %v1485 = vld [vmem:[%s1442 + $0x150] sm:$0xff]
      %v1486 = vld [vmem:[%s1442 + $0x158] sm:$0xff]
      %v1487 = vld [vmem:[%s1442 + $0x160] sm:$0xff]
      %v1488 = vld [vmem:[%s1442 + $0x168] sm:$0xff]
      %v1489 = vld [vmem:[%s1442 + $0x170] sm:$0xff]
      %v1490 = vld [vmem:[%s1442 + $0x178] sm:$0xff]
      %s1491 = scalar_lea.vmem %s4, 2
      %v1492 = vld [vmem:[%s1491] sm:$0x1]
      %v1494 = vlaneseq
      %v1495 = vshrl.u32 %v1494, 7
      %v1496 = vsub.s32 0, %v1495
      %v1497 = vrot.slane %v1492, %v1496
      %1499 = vmatprep.subr.mxu0 0.0
      %1500 = vmatpush1.msra.mxu0 %v1443
      %1501 = vmatprep.subr.mxu0 0.0
      %1502 = vmatpush1.msra.mxu0 %v1444
      %1503 = vmatprep.subr.mxu0 0.0
      %1504 = vmatpush1.msra.mxu0 %v1445
      %1505 = vmatprep.subr.mxu0 0.0
      %1506 = vmatpush1.msra.mxu0 %v1446
      %1507 = vmatprep.subr.mxu0 0.0
      %1508 = vmatpush1.msra.mxu0 %v1447
      %1509 = vmatprep.subr.mxu0 0.0
      %1510 = vmatpush1.msra.mxu0 %v1448
      %1511 = vmatprep.subr.mxu0 0.0
      %1512 = vmatpush1.msra.mxu0 %v1449
      %1513 = vmatprep.subr.mxu0 0.0
      %1514 = vmatpush1.msra.mxu0 %v1450
      %1515 = vmatprep.subr.mxu0 0.0
      %1516 = vmatpush1.msra.mxu0 %v1451
      %1517 = vmatprep.subr.mxu0 0.0
      %1518 = vmatpush1.msra.mxu0 %v1452
      %1519 = vmatprep.subr.mxu0 0.0
      %1520 = vmatpush1.msra.mxu0 %v1453
      %1521 = vmatprep.subr.mxu0 0.0
      %1522 = vmatpush1.msra.mxu0 %v1454
      %1523 = vmatprep.subr.mxu0 0.0
      %1524 = vmatpush1.msra.mxu0 %v1455
      %1525 = vmatprep.subr.mxu0 0.0
      %1526 = vmatpush1.msra.mxu0 %v1456
      %1527 = vmatprep.subr.mxu0 0.0
      %1528 = vmatpush1.msra.mxu0 %v1457
      %1529 = vmatprep.subr.mxu0 0.0
      %1530 = vmatpush1.msra.mxu0 %v1458
      %1531 = vmatprep.subr.mxu0 0.0
      %1532 = vmatpush1.msra.mxu0 %v1459
      %1533 = vmatprep.subr.mxu0 0.0
      %1534 = vmatpush1.msra.mxu0 %v1460
      %1535 = vmatprep.subr.mxu0 0.0
      %1536 = vmatpush1.msra.mxu0 %v1461
      %1537 = vmatprep.subr.mxu0 0.0
      %1538 = vmatpush1.msra.mxu0 %v1462
      %1539 = vmatprep.subr.mxu0 0.0
      %1540 = vmatpush1.msra.mxu0 %v1463
      %1541 = vmatprep.subr.mxu0 0.0
      %1542 = vmatpush1.msra.mxu0 %v1464
      %1543 = vmatprep.subr.mxu0 0.0
      %1544 = vmatpush1.msra.mxu0 %v1465
      %1545 = vmatprep.subr.mxu0 0.0
      %1546 = vmatpush1.msra.mxu0 %v1466
      %1547 = vmatprep.subr.mxu0 0.0
      %1548 = vmatpush1.msra.mxu0 %v1467
      %1549 = vmatprep.subr.mxu0 0.0
      %1550 = vmatpush1.msra.mxu0 %v1468
      %1551 = vmatprep.subr.mxu0 0.0
      %1552 = vmatpush1.msra.mxu0 %v1469
      %1553 = vmatprep.subr.mxu0 0.0
      %1554 = vmatpush1.msra.mxu0 %v1470
      %1555 = vmatprep.subr.mxu0 0.0
      %1556 = vmatpush1.msra.mxu0 %v1471
      %1557 = vmatprep.subr.mxu0 0.0
      %1558 = vmatpush1.msra.mxu0 %v1472
      %1559 = vmatprep.subr.mxu0 0.0
      %1560 = vmatpush1.msra.mxu0 %v1473
      %1561 = vmatprep.subr.mxu0 0.0
      %1562 = vmatpush1.msra.mxu0 %v1474
      %1563 = vmatprep.mubr.f32.mxu0 %v1399
      %1564 = vmatmul.mubr.f32.gmra.mrb[0].mxu0 %v1439
      %v1565 = vpop.f32.mrb[0].mxu0
      %v1566 = vadd.f32 %v1497, %v1565
      %v1567 = vpop.f32.mrb[0].mxu0
      %1568 = vmatprep.mubr.f32.mxu0 %v1400
      %1569 = vmatmul.mubr.f32.gmra.mrb[0].mxu0 %v1418
      %v1570 = vpop.f32.mrb[0].mxu0
      %v1571 = vadd.f32 %v1497, %v1570
      %v1572 = vpop.f32.mrb[0].mxu0
      %1573 = vmatprep.mubr.f32.mxu0 %v1401
      %1574 = vmatmul.mubr.f32.gmra.mrb[0].mxu0 %v1420
      %v1575 = vpop.f32.mrb[0].mxu0
      %v1576 = vadd.f32 %v1497, %v1575
      %v1577 = vpop.f32.mrb[0].mxu0
      %1578 = vmatprep.mubr.f32.mxu0 %v1402
      %1579 = vmatmul.mubr.f32.gmra.mrb[0].mxu0 %v1422
      %v1580 = vpop.f32.mrb[0].mxu0
      %v1581 = vadd.f32 %v1497, %v1580
      %v1582 = vpop.f32.mrb[0].mxu0
      %1583 = vmatprep.mubr.f32.mxu0 %v1403
      %1584 = vmatmul.mubr.f32.gmra.mrb[0].mxu0 %v1424
      %v1585 = vpop.f32.mrb[0].mxu0
      %v1586 = vadd.f32 %v1497, %v1585
      %v1587 = vpop.f32.mrb[0].mxu0
      %1588 = vmatprep.mubr.f32.mxu0 %v1404
      %1589 = vmatmul.mubr.f32.gmra.mrb[0].mxu0 %v1426
      %v1590 = vpop.f32.mrb[0].mxu0
      %v1591 = vadd.f32 %v1497, %v1590
      %v1592 = vpop.f32.mrb[0].mxu0
      %1593 = vmatprep.mubr.f32.mxu0 %v1405
      %1594 = vmatmul.mubr.f32.gmra.mrb[0].mxu0 %v1428
      %v1595 = vpop.f32.mrb[0].mxu0
      %v1596 = vadd.f32 %v1497, %v1595
      %v1597 = vpop.f32.mrb[0].mxu0
      %1598 = vmatprep.mubr.f32.mxu0 %v1406
      %1599 = vmatmul.mubr.f32.gmra.mrb[0].mxu0 %v1430
      %v1600 = vpop.f32.mrb[0].mxu0
      %v1601 = vadd.f32 %v1497, %v1600
      %v1602 = vpop.f32.mrb[0].mxu0
      %1603 = vdwg.mxu0
      %1604 = vmatprep.subr.mxu0 0.0
      %1605 = vmatpush1.msra.mxu0 %v1475
      %1606 = vmatprep.subr.mxu0 0.0
      %1607 = vmatpush1.msra.mxu0 %v1476
      %1608 = vmatprep.subr.mxu0 0.0
      %1609 = vmatpush1.msra.mxu0 %v1477
      %1610 = vmatprep.subr.mxu0 0.0
      %1611 = vmatpush1.msra.mxu0 %v1478
      %1612 = vmatprep.subr.mxu0 0.0
      %1613 = vmatpush1.msra.mxu0 %v1479
      %1614 = vmatprep.subr.mxu0 0.0
      %1615 = vmatpush1.msra.mxu0 %v1480
      %1616 = vmatprep.subr.mxu0 0.0
      %1617 = vmatpush1.msra.mxu0 %v1481
      %1618 = vmatprep.subr.mxu0 0.0
      %1619 = vmatpush1.msra.mxu0 %v1482
      %1620 = vmatprep.subr.mxu0 0.0
      %1621 = vmatpush1.msra.mxu0 %v1483
      %1622 = vmatprep.subr.mxu0 0.0
      %1623 = vmatpush1.msra.mxu0 %v1484
      %1624 = vmatprep.subr.mxu0 0.0
      %1625 = vmatpush1.msra.mxu0 %v1485
      %1626 = vmatprep.subr.mxu0 0.0
      %1627 = vmatpush1.msra.mxu0 %v1486
      %1628 = vmatprep.subr.mxu0 0.0
      %1629 = vmatpush1.msra.mxu0 %v1487
      %1630 = vmatprep.subr.mxu0 0.0
      %1631 = vmatpush1.msra.mxu0 %v1488
      %1632 = vmatprep.subr.mxu0 0.0
      %1633 = vmatpush1.msra.mxu0 %v1489
      %1634 = vmatprep.subr.mxu0 0.0
      %1635 = vmatpush1.msra.mxu0 %v1490
      %1636 = vmatprep.subr.mxu0 0.0
      %1637 = vmatpush1.msra.mxu0 0.0
      %1638 = vmatprep.subr.mxu0 0.0
      %1639 = vmatpush1.msra.mxu0 0.0
      %1640 = vmatprep.subr.mxu0 0.0
      %1641 = vmatpush1.msra.mxu0 0.0
      %1642 = vmatprep.subr.mxu0 0.0
      %1643 = vmatpush1.msra.mxu0 0.0
      %1644 = vmatprep.subr.mxu0 0.0
      %1645 = vmatpush1.msra.mxu0 0.0
      %1646 = vmatprep.subr.mxu0 0.0
      %1647 = vmatpush1.msra.mxu0 0.0
      %1648 = vmatprep.subr.mxu0 0.0
      %1649 = vmatpush1.msra.mxu0 0.0
      %1650 = vmatprep.subr.mxu0 0.0
      %1651 = vmatpush1.msra.mxu0 0.0
      %1652 = vmatprep.subr.mxu0 0.0
      %1653 = vmatpush1.msra.mxu0 0.0
      %1654 = vmatprep.subr.mxu0 0.0
      %1655 = vmatpush1.msra.mxu0 0.0
      %1656 = vmatprep.subr.mxu0 0.0
      %1657 = vmatpush1.msra.mxu0 0.0
      %1658 = vmatprep.subr.mxu0 0.0
      %1659 = vmatpush1.msra.mxu0 0.0
      %1660 = vmatprep.subr.mxu0 0.0
      %1661 = vmatpush1.msra.mxu0 0.0
      %1662 = vmatprep.subr.mxu0 0.0
      %1663 = vmatpush1.msra.mxu0 0.0
      %1664 = vmatprep.subr.mxu0 0.0
      %1665 = vmatpush1.msra.mxu0 0.0
      %1666 = vmatprep.subr.mxu0 0.0
      %1667 = vmatpush1.msra.mxu0 0.0
      %1668 = vmatprep.mubr.f32.mxu0 0.0
      %1669 = vmatmul.mubr.f32.gmra.mrb[0].mxu0 %v1418
      %v1670 = vpop.f32.mrb[0].mxu0
      %v1671 = vadd.f32 %v1566, %v1670
      %v1672 = vpop.f32.mrb[0].mxu0
      %1673 = vmatprep.mubr.f32.mxu0 0.0
      %1674 = vmatmul.mubr.f32.gmra.mrb[0].mxu0 %v1420
      %v1675 = vpop.f32.mrb[0].mxu0
      %v1676 = vadd.f32 %v1571, %v1675
      %v1677 = vpop.f32.mrb[0].mxu0
      %1678 = vmatprep.mubr.f32.mxu0 0.0
      %1679 = vmatmul.mubr.f32.gmra.mrb[0].mxu0 %v1422
      %v1680 = vpop.f32.mrb[0].mxu0
      %v1681 = vadd.f32 %v1576, %v1680
      %v1682 = vpop.f32.mrb[0].mxu0
      %1683 = vmatprep.mubr.f32.mxu0 0.0
      %1684 = vmatmul.mubr.f32.gmra.mrb[0].mxu0 %v1424
      %v1685 = vpop.f32.mrb[0].mxu0
      %v1686 = vadd.f32 %v1581, %v1685
      %v1687 = vpop.f32.mrb[0].mxu0
      %1688 = vmatprep.mubr.f32.mxu0 0.0
      %1689 = vmatmul.mubr.f32.gmra.mrb[0].mxu0 %v1426
      %v1690 = vpop.f32.mrb[0].mxu0
      %v1691 = vadd.f32 %v1586, %v1690
      %v1692 = vpop.f32.mrb[0].mxu0
      %1693 = vmatprep.mubr.f32.mxu0 0.0
      %1694 = vmatmul.mubr.f32.gmra.mrb[0].mxu0 %v1428
      %v1695 = vpop.f32.mrb[0].mxu0
      %v1696 = vadd.f32 %v1591, %v1695
      %v1697 = vpop.f32.mrb[0].mxu0
      %1698 = vmatprep.mubr.f32.mxu0 0.0
      %1699 = vmatmul.mubr.f32.gmra.mrb[0].mxu0 %v1430
      %v1700 = vpop.f32.mrb[0].mxu0
      %v1701 = vadd.f32 %v1596, %v1700
      %v1702 = vpop.f32.mrb[0].mxu0
      %1703 = vmatprep.mubr.f32.mxu0 0.0
      %1704 = vmatmul.mubr.f32.gmra.mrb[0].mxu0 %v1441
      %v1705 = vpop.f32.mrb[0].mxu0
      %v1706 = vadd.f32 %v1601, %v1705
      %v1707 = vpop.f32.mrb[0].mxu0
      %1708 = vdwg.mxu0
      %v1709 = vmax.f32 %v1671, 0.0
      %v1710 = vmax.f32 %v1676, 0.0
      %v1711 = vmax.f32 %v1681, 0.0
      %v1712 = vmax.f32 %v1686, 0.0
      %v1713 = vmax.f32 %v1691, 0.0
      %v1714 = vmax.f32 %v1696, 0.0
      %v1715 = vmax.f32 %v1701, 0.0
      %v1716 = vmax.f32 %v1706, 0.0
      %s1717 = scalar_lea.vmem %s5, 256
      %v1718 = vld [vmem:[%s1717] sm:$0xff]
      %v1719 = vld [vmem:[%s1717 + $0x8] sm:$0xff]
      %v1720 = vld [vmem:[%s1717 + $0x10] sm:$0xff]
      %v1721 = vld [vmem:[%s1717 + $0x18] sm:$0xff]
      %v1722 = vld [vmem:[%s1717 + $0x20] sm:$0xff]
      %v1723 = vld [vmem:[%s1717 + $0x28] sm:$0xff]
      %v1724 = vld [vmem:[%s1717 + $0x30] sm:$0xff]
      %v1725 = vld [vmem:[%s1717 + $0x38] sm:$0xff]
      %v1726 = vld [vmem:[%s1717 + $0x40] sm:$0xff]
      %v1727 = vld [vmem:[%s1717 + $0x48] sm:$0xff]
      %v1728 = vld [vmem:[%s1717 + $0x50] sm:$0xff]
      %v1729 = vld [vmem:[%s1717 + $0x58] sm:$0xff]
      %v1730 = vld [vmem:[%s1717 + $0x60] sm:$0xff]
      %v1731 = vld [vmem:[%s1717 + $0x68] sm:$0xff]
      %v1732 = vld [vmem:[%s1717 + $0x70] sm:$0xff]
      %v1733 = vld [vmem:[%s1717 + $0x78] sm:$0xff]
      %s1734 = scalar_lea.vmem %s6, 2
      %v1735 = vld [vmem:[%s1734] sm:$0x1]
      %v1737 = vlaneseq
      %v1738 = vshrl.u32 %v1737, 7
      %v1739 = vsub.s32 0, %v1738
      %v1740 = vrot.slane %v1735, %v1739
      %1742 = vmatprep.subr.mxu0 0.0
      %1743 = vmatpush1.msra.mxu0 %v1718
      %1744 = vmatprep.subr.mxu0 0.0
      %1745 = vmatpush1.msra.mxu0 %v1719
      %1746 = vmatprep.subr.mxu0 0.0
      %1747 = vmatpush1.msra.mxu0 %v1720
      %1748 = vmatprep.subr.mxu0 0.0
      %1749 = vmatpush1.msra.mxu0 %v1721
      %1750 = vmatprep.subr.mxu0 0.0
      %1751 = vmatpush1.msra.mxu0 %v1722
      %1752 = vmatprep.subr.mxu0 0.0
      %1753 = vmatpush1.msra.mxu0 %v1723
      %1754 = vmatprep.subr.mxu0 0.0
      %1755 = vmatpush1.msra.mxu0 %v1724
      %1756 = vmatprep.subr.mxu0 0.0
      %1757 = vmatpush1.msra.mxu0 %v1725
      %1758 = vmatprep.subr.mxu0 0.0
      %1759 = vmatpush1.msra.mxu0 %v1726
      %1760 = vmatprep.subr.mxu0 0.0
      %1761 = vmatpush1.msra.mxu0 %v1727
      %1762 = vmatprep.subr.mxu0 0.0
      %1763 = vmatpush1.msra.mxu0 %v1728
      %1764 = vmatprep.subr.mxu0 0.0
      %1765 = vmatpush1.msra.mxu0 %v1729
      %1766 = vmatprep.subr.mxu0 0.0
      %1767 = vmatpush1.msra.mxu0 %v1730
      %1768 = vmatprep.subr.mxu0 0.0
      %1769 = vmatpush1.msra.mxu0 %v1731
      %1770 = vmatprep.subr.mxu0 0.0
      %1771 = vmatpush1.msra.mxu0 %v1732
      %1772 = vmatprep.subr.mxu0 0.0
      %1773 = vmatpush1.msra.mxu0 %v1733
      %1774 = vmatprep.subr.mxu0 0.0
      %1775 = vmatpush1.msra.mxu0 0.0
      %1776 = vmatprep.subr.mxu0 0.0
      %1777 = vmatpush1.msra.mxu0 0.0
      %1778 = vmatprep.subr.mxu0 0.0
      %1779 = vmatpush1.msra.mxu0 0.0
      %1780 = vmatprep.subr.mxu0 0.0
      %1781 = vmatpush1.msra.mxu0 0.0
      %1782 = vmatprep.subr.mxu0 0.0
      %1783 = vmatpush1.msra.mxu0 0.0
      %1784 = vmatprep.subr.mxu0 0.0
      %1785 = vmatpush1.msra.mxu0 0.0
      %1786 = vmatprep.subr.mxu0 0.0
      %1787 = vmatpush1.msra.mxu0 0.0
      %1788 = vmatprep.subr.mxu0 0.0
      %1789 = vmatpush1.msra.mxu0 0.0
      %1790 = vmatprep.subr.mxu0 0.0
      %1791 = vmatpush1.msra.mxu0 0.0
      %1792 = vmatprep.subr.mxu0 0.0
      %1793 = vmatpush1.msra.mxu0 0.0
      %1794 = vmatprep.subr.mxu0 0.0
      %1795 = vmatpush1.msra.mxu0 0.0
      %1796 = vmatprep.subr.mxu0 0.0
      %1797 = vmatpush1.msra.mxu0 0.0
      %1798 = vmatprep.subr.mxu0 0.0
      %1799 = vmatpush1.msra.mxu0 0.0
      %1800 = vmatprep.subr.mxu0 0.0
      %1801 = vmatpush1.msra.mxu0 0.0
      %1802 = vmatprep.subr.mxu0 0.0
      %1803 = vmatpush1.msra.mxu0 0.0
      %1804 = vmatprep.subr.mxu0 0.0
      %1805 = vmatpush1.msra.mxu0 0.0
      %1806 = vmatprep.mubr.f32.mxu0 0.0
      %1807 = vmatmul.mubr.f32.gmra.mrb[0].mxu0 %v1709
      %v1808 = vpop.f32.mrb[0].mxu0
      %v1809 = vadd.f32 %v1740, %v1808
      %v1810 = vpop.f32.mrb[0].mxu0
      %1811 = vmatprep.mubr.f32.mxu0 0.0
      %1812 = vmatmul.mubr.f32.gmra.mrb[0].mxu0 %v1710
      %v1813 = vpop.f32.mrb[0].mxu0
      %v1814 = vadd.f32 %v1740, %v1813
      %v1815 = vpop.f32.mrb[0].mxu0
      %1816 = vmatprep.mubr.f32.mxu0 0.0
      %1817 = vmatmul.mubr.f32.gmra.mrb[0].mxu0 %v1711
      %v1818 = vpop.f32.mrb[0].mxu0
      %v1819 = vadd.f32 %v1740, %v1818
      %v1820 = vpop.f32.mrb[0].mxu0
      %1821 = vmatprep.mubr.f32.mxu0 0.0
      %1822 = vmatmul.mubr.f32.gmra.mrb[0].mxu0 %v1712
      %v1823 = vpop.f32.mrb[0].mxu0
      %v1824 = vadd.f32 %v1740, %v1823
      %v1825 = vpop.f32.mrb[0].mxu0
      %1826 = vmatprep.mubr.f32.mxu0 0.0
      %1827 = vmatmul.mubr.f32.gmra.mrb[0].mxu0 %v1713
      %v1828 = vpop.f32.mrb[0].mxu0
      %v1829 = vadd.f32 %v1740, %v1828
      %v1830 = vpop.f32.mrb[0].mxu0
      %1831 = vmatprep.mubr.f32.mxu0 0.0
      %1832 = vmatmul.mubr.f32.gmra.mrb[0].mxu0 %v1714
      %v1833 = vpop.f32.mrb[0].mxu0
      %v1834 = vadd.f32 %v1740, %v1833
      %v1835 = vpop.f32.mrb[0].mxu0
      %1836 = vmatprep.mubr.f32.mxu0 0.0
      %1837 = vmatmul.mubr.f32.gmra.mrb[0].mxu0 %v1715
      %v1838 = vpop.f32.mrb[0].mxu0
      %v1839 = vadd.f32 %v1740, %v1838
      %v1840 = vpop.f32.mrb[0].mxu0
      %1841 = vmatprep.mubr.f32.mxu0 0.0
      %1842 = vmatmul.mubr.f32.gmra.mrb[0].mxu0 %v1716
      %v1843 = vpop.f32.mrb[0].mxu0
      %v1844 = vadd.f32 %v1740, %v1843
      %v1845 = vpop.f32.mrb[0].mxu0
      %1846 = vdwg.mxu0
      %v1847 = vadd.f32 %v1399, %v1809
      %v1848 = vadd.f32 %v1400, %v1814
      %v1849 = vadd.f32 %v1401, %v1819
      %v1850 = vadd.f32 %v1402, %v1824
      %v1851 = vadd.f32 %v1403, %v1829
      %v1852 = vadd.f32 %v1404, %v1834
      %v1853 = vadd.f32 %v1405, %v1839
      %v1854 = vadd.f32 %v1406, %v1844
      %v1855 = vld [vmem:[%s7] sm:$0xff]
      %v1856 = vld [vmem:[%s7 + $0x8] sm:$0xff]
      %v1857 = vld [vmem:[%s7 + $0x10] sm:$0xff]
      %v1858 = vld [vmem:[%s7 + $0x18] sm:$0xff]
      %v1859 = vld [vmem:[%s7 + $0x20] sm:$0xff]
      %v1860 = vld [vmem:[%s7 + $0x28] sm:$0xff]
      %v1861 = vld [vmem:[%s7 + $0x30] sm:$0xff]
      %v1862 = vld [vmem:[%s7 + $0x38] sm:$0xff]
      %v1863 = vld [vmem:[%s7 + $0x40] sm:$0xff]
      %v1864 = vld [vmem:[%s7 + $0x48] sm:$0xff]
      %v1865 = vld [vmem:[%s7 + $0x50] sm:$0xff]
      %v1866 = vld [vmem:[%s7 + $0x58] sm:$0xff]
      %v1867 = vld [vmem:[%s7 + $0x60] sm:$0xff]
      %v1868 = vld [vmem:[%s7 + $0x68] sm:$0xff]
      %v1869 = vld [vmem:[%s7 + $0x70] sm:$0xff]
      %v1870 = vld [vmem:[%s7 + $0x78] sm:$0xff]
      %v1871 = vld [vmem:[%s8] sm:$0x1]
      %v1873 = vlaneseq
      %v1874 = vshrl.u32 %v1873, 7
      %v1875 = vsub.s32 0, %v1874
      %v1876 = vrot.slane %v1871, %v1875
      %1878 = vmatprep.subr.mxu0 0.0
      %1879 = vmatpush1.msra.mxu0 %v1855
      %1880 = vmatprep.subr.mxu0 0.0
      %1881 = vmatpush1.msra.mxu0 %v1856
      %1882 = vmatprep.subr.mxu0 0.0
      %1883 = vmatpush1.msra.mxu0 %v1857
      %1884 = vmatprep.subr.mxu0 0.0
      %1885 = vmatpush1.msra.mxu0 %v1858
      %1886 = vmatprep.subr.mxu0 0.0
      %1887 = vmatpush1.msra.mxu0 %v1859
      %1888 = vmatprep.subr.mxu0 0.0
      %1889 = vmatpush1.msra.mxu0 %v1860
      %1890 = vmatprep.subr.mxu0 0.0
      %1891 = vmatpush1.msra.mxu0 %v1861
      %1892 = vmatprep.subr.mxu0 0.0
      %1893 = vmatpush1.msra.mxu0 %v1862
      %1894 = vmatprep.subr.mxu0 0.0
      %1895 = vmatpush1.msra.mxu0 %v1863
      %1896 = vmatprep.subr.mxu0 0.0
      %1897 = vmatpush1.msra.mxu0 %v1864
      %1898 = vmatprep.subr.mxu0 0.0
      %1899 = vmatpush1.msra.mxu0 %v1865
      %1900 = vmatprep.subr.mxu0 0.0
      %1901 = vmatpush1.msra.mxu0 %v1866
      %1902 = vmatprep.subr.mxu0 0.0
      %1903 = vmatpush1.msra.mxu0 %v1867
      %1904 = vmatprep.subr.mxu0 0.0
      %1905 = vmatpush1.msra.mxu0 %v1868
      %1906 = vmatprep.subr.mxu0 0.0
      %1907 = vmatpush1.msra.mxu0 %v1869
      %1908 = vmatprep.subr.mxu0 0.0
      %1909 = vmatpush1.msra.mxu0 %v1870
      %1910 = vmatprep.subr.mxu0 0.0
      %1911 = vmatpush1.msra.mxu0 0.0
      %1912 = vmatprep.subr.mxu0 0.0
      %1913 = vmatpush1.msra.mxu0 0.0
      %1914 = vmatprep.subr.mxu0 0.0
      %1915 = vmatpush1.msra.mxu0 0.0
      %1916 = vmatprep.subr.mxu0 0.0
      %1917 = vmatpush1.msra.mxu0 0.0
      %1918 = vmatprep.subr.mxu0 0.0
      %1919 = vmatpush1.msra.mxu0 0.0
      %1920 = vmatprep.subr.mxu0 0.0
      %1921 = vmatpush1.msra.mxu0 0.0
      %1922 = vmatprep.subr.mxu0 0.0
      %1923 = vmatpush1.msra.mxu0 0.0
      %1924 = vmatprep.subr.mxu0 0.0
      %1925 = vmatpush1.msra.mxu0 0.0
      %1926 = vmatprep.subr.mxu0 0.0
      %1927 = vmatpush1.msra.mxu0 0.0
      %1928 = vmatprep.subr.mxu0 0.0
      %1929 = vmatpush1.msra.mxu0 0.0
      %1930 = vmatprep.subr.mxu0 0.0
      %1931 = vmatpush1.msra.mxu0 0.0
      %1932 = vmatprep.subr.mxu0 0.0
      %1933 = vmatpush1.msra.mxu0 0.0
      %1934 = vmatprep.subr.mxu0 0.0
      %1935 = vmatpush1.msra.mxu0 0.0
      %1936 = vmatprep.subr.mxu0 0.0
      %1937 = vmatpush1.msra.mxu0 0.0
      %1938 = vmatprep.subr.mxu0 0.0
      %1939 = vmatpush1.msra.mxu0 0.0
      %1940 = vmatprep.subr.mxu0 0.0
      %1941 = vmatpush1.msra.mxu0 0.0
      %1942 = vmatprep.mubr.f32.mxu0 0.0
      %1943 = vmatmul.mubr.f32.gmra.mrb[0].mxu0 %v1847
      %v1944 = vpop.f32.mrb[0].mxu0
      %v1945 = vadd.f32 %v1876, %v1944
      %v1946 = vpop.f32.mrb[0].mxu0
      %1947 = vmatprep.mubr.f32.mxu0 0.0
      %1948 = vmatmul.mubr.f32.gmra.mrb[0].mxu0 %v1848
      %v1949 = vpop.f32.mrb[0].mxu0
      %v1950 = vadd.f32 %v1876, %v1949
      %v1951 = vpop.f32.mrb[0].mxu0
      %1952 = vmatprep.mubr.f32.mxu0 0.0
      %1953 = vmatmul.mubr.f32.gmra.mrb[0].mxu0 %v1849
      %v1954 = vpop.f32.mrb[0].mxu0
      %v1955 = vadd.f32 %v1876, %v1954
      %v1956 = vpop.f32.mrb[0].mxu0
      %1957 = vmatprep.mubr.f32.mxu0 0.0
      %1958 = vmatmul.mubr.f32.gmra.mrb[0].mxu0 %v1850
      %v1959 = vpop.f32.mrb[0].mxu0
      %v1960 = vadd.f32 %v1876, %v1959
      %v1961 = vpop.f32.mrb[0].mxu0
      %1962 = vmatprep.mubr.f32.mxu0 0.0
      %1963 = vmatmul.mubr.f32.gmra.mrb[0].mxu0 %v1851
      %v1964 = vpop.f32.mrb[0].mxu0
      %v1965 = vadd.f32 %v1876, %v1964
      %v1966 = vpop.f32.mrb[0].mxu0
      %1967 = vmatprep.mubr.f32.mxu0 0.0
      %1968 = vmatmul.mubr.f32.gmra.mrb[0].mxu0 %v1852
      %v1969 = vpop.f32.mrb[0].mxu0
      %v1970 = vadd.f32 %v1876, %v1969
      %v1971 = vpop.f32.mrb[0].mxu0
      %1972 = vmatprep.mubr.f32.mxu0 0.0
      %1973 = vmatmul.mubr.f32.gmra.mrb[0].mxu0 %v1853
      %v1974 = vpop.f32.mrb[0].mxu0
      %v1975 = vadd.f32 %v1876, %v1974
      %v1976 = vpop.f32.mrb[0].mxu0
      %1977 = vmatprep.mubr.f32.mxu0 0.0
      %1978 = vmatmul.mubr.f32.gmra.mrb[0].mxu0 %v1854
      %v1979 = vpop.f32.mrb[0].mxu0
      %v1980 = vadd.f32 %v1876, %v1979
      %v1981 = vpop.f32.mrb[0].mxu0
      %1982 = vdwg.mxu0
      %1983 = vst [vmem:[%s332] sm:$0xff] %v1945
      %1984 = vst [vmem:[%s332 + $0x8] sm:$0xff] %v1950
      %1985 = vst [vmem:[%s332 + $0x10] sm:$0xff] %v1955
      %1986 = vst [vmem:[%s332 + $0x18] sm:$0xff] %v1960
      %1987 = vst [vmem:[%s332 + $0x20] sm:$0xff] %v1965
      %1988 = vst [vmem:[%s332 + $0x28] sm:$0xff] %v1970
      %1989 = vst [vmem:[%s332 + $0x30] sm:$0xff] %v1975
      %1990 = vst [vmem:[%s332 + $0x38] sm:$0xff] %v1980
      %p1991 = scmp.lt.s32.totalorder %s20, 1
      %s1992 = scalar_select %p1991, %s20, 1
      %s1993 = smul.addr %s1992, 8
      %s1994 = smul.addr %s1993, 8
      %s1995 = scalar_lea.vmem %s9, %s1994
      // Predicated region
      $region57: #{ms_tcn_forward.3} parent=55 // pred_check
        %p1996 = pneg %p232
      $region58: #{ms_tcn_forward.3} parent=55 // pred_check_branch
        %1998 = sbr.rel (%p1996) target = $region60
      $region59: #{ms_tcn_forward.3} parent=55 // pred_region
        _
      $region60: #{ms_tcn_forward.3} parent=55 // pred_fallthru
        _
    $region56: #{ms_tcn_forward.3} parent=5 // pred_fallthru
      _
    %p1999 = scmp.le.s32.totalorder 2, %s15
    // Predicated region
    $region61: #{ms_tcn_forward.3} parent=5 // pred_check
      %p2000 = pneg %p1999
    $region62: #{ms_tcn_forward.3} parent=5 // pred_check_branch
      %2002 = sbr.rel (%p2000) target = $region64
    $region63: #{ms_tcn_forward.3} parent=5 // pred_region
      %s2003 = ssub.s32 %s15, 2
      // Predicated region
      $region65: #{ms_tcn_forward.3} parent=63 // pred_check
        %p2004 = pneg %p238
      $region66: #{ms_tcn_forward.3} parent=63 // pred_check_branch
        %2006 = sbr.rel (%p2004) target = $region68
      $region67: #{ms_tcn_forward.3} parent=63 // pred_region
        %p2007 = scmp.lt.s32.totalorder %s21, 1
        %s2008 = scalar_select %p2007, %s21, 1
        %s2009 = smul.addr %s2008, 8
        %s2010 = smul.addr %s2009, 8
        %s2011 = scalar_lea.vmem %s9, %s2010
      $region68: #{ms_tcn_forward.3} parent=63 // pred_fallthru
        _
    $region64: #{ms_tcn_forward.3} parent=5 // pred_fallthru
      _
  $region6: #{ms_tcn_forward.3} parent=0 // loop_footer
    %s19 = sadd.s32 1, %s15
  $region7: #{ms_tcn_forward.3} parent=0 // loop_footer_branch
    %14 = sbr.rel target = $region3
  $region8: #{ms_tcn_forward.3} parent=0 // loop_exit
    _

// kernel: ms_tcn_forward.2
$region0: #{ms_tcn_forward.2}
  #allocation0 [shape = 'u32[]', space=smem, size = 0x4, offset = 0x4, fixed_abs, tag = 'smem constant byte address 0x4 - core index']
  #allocation1 [shape = 'u32[144,128]{1,0:T(1,128)}', space=vmem, size = 0x12000, scoped, tag = 'internal scratch']
  %s0 = inlined_call_operand.vmem [shape: f32[2,64,128], index: 0, kind: input, shape index: {}]
  %s1 = inlined_call_operand.hbm [shape: f32[128,128], index: 1, kind: input, shape index: {}]
  %s2 = inlined_call_operand.vmem [shape: f32[1,128], index: 2, kind: input, shape index: {}]
  %s3 = inlined_call_operand.hbm [shape: f32[3,384,128], index: 3, kind: input, shape index: {}]
  %s4 = inlined_call_operand.vmem [shape: f32[3,1,128], index: 4, kind: input, shape index: {}]
  %s5 = inlined_call_operand.vmem [shape: f32[3,128,128], index: 5, kind: input, shape index: {}]
  %s6 = inlined_call_operand.vmem [shape: f32[3,1,128], index: 6, kind: input, shape index: {}]
  %s7 = inlined_call_operand.hbm [shape: f32[128,128], index: 7, kind: input, shape index: {}]
  %s8 = inlined_call_operand.vmem [shape: f32[1,128], index: 8, kind: input, shape index: {}]
  %s9 = inlined_call_operand.vmem [shape: f32[2,64,128], index: 9, kind: output, shape index: {}]
  %s10 = sld [smem:[#allocation0]]
  $region81: #{ms_tcn_forward.2} parent=0
    _
  %s12 = ssub.s32 1, %s10
  %s13 = scalar_select 0, %s12, %s10
  $region1: #{ms_tcn_forward.2} parent=0
    #allocation2 [shape = 'u8[65536]{0}', space=vmem, size = 0x10000, scoped, tag = 'input window, operand 1, single buffered']
    #allocation3 [shape = 's32[2]{0}', space=sflag, size = 0x8, scoped, tag = 'scoped memory for ms_tcn_forward.2']
    #allocation4 [shape = 'u8[589824]{0}', space=vmem, size = 0x90000, scoped, tag = 'input window, operand 3, single buffered']
    #allocation5 [shape = 's32[1]{0}', space=sflag, size = 0x4, scoped, tag = 'scoped memory for ms_tcn_forward.2']
    #allocation6 [shape = 'u8[65536]{0}', space=vmem, size = 0x10000, scoped, tag = 'input window, operand 7, single buffered']
    %14 = vsyncpa [#allocation3], 0
    %15 = vsyncpa [#allocation5], 0
    loop: start=0, step=1, limit=4
    $region2: #{ms_tcn_forward.2} parent=1 // loop_pre_header
      _
    $region3: #{ms_tcn_forward.2} parent=1 // loop_header
      %s17 = sphi 0, %s21
      %p18 = scmp.ge.s32.totalorder %s17, 4
      %s27 = sphi 0, %s29
      %s30 = sphi 0, %s27
      %s31 = sphi 0, %s30
      %s47 = sphi 0, %s31
      %s51 = sphi 0, %s51
      %s53 = sphi 0, %s51
      %s54 = sphi 0, %s53
      %s68 = sphi 0, %s54
      %s72 = sphi 0, %s72
      %s74 = sphi 0, %s72
      %s75 = sphi 0, %s74
      %s89 = sphi 0, %s75
      %s93 = sphi 0, %s93
      %s95 = sphi 0, %s93
      %s96 = sphi 0, %s95
      %s110 = sphi 0, %s96
      %s114 = sphi 0, %s114
      %s116 = sphi 0, %s114
      %s117 = sphi 0, %s116
      %s131 = sphi 0, %s117
      %s135 = sphi 0, %s135
      %s137 = sphi 0, %s135
      %s138 = sphi 0, %s137
      %s152 = sphi 0, %s138
      %s156 = sphi 0, %s156
      %s158 = sphi 0, %s156
      %s159 = sphi 0, %s158
      %s173 = sphi 0, %s159
      %s177 = sphi 0, %s177
      %s179 = sphi 0, %s177
      %s180 = sphi 0, %s179
      %s194 = sphi 0, %s180
      %s198 = sphi 0, %s198
      %s200 = sphi 0, %s198
      %s201 = sphi 0, %s200
      %s215 = sphi 0, %s201
      %s221 = sphi 0, %s223
      %s224 = sphi 0, %s221
      %s225 = sphi 0, %s224
      %s241 = sphi 0, %s225
    $region4: #{ms_tcn_forward.2} parent=1 // loop_header_branch
      %20 = sbr.rel (%p18) target = $region8
    $region5: #{ms_tcn_forward.2} parent=1 // loop_body
      %s22 = ssub.s32 %s17, 1
      %s23 = ssub.s32 %s17, 2
      %s24 = sadd.s32 %s17, 1
      %s25 = ssub.s32 %s17, %s24
      %p26 = scmp.eq.s32.totalorder %s25, 0
      %s28 = sadd.s32 %s27, 1
      %s29 = scalar_select %p26, %s27, %s28
      %p32 = pneg %p26
      %p33 = scmp.eq.s32.totalorder %s17, 1
      %p34 = por %p32, %p33
      %p35 = scmp.ne.s32.totalorder %s27, %s30
      %p36 = scmp.eq.s32.totalorder %s17, 0
      %p37 = por %p35, %p36
      %p38 = scmp.ne.s32.totalorder %s27, %s30
      %p39 = scmp.eq.s32.totalorder %s22, 1
      %p40 = por %p38, %p39
      %p41 = scmp.ne.s32.totalorder %s30, %s31
      %p42 = scmp.eq.s32.totalorder %s22, 0
      %p43 = por %p41, %p42
      %p44 = scmp.ne.s32.totalorder %s30, %s31
      %p45 = scmp.eq.s32.totalorder %s23, 1
      %p46 = por %p44, %p45
      %p48 = scmp.ne.s32.totalorder %s31, %s47
      %p49 = scmp.eq.s32.totalorder %s23, 0
      %p50 = por %p48, %p49
      %s52 = sadd.s32 %s51, 1
      %p55 = scmp.eq.s32.totalorder %s17, 1
      %p56 = scmp.ne.s32.totalorder %s51, %s53
      %p57 = scmp.eq.s32.totalorder %s17, 0
      %p58 = por %p56, %p57
      %p59 = scmp.ne.s32.totalorder %s51, %s53
      %p60 = scmp.eq.s32.totalorder %s22, 1
      %p61 = por %p59, %p60
      %p62 = scmp.ne.s32.totalorder %s53, %s54
      %p63 = scmp.eq.s32.totalorder %s22, 0
      %p64 = por %p62, %p63
      %p65 = scmp.ne.s32.totalorder %s53, %s54
      %p66 = scmp.eq.s32.totalorder %s23, 1
      %p67 = por %p65, %p66
      %p69 = scmp.ne.s32.totalorder %s54, %s68
      %p70 = scmp.eq.s32.totalorder %s23, 0
      %p71 = por %p69, %p70
      %s73 = sadd.s32 %s72, 1
      %p76 = scmp.eq.s32.totalorder %s17, 1
      %p77 = scmp.ne.s32.totalorder %s72, %s74
      %p78 = scmp.eq.s32.totalorder %s17, 0
      %p79 = por %p77, %p78
      %p80 = scmp.ne.s32.totalorder %s72, %s74
      %p81 = scmp.eq.s32.totalorder %s22, 1
      %p82 = por %p80, %p81
      %p83 = scmp.ne.s32.totalorder %s74, %s75
      %p84 = scmp.eq.s32.totalorder %s22, 0
      %p85 = por %p83, %p84
      %p86 = scmp.ne.s32.totalorder %s74, %s75
      %p87 = scmp.eq.s32.totalorder %s23, 1
      %p88 = por %p86, %p87
      %p90 = scmp.ne.s32.totalorder %s75, %s89
      %p91 = scmp.eq.s32.totalorder %s23, 0
      %p92 = por %p90, %p91
      %s94 = sadd.s32 %s93, 1
      %p97 = scmp.eq.s32.totalorder %s17, 1
      %p98 = scmp.ne.s32.totalorder %s93, %s95
      %p99 = scmp.eq.s32.totalorder %s17, 0
      %p100 = por %p98, %p99
      %p101 = scmp.ne.s32.totalorder %s93, %s95
      %p102 = scmp.eq.s32.totalorder %s22, 1
      %p103 = por %p101, %p102
      %p104 = scmp.ne.s32.totalorder %s95, %s96
      %p105 = scmp.eq.s32.totalorder %s22, 0
      %p106 = por %p104, %p105
      %p107 = scmp.ne.s32.totalorder %s95, %s96
      %p108 = scmp.eq.s32.totalorder %s23, 1
      %p109 = por %p107, %p108
      %p111 = scmp.ne.s32.totalorder %s96, %s110
      %p112 = scmp.eq.s32.totalorder %s23, 0
      %p113 = por %p111, %p112
      %s115 = sadd.s32 %s114, 1
      %p118 = scmp.eq.s32.totalorder %s17, 1
      %p119 = scmp.ne.s32.totalorder %s114, %s116
      %p120 = scmp.eq.s32.totalorder %s17, 0
      %p121 = por %p119, %p120
      %p122 = scmp.ne.s32.totalorder %s114, %s116
      %p123 = scmp.eq.s32.totalorder %s22, 1
      %p124 = por %p122, %p123
      %p125 = scmp.ne.s32.totalorder %s116, %s117
      %p126 = scmp.eq.s32.totalorder %s22, 0
      %p127 = por %p125, %p126
      %p128 = scmp.ne.s32.totalorder %s116, %s117
      %p129 = scmp.eq.s32.totalorder %s23, 1
      %p130 = por %p128, %p129
      %p132 = scmp.ne.s32.totalorder %s117, %s131
      %p133 = scmp.eq.s32.totalorder %s23, 0
      %p134 = por %p132, %p133
      %s136 = sadd.s32 %s135, 1
      %p139 = scmp.eq.s32.totalorder %s17, 1
      %p140 = scmp.ne.s32.totalorder %s135, %s137
      %p141 = scmp.eq.s32.totalorder %s17, 0
      %p142 = por %p140, %p141
      %p143 = scmp.ne.s32.totalorder %s135, %s137
      %p144 = scmp.eq.s32.totalorder %s22, 1
      %p145 = por %p143, %p144
      %p146 = scmp.ne.s32.totalorder %s137, %s138
      %p147 = scmp.eq.s32.totalorder %s22, 0
      %p148 = por %p146, %p147
      %p149 = scmp.ne.s32.totalorder %s137, %s138
      %p150 = scmp.eq.s32.totalorder %s23, 1
      %p151 = por %p149, %p150
      %p153 = scmp.ne.s32.totalorder %s138, %s152
      %p154 = scmp.eq.s32.totalorder %s23, 0
      %p155 = por %p153, %p154
      %s157 = sadd.s32 %s156, 1
      %p160 = scmp.eq.s32.totalorder %s17, 1
      %p161 = scmp.ne.s32.totalorder %s156, %s158
      %p162 = scmp.eq.s32.totalorder %s17, 0
      %p163 = por %p161, %p162
      %p164 = scmp.ne.s32.totalorder %s156, %s158
      %p165 = scmp.eq.s32.totalorder %s22, 1
      %p166 = por %p164, %p165
      %p167 = scmp.ne.s32.totalorder %s158, %s159
      %p168 = scmp.eq.s32.totalorder %s22, 0
      %p169 = por %p167, %p168
      %p170 = scmp.ne.s32.totalorder %s158, %s159
      %p171 = scmp.eq.s32.totalorder %s23, 1
      %p172 = por %p170, %p171
      %p174 = scmp.ne.s32.totalorder %s159, %s173
      %p175 = scmp.eq.s32.totalorder %s23, 0
      %p176 = por %p174, %p175
      %s178 = sadd.s32 %s177, 1
      %p181 = scmp.eq.s32.totalorder %s17, 1
      %p182 = scmp.ne.s32.totalorder %s177, %s179
      %p183 = scmp.eq.s32.totalorder %s17, 0
      %p184 = por %p182, %p183
      %p185 = scmp.ne.s32.totalorder %s177, %s179
      %p186 = scmp.eq.s32.totalorder %s22, 1
      %p187 = por %p185, %p186
      %p188 = scmp.ne.s32.totalorder %s179, %s180
      %p189 = scmp.eq.s32.totalorder %s22, 0
      %p190 = por %p188, %p189
      %p191 = scmp.ne.s32.totalorder %s179, %s180
      %p192 = scmp.eq.s32.totalorder %s23, 1
      %p193 = por %p191, %p192
      %p195 = scmp.ne.s32.totalorder %s180, %s194
      %p196 = scmp.eq.s32.totalorder %s23, 0
      %p197 = por %p195, %p196
      %s199 = sadd.s32 %s198, 1
      %p202 = scmp.eq.s32.totalorder %s17, 1
      %p203 = scmp.ne.s32.totalorder %s198, %s200
      %p204 = scmp.eq.s32.totalorder %s17, 0
      %p205 = por %p203, %p204
      %p206 = scmp.ne.s32.totalorder %s198, %s200
      %p207 = scmp.eq.s32.totalorder %s22, 1
      %p208 = por %p206, %p207
      %p209 = scmp.ne.s32.totalorder %s200, %s201
      %p210 = scmp.eq.s32.totalorder %s22, 0
      %p211 = por %p209, %p210
      %p212 = scmp.ne.s32.totalorder %s200, %s201
      %p213 = scmp.eq.s32.totalorder %s23, 1
      %p214 = por %p212, %p213
      %p216 = scmp.ne.s32.totalorder %s201, %s215
      %p217 = scmp.eq.s32.totalorder %s23, 0
      %p218 = por %p216, %p217
      %s219 = ssub.s32 %s17, %s24
      %p220 = scmp.eq.s32.totalorder %s219, 0
      %s222 = sadd.s32 %s221, 1
      %s223 = scalar_select %p220, %s221, %s222
      %p226 = pneg %p220
      %p227 = scmp.eq.s32.totalorder %s17, 1
      %p228 = por %p226, %p227
      %p229 = scmp.ne.s32.totalorder %s221, %s224
      %p230 = scmp.eq.s32.totalorder %s17, 0
      %p231 = por %p229, %p230
      %p232 = scmp.ne.s32.totalorder %s221, %s224
      %p233 = scmp.eq.s32.totalorder %s22, 1
      %p234 = por %p232, %p233
      %p235 = scmp.ne.s32.totalorder %s224, %s225
      %p236 = scmp.eq.s32.totalorder %s22, 0
      %p237 = por %p235, %p236
      %p238 = scmp.ne.s32.totalorder %s224, %s225
      %p239 = scmp.eq.s32.totalorder %s23, 1
      %p240 = por %p238, %p239
      %p242 = scmp.ne.s32.totalorder %s225, %s241
      %p243 = scmp.eq.s32.totalorder %s23, 0
      %p244 = por %p242, %p243
      %p245 = scmp.le.s32.totalorder 1, %s17
      %p246 = scmp.lt.s32.totalorder %s17, 3
      %p247 = pnand %p245, %p246
      %p248 = pneg %p247
      // Predicated region
      $region9: #{ms_tcn_forward.2} parent=5 // pred_check
        _
      $region10: #{ms_tcn_forward.2} parent=5 // pred_check_branch
        %250 = sbr.rel (%p247) target = $region12
      $region11: #{ms_tcn_forward.2} parent=5 // pred_region
        %s251 = ssub.s32 %s17, 1
        // Predicated region
        $region13: #{ms_tcn_forward.2} parent=11 // pred_check
          %p252 = pneg %p64
        $region14: #{ms_tcn_forward.2} parent=11 // pred_check_branch
          %254 = sbr.rel (%p252) target = $region16
        $region15: #{ms_tcn_forward.2} parent=11 // pred_region
          %s256 = ssub.s32 2048, 2048
          %257 = vsyncadd [#allocation3], %s256
          %s258 = sshll.u32 [#allocation2], 4
          %s259 = int_to_ptr.vmem [resolvable:$true] %s258
          %264 = dma.hbm_to_vmem [thread:$0]  %s1, 2048, %s259, [#allocation3], 128, 128, 8
        $region16: #{ms_tcn_forward.2} parent=11 // pred_fallthru
          _
        // Predicated region
        $region17: #{ms_tcn_forward.2} parent=11 // pred_check
          %p265 = pneg %p85
        $region18: #{ms_tcn_forward.2} parent=11 // pred_check_branch
          %267 = sbr.rel (%p265) target = $region20
        $region19: #{ms_tcn_forward.2} parent=11 // pred_region
          _
        $region20: #{ms_tcn_forward.2} parent=11 // pred_fallthru
          _
        // Predicated region
        $region21: #{ms_tcn_forward.2} parent=11 // pred_check
          %p268 = pneg %p106
        $region22: #{ms_tcn_forward.2} parent=11 // pred_check_branch
          %270 = sbr.rel (%p268) target = $region24
        $region23: #{ms_tcn_forward.2} parent=11 // pred_region
          %s272 = ssub.s32 18432, 18432
          %273 = vsyncadd [#allocation5], %s272
          %s274 = sshll.u32 [#allocation4], 4
          %s275 = int_to_ptr.vmem [resolvable:$true] %s274
          %280 = dma.hbm_to_vmem [thread:$0]  %s3, 18432, %s275, [#allocation5], 128, 128, 8
        $region24: #{ms_tcn_forward.2} parent=11 // pred_fallthru
          _
        // Predicated region
        $region25: #{ms_tcn_forward.2} parent=11 // pred_check
          %p281 = pneg %p127
        $region26: #{ms_tcn_forward.2} parent=11 // pred_check_branch
          %283 = sbr.rel (%p281) target = $region28
        $region27: #{ms_tcn_forward.2} parent=11 // pred_region
          _
        $region28: #{ms_tcn_forward.2} parent=11 // pred_fallthru
          _
        // Predicated region
        $region29: #{ms_tcn_forward.2} parent=11 // pred_check
          %p284 = pneg %p148
        $region30: #{ms_tcn_forward.2} parent=11 // pred_check_branch
          %286 = sbr.rel (%p284) target = $region32
        $region31: #{ms_tcn_forward.2} parent=11 // pred_region
          _
        $region32: #{ms_tcn_forward.2} parent=11 // pred_fallthru
          _
        // Predicated region
        $region33: #{ms_tcn_forward.2} parent=11 // pred_check
          %p287 = pneg %p169
        $region34: #{ms_tcn_forward.2} parent=11 // pred_check_branch
          %289 = sbr.rel (%p287) target = $region36
        $region35: #{ms_tcn_forward.2} parent=11 // pred_region
          _
        $region36: #{ms_tcn_forward.2} parent=11 // pred_fallthru
          _
        // Predicated region
        $region37: #{ms_tcn_forward.2} parent=11 // pred_check
          %p290 = pneg %p190
        $region38: #{ms_tcn_forward.2} parent=11 // pred_check_branch
          %292 = sbr.rel (%p290) target = $region40
        $region39: #{ms_tcn_forward.2} parent=11 // pred_region
          %s294 = ssub.s32 2048, 2048
          %295 = vsyncadd [#allocation5], %s294
          %s296 = sshll.u32 [#allocation6], 4
          %s297 = int_to_ptr.vmem [resolvable:$true] %s296
          %302 = dma.hbm_to_vmem [thread:$0]  %s7, 2048, %s297, [#allocation5], 128, 128, 8
        $region40: #{ms_tcn_forward.2} parent=11 // pred_fallthru
          _
        // Predicated region
        $region41: #{ms_tcn_forward.2} parent=11 // pred_check
          %p303 = pneg %p211
        $region42: #{ms_tcn_forward.2} parent=11 // pred_check_branch
          %305 = sbr.rel (%p303) target = $region44
        $region43: #{ms_tcn_forward.2} parent=11 // pred_region
          _
        $region44: #{ms_tcn_forward.2} parent=11 // pred_fallthru
          _
      $region12: #{ms_tcn_forward.2} parent=5 // pred_fallthru
        _
      %p306 = scmp.lt.s32.totalorder %s17, 2
      // Predicated region
      $region45: #{ms_tcn_forward.2} parent=5 // pred_check
        %p307 = pneg %p306
      $region46: #{ms_tcn_forward.2} parent=5 // pred_check_branch
        %309 = sbr.rel (%p307) target = $region48
      $region47: #{ms_tcn_forward.2} parent=5 // pred_region
        // Predicated region
        $region49: #{ms_tcn_forward.2} parent=47 // pred_check
          %p310 = pneg %p37
        $region50: #{ms_tcn_forward.2} parent=47 // pred_check_branch
          %312 = sbr.rel (%p310) target = $region52
        $region51: #{ms_tcn_forward.2} parent=47 // pred_region
          %p313 = scmp.lt.s32.totalorder %s17, 1
          %s314 = scalar_select %p313, %s17, 1
          %s315 = smul.addr %s314, 8
          %s316 = smul.addr %s315, 8
          %s317 = scalar_lea.vmem %s0, %s316
        $region52: #{ms_tcn_forward.2} parent=47 // pred_fallthru
          _
      $region48: #{ms_tcn_forward.2} parent=5 // pred_fallthru
        _
      %p318 = scmp.le.s32.totalorder 1, %s17
      %p319 = scmp.lt.s32.totalorder %s17, 3
      %p320 = pnand %p318, %p319
      %p321 = pneg %p320
      // Predicated region
      $region53: #{ms_tcn_forward.2} parent=5 // pred_check
        _
      $region54: #{ms_tcn_forward.2} parent=5 // pred_check_branch
        %323 = sbr.rel (%p320) target = $region56
      $region55: #{ms_tcn_forward.2} parent=5 // pred_region
        %s324 = ssub.s32 %s17, 1
        // Predicated region
        $region57: #{ms_tcn_forward.2} parent=55 // pred_check
          %p325 = pneg %p64
        $region58: #{ms_tcn_forward.2} parent=55 // pred_check_branch
          %327 = sbr.rel (%p325) target = $region60
        $region59: #{ms_tcn_forward.2} parent=55 // pred_region
          %328 = dma.done [#allocation3], 2048
        $region60: #{ms_tcn_forward.2} parent=55 // pred_fallthru
          _
        // Predicated region
        $region61: #{ms_tcn_forward.2} parent=55 // pred_check
          %p329 = pneg %p106
        $region62: #{ms_tcn_forward.2} parent=55 // pred_check_branch
          %331 = sbr.rel (%p329) target = $region64
        $region63: #{ms_tcn_forward.2} parent=55 // pred_region
          %332 = dma.done [#allocation5], 18432
        $region64: #{ms_tcn_forward.2} parent=55 // pred_fallthru
          _
        // Predicated region
        $region65: #{ms_tcn_forward.2} parent=55 // pred_check
          %p333 = pneg %p190
        $region66: #{ms_tcn_forward.2} parent=55 // pred_check_branch
          %335 = sbr.rel (%p333) target = $region68
        $region67: #{ms_tcn_forward.2} parent=55 // pred_region
          %336 = dma.done [#allocation5], 2048
        $region68: #{ms_tcn_forward.2} parent=55 // pred_fallthru
          _
        %p337 = scmp.lt.s32.totalorder %s22, 1
        %s338 = scalar_select %p337, %s22, 1
        %s339 = smul.addr %s338, 8
        %s340 = smul.addr %s339, 8
        %s341 = scalar_lea.vmem %s0, %s340
        %p342 = pneg %p43
        %p343 = pneg %p40
        %p344 = pneg %p64
        %p345 = pneg %p61
        %p346 = pneg %p85
        %p347 = pneg %p82
        %p348 = pneg %p106
        %p349 = pneg %p103
        %p350 = pneg %p127
        %p351 = pneg %p124
        %p352 = pneg %p148
        %p353 = pneg %p145
        %p354 = pneg %p169
        %p355 = pneg %p166
        %p356 = pneg %p190
        %p357 = pneg %p187
        %p358 = pneg %p211
        %p359 = pneg %p208
        %p360 = pneg %p237
        %p361 = pneg %p234
        %p362 = scmp.lt.s32.totalorder %s22, 1
        %s363 = scalar_select %p362, %s22, 1
        %s364 = smul.addr %s363, 8
        %s365 = smul.addr %s364, 8
        %s366 = scalar_lea.vmem %s9, %s365
        %p367 = scmp.lt.s32.totalorder %s22, 1
        %s368 = scalar_select %p367, %s22, 1
        %s369 = smul.addr %s368, 8
        %s370 = smul.addr %s369, 8
        %s371 = scalar_lea.vmem %s0, %s370
        %p372 = scmp.lt.s32.totalorder %s22, 1
        %s373 = scalar_select %p372, %s22, 1
        %s374 = smul.addr %s373, 8
        %s375 = smul.addr %s374, 8
        %s376 = scalar_lea.vmem %s9, %s375
        %v377 = vld [vmem:[%s371] sm:$0xff]
        %v378 = vld [vmem:[%s371 + $0x8] sm:$0xff]
        %v379 = vld [vmem:[%s371 + $0x10] sm:$0xff]
        %v380 = vld [vmem:[%s371 + $0x18] sm:$0xff]
        %v381 = vld [vmem:[%s371 + $0x20] sm:$0xff]
        %v382 = vld [vmem:[%s371 + $0x28] sm:$0xff]
        %v383 = vld [vmem:[%s371 + $0x30] sm:$0xff]
        %v384 = vld [vmem:[%s371 + $0x38] sm:$0xff]
        %v385 = vld [vmem:[#allocation2] sm:$0xff]
        %v386 = vld [vmem:[#allocation2 + $0x8] sm:$0xff]
        %v387 = vld [vmem:[#allocation2 + $0x10] sm:$0xff]
        %v388 = vld [vmem:[#allocation2 + $0x18] sm:$0xff]
        %v389 = vld [vmem:[#allocation2 + $0x20] sm:$0xff]
        %v390 = vld [vmem:[#allocation2 + $0x28] sm:$0xff]
        %v391 = vld [vmem:[#allocation2 + $0x30] sm:$0xff]
        %v392 = vld [vmem:[#allocation2 + $0x38] sm:$0xff]
        %v393 = vld [vmem:[#allocation2 + $0x40] sm:$0xff]
        %v394 = vld [vmem:[#allocation2 + $0x48] sm:$0xff]
        %v395 = vld [vmem:[#allocation2 + $0x50] sm:$0xff]
        %v396 = vld [vmem:[#allocation2 + $0x58] sm:$0xff]
        %v397 = vld [vmem:[#allocation2 + $0x60] sm:$0xff]
        %v398 = vld [vmem:[#allocation2 + $0x68] sm:$0xff]
        %v399 = vld [vmem:[#allocation2 + $0x70] sm:$0xff]
        %v400 = vld [vmem:[#allocation2 + $0x78] sm:$0xff]
        %v401 = vld [vmem:[%s2] sm:$0x1]
        %v403 = vlaneseq
        %v404 = vshrl.u32 %v403, 7
        %v405 = vsub.s32 0, %v404
        %v406 = vrot.slane %v401, %v405
        %408 = vmatprep.subr.mxu0 0.0
        %409 = vmatpush1.msra.mxu0 %v385
        %410 = vmatprep.subr.mxu0 0.0
        %411 = vmatpush1.msra.mxu0 %v386
        %412 = vmatprep.subr.mxu0 0.0
        %413 = vmatpush1.msra.mxu0 %v387
        %414 = vmatprep.subr.mxu0 0.0
        %415 = vmatpush1.msra.mxu0 %v388
        %416 = vmatprep.subr.mxu0 0.0
        %417 = vmatpush1.msra.mxu0 %v389
        %418 = vmatprep.subr.mxu0 0.0
        %419 = vmatpush1.msra.mxu0 %v390
        %420 = vmatprep.subr.mxu0 0.0
        %421 = vmatpush1.msra.mxu0 %v391
        %422 = vmatprep.subr.mxu0 0.0
        %423 = vmatpush1.msra.mxu0 %v392
        %424 = vmatprep.subr.mxu0 0.0
        %425 = vmatpush1.msra.mxu0 %v393
        %426 = vmatprep.subr.mxu0 0.0
        %427 = vmatpush1.msra.mxu0 %v394
        %428 = vmatprep.subr.mxu0 0.0
        %429 = vmatpush1.msra.mxu0 %v395
        %430 = vmatprep.subr.mxu0 0.0
        %431 = vmatpush1.msra.mxu0 %v396
        %432 = vmatprep.subr.mxu0 0.0
        %433 = vmatpush1.msra.mxu0 %v397
        %434 = vmatprep.subr.mxu0 0.0
        %435 = vmatpush1.msra.mxu0 %v398
        %436 = vmatprep.subr.mxu0 0.0
        %437 = vmatpush1.msra.mxu0 %v399
        %438 = vmatprep.subr.mxu0 0.0
        %439 = vmatpush1.msra.mxu0 %v400
        %440 = vmatprep.subr.mxu0 0.0
        %441 = vmatpush1.msra.mxu0 0.0
        %442 = vmatprep.subr.mxu0 0.0
        %443 = vmatpush1.msra.mxu0 0.0
        %444 = vmatprep.subr.mxu0 0.0
        %445 = vmatpush1.msra.mxu0 0.0
        %446 = vmatprep.subr.mxu0 0.0
        %447 = vmatpush1.msra.mxu0 0.0
        %448 = vmatprep.subr.mxu0 0.0
        %449 = vmatpush1.msra.mxu0 0.0
        %450 = vmatprep.subr.mxu0 0.0
        %451 = vmatpush1.msra.mxu0 0.0
        %452 = vmatprep.subr.mxu0 0.0
        %453 = vmatpush1.msra.mxu0 0.0
        %454 = vmatprep.subr.mxu0 0.0
        %455 = vmatpush1.msra.mxu0 0.0
        %456 = vmatprep.subr.mxu0 0.0
        %457 = vmatpush1.msra.mxu0 0.0
        %458 = vmatprep.subr.mxu0 0.0
        %459 = vmatpush1.msra.mxu0 0.0
        %460 = vmatprep.subr.mxu0 0.0
        %461 = vmatpush1.msra.mxu0 0.0
        %462 = vmatprep.subr.mxu0 0.0
        %463 = vmatpush1.msra.mxu0 0.0
        %464 = vmatprep.subr.mxu0 0.0
        %465 = vmatpush1.msra.mxu0 0.0
        %466 = vmatprep.subr.mxu0 0.0
        %467 = vmatpush1.msra.mxu0 0.0
        %468 = vmatprep.subr.mxu0 0.0
        %469 = vmatpush1.msra.mxu0 0.0
        %470 = vmatprep.subr.mxu0 0.0
        %471 = vmatpush1.msra.mxu0 0.0
        %472 = vmatprep.mubr.f32.mxu0 0.0
        %473 = vmatmul.mubr.f32.gmra.mrb[0].mxu0 %v377
        %v474 = vpop.f32.mrb[0].mxu0
        %v475 = vadd.f32 %v406, %v474
        %v476 = vpop.f32.mrb[0].mxu0
        %477 = vmatprep.mubr.f32.mxu0 0.0
        %478 = vmatmul.mubr.f32.gmra.mrb[0].mxu0 %v378
        %v479 = vpop.f32.mrb[0].mxu0
        %v480 = vadd.f32 %v406, %v479
        %v481 = vpop.f32.mrb[0].mxu0
        %482 = vmatprep.mubr.f32.mxu0 0.0
        %483 = vmatmul.mubr.f32.gmra.mrb[0].mxu0 %v379
        %v484 = vpop.f32.mrb[0].mxu0
        %v485 = vadd.f32 %v406, %v484
        %v486 = vpop.f32.mrb[0].mxu0
        %487 = vmatprep.mubr.f32.mxu0 0.0
        %488 = vmatmul.mubr.f32.gmra.mrb[0].mxu0 %v380
        %v489 = vpop.f32.mrb[0].mxu0
        %v490 = vadd.f32 %v406, %v489
        %v491 = vpop.f32.mrb[0].mxu0
        %492 = vmatprep.mubr.f32.mxu0 0.0
        %493 = vmatmul.mubr.f32.gmra.mrb[0].mxu0 %v381
        %v494 = vpop.f32.mrb[0].mxu0
        %v495 = vadd.f32 %v406, %v494
        %v496 = vpop.f32.mrb[0].mxu0
        %497 = vmatprep.mubr.f32.mxu0 0.0
        %498 = vmatmul.mubr.f32.gmra.mrb[0].mxu0 %v382
        %v499 = vpop.f32.mrb[0].mxu0
        %v500 = vadd.f32 %v406, %v499
        %v501 = vpop.f32.mrb[0].mxu0
        %502 = vmatprep.mubr.f32.mxu0 0.0
        %503 = vmatmul.mubr.f32.gmra.mrb[0].mxu0 %v383
        %v504 = vpop.f32.mrb[0].mxu0
        %v505 = vadd.f32 %v406, %v504
        %v506 = vpop.f32.mrb[0].mxu0
        %507 = vmatprep.mubr.f32.mxu0 0.0
        %508 = vmatmul.mubr.f32.gmra.mrb[0].mxu0 %v384
        %v509 = vpop.f32.mrb[0].mxu0
        %v510 = vadd.f32 %v406, %v509
        %v511 = vpop.f32.mrb[0].mxu0
        %512 = vdwg.mxu0
        %vm521 = vcmask 1040384
        %v522 = vrot.slane %v475, 7
        %v523 = vrot.slane %v480, 7
        %v524 = vsel %vm521, %v522, %v523
        %v525 = vrot.slane %v485, 7
        %v526 = vsel %vm521, %v523, %v525
        %v527 = vrot.slane %v490, 7
        %v528 = vsel %vm521, %v525, %v527
        %v529 = vrot.slane %v495, 7
        %v530 = vsel %vm521, %v527, %v529
        %v531 = vrot.slane %v500, 7
        %v532 = vsel %vm521, %v529, %v531
        %v533 = vrot.slane %v505, 7
        %v534 = vsel %vm521, %v531, %v533
        %v535 = vrot.slane %v510, 7
        %v536 = vsel %vm521, %v533, %v535
        %v545 = vsel %vm521, 0.0, %v522
        %vm546 = vcmask 1046528
        %v547 = vrot.slane %v475, 1
        %v548 = vrot.slane %v480, 1
        %v549 = vsel %vm546, %v547, %v548
        %v550 = vrot.slane %v485, 1
        %v551 = vsel %vm546, %v548, %v550
        %v552 = vrot.slane %v490, 1
        %v553 = vsel %vm546, %v550, %v552
        %v554 = vrot.slane %v495, 1
        %v555 = vsel %vm546, %v552, %v554
        %v556 = vrot.slane %v500, 1
        %v557 = vsel %vm546, %v554, %v556
        %v558 = vrot.slane %v505, 1
        %v559 = vsel %vm546, %v556, %v558
        %v560 = vrot.slane %v510, 1
        %v561 = vsel %vm546, %v558, %v560
        %v570 = vsel %vm546, %v560, 0.0
        %v571 = vld [vmem:[#allocation4] sm:$0xff]
        %v572 = vld [vmem:[#allocation4 + $0x8] sm:$0xff]
        %v573 = vld [vmem:[#allocation4 + $0x10] sm:$0xff]
        %v574 = vld [vmem:[#allocation4 + $0x18] sm:$0xff]
        %v575 = vld [vmem:[#allocation4 + $0x20] sm:$0xff]
        %v576 = vld [vmem:[#allocation4 + $0x28] sm:$0xff]
        %v577 = vld [vmem:[#allocation4 + $0x30] sm:$0xff]
        %v578 = vld [vmem:[#allocation4 + $0x38] sm:$0xff]
        %v579 = vld [vmem:[#allocation4 + $0x40] sm:$0xff]
        %v580 = vld [vmem:[#allocation4 + $0x48] sm:$0xff]
        %v581 = vld [vmem:[#allocation4 + $0x50] sm:$0xff]
        %v582 = vld [vmem:[#allocation4 + $0x58] sm:$0xff]
        %v583 = vld [vmem:[#allocation4 + $0x60] sm:$0xff]
        %v584 = vld [vmem:[#allocation4 + $0x68] sm:$0xff]
        %v585 = vld [vmem:[#allocation4 + $0x70] sm:$0xff]
        %v586 = vld [vmem:[#allocation4 + $0x78] sm:$0xff]
        %v587 = vld [vmem:[#allocation4 + $0x80] sm:$0xff]
        %v588 = vld [vmem:[#allocation4 + $0x88] sm:$0xff]
        %v589 = vld [vmem:[#allocation4 + $0x90] sm:$0xff]
        %v590 = vld [vmem:[#allocation4 + $0x98] sm:$0xff]
        %v591 = vld [vmem:[#allocation4 + $0xa0] sm:$0xff]
        %v592 = vld [vmem:[#allocation4 + $0xa8] sm:$0xff]
        %v593 = vld [vmem:[#allocation4 + $0xb0] sm:$0xff]
        %v594 = vld [vmem:[#allocation4 + $0xb8] sm:$0xff]
        %v595 = vld [vmem:[#allocation4 + $0xc0] sm:$0xff]
        %v596 = vld [vmem:[#allocation4 + $0xc8] sm:$0xff]
        %v597 = vld [vmem:[#allocation4 + $0xd0] sm:$0xff]
        %v598 = vld [vmem:[#allocation4 + $0xd8] sm:$0xff]
        %v599 = vld [vmem:[#allocation4 + $0xe0] sm:$0xff]
        %v600 = vld [vmem:[#allocation4 + $0xe8] sm:$0xff]
        %v601 = vld [vmem:[#allocation4 + $0xf0] sm:$0xff]
        %v602 = vld [vmem:[#allocation4 + $0xf8] sm:$0xff]
        %v603 = vld [vmem:[#allocation4 + $0x100] sm:$0xff]
        %v604 = vld [vmem:[#allocation4 + $0x108] sm:$0xff]
        %v605 = vld [vmem:[#allocation4 + $0x110] sm:$0xff]
        %v606 = vld [vmem:[#allocation4 + $0x118] sm:$0xff]
        %v607 = vld [vmem:[#allocation4 + $0x120] sm:$0xff]
        %v608 = vld [vmem:[#allocation4 + $0x128] sm:$0xff]
        %v609 = vld [vmem:[#allocation4 + $0x130] sm:$0xff]
        %v610 = vld [vmem:[#allocation4 + $0x138] sm:$0xff]
        %v611 = vld [vmem:[#allocation4 + $0x140] sm:$0xff]
        %v612 = vld [vmem:[#allocation4 + $0x148] sm:$0xff]
        %v613 = vld [vmem:[#allocation4 + $0x150] sm:$0xff]
        %v614 = vld [vmem:[#allocation4 + $0x158] sm:$0xff]
        %v615 = vld [vmem:[#allocation4 + $0x160] sm:$0xff]
        %v616 = vld [vmem:[#allocation4 + $0x168] sm:$0xff]
        %v617 = vld [vmem:[#allocation4 + $0x170] sm:$0xff]
        %v618 = vld [vmem:[#allocation4 + $0x178] sm:$0xff]
        %v619 = vld [vmem:[%s4] sm:$0x1]
        %v621 = vlaneseq
        %v622 = vshrl.u32 %v621, 7
        %v623 = vsub.s32 0, %v622
        %v624 = vrot.slane %v619, %v623
        %626 = vmatprep.subr.mxu0 0.0
        %627 = vmatpush1.msra.mxu0 %v571
        %628 = vmatprep.subr.mxu0 0.0
        %629 = vmatpush1.msra.mxu0 %v572
        %630 = vmatprep.subr.mxu0 0.0
        %631 = vmatpush1.msra.mxu0 %v573
        %632 = vmatprep.subr.mxu0 0.0
        %633 = vmatpush1.msra.mxu0 %v574
        %634 = vmatprep.subr.mxu0 0.0
        %635 = vmatpush1.msra.mxu0 %v575
        %636 = vmatprep.subr.mxu0 0.0
        %637 = vmatpush1.msra.mxu0 %v576
        %638 = vmatprep.subr.mxu0 0.0
        %639 = vmatpush1.msra.mxu0 %v577
        %640 = vmatprep.subr.mxu0 0.0
        %641 = vmatpush1.msra.mxu0 %v578
        %642 = vmatprep.subr.mxu0 0.0
        %643 = vmatpush1.msra.mxu0 %v579
        %644 = vmatprep.subr.mxu0 0.0
        %645 = vmatpush1.msra.mxu0 %v580
        %646 = vmatprep.subr.mxu0 0.0
        %647 = vmatpush1.msra.mxu0 %v581
        %648 = vmatprep.subr.mxu0 0.0
        %649 = vmatpush1.msra.mxu0 %v582
        %650 = vmatprep.subr.mxu0 0.0
        %651 = vmatpush1.msra.mxu0 %v583
        %652 = vmatprep.subr.mxu0 0.0
        %653 = vmatpush1.msra.mxu0 %v584
        %654 = vmatprep.subr.mxu0 0.0
        %655 = vmatpush1.msra.mxu0 %v585
        %656 = vmatprep.subr.mxu0 0.0
        %657 = vmatpush1.msra.mxu0 %v586
        %658 = vmatprep.subr.mxu0 0.0
        %659 = vmatpush1.msra.mxu0 %v587
        %660 = vmatprep.subr.mxu0 0.0
        %661 = vmatpush1.msra.mxu0 %v588
        %662 = vmatprep.subr.mxu0 0.0
        %663 = vmatpush1.msra.mxu0 %v589
        %664 = vmatprep.subr.mxu0 0.0
        %665 = vmatpush1.msra.mxu0 %v590
        %666 = vmatprep.subr.mxu0 0.0
        %667 = vmatpush1.msra.mxu0 %v591
        %668 = vmatprep.subr.mxu0 0.0
        %669 = vmatpush1.msra.mxu0 %v592
        %670 = vmatprep.subr.mxu0 0.0
        %671 = vmatpush1.msra.mxu0 %v593
        %672 = vmatprep.subr.mxu0 0.0
        %673 = vmatpush1.msra.mxu0 %v594
        %674 = vmatprep.subr.mxu0 0.0
        %675 = vmatpush1.msra.mxu0 %v595
        %676 = vmatprep.subr.mxu0 0.0
        %677 = vmatpush1.msra.mxu0 %v596
        %678 = vmatprep.subr.mxu0 0.0
        %679 = vmatpush1.msra.mxu0 %v597
        %680 = vmatprep.subr.mxu0 0.0
        %681 = vmatpush1.msra.mxu0 %v598
        %682 = vmatprep.subr.mxu0 0.0
        %683 = vmatpush1.msra.mxu0 %v599
        %684 = vmatprep.subr.mxu0 0.0
        %685 = vmatpush1.msra.mxu0 %v600
        %686 = vmatprep.subr.mxu0 0.0
        %687 = vmatpush1.msra.mxu0 %v601
        %688 = vmatprep.subr.mxu0 0.0
        %689 = vmatpush1.msra.mxu0 %v602
        %690 = vmatprep.mubr.f32.mxu0 %v475
        %691 = vmatmul.mubr.f32.gmra.mrb[0].mxu0 %v545
        %v692 = vpop.f32.mrb[0].mxu0
        %v693 = vadd.f32 %v624, %v692
        %v694 = vpop.f32.mrb[0].mxu0
        %695 = vmatprep.mubr.f32.mxu0 %v480
        %696 = vmatmul.mubr.f32.gmra.mrb[0].mxu0 %v524
        %v697 = vpop.f32.mrb[0].mxu0
        %v698 = vadd.f32 %v624, %v697
        %v699 = vpop.f32.mrb[0].mxu0
        %700 = vmatprep.mubr.f32.mxu0 %v485
        %701 = vmatmul.mubr.f32.gmra.mrb[0].mxu0 %v526
        %v702 = vpop.f32.mrb[0].mxu0
        %v703 = vadd.f32 %v624, %v702
        %v704 = vpop.f32.mrb[0].mxu0
        %705 = vmatprep.mubr.f32.mxu0 %v490
        %706 = vmatmul.mubr.f32.gmra.mrb[0].mxu0 %v528
        %v707 = vpop.f32.mrb[0].mxu0
        %v708 = vadd.f32 %v624, %v707
        %v709 = vpop.f32.mrb[0].mxu0
        %710 = vmatprep.mubr.f32.mxu0 %v495
        %711 = vmatmul.mubr.f32.gmra.mrb[0].mxu0 %v530
        %v712 = vpop.f32.mrb[0].mxu0
        %v713 = vadd.f32 %v624, %v712
        %v714 = vpop.f32.mrb[0].mxu0
        %715 = vmatprep.mubr.f32.mxu0 %v500
        %716 = vmatmul.mubr.f32.gmra.mrb[0].mxu0 %v532
        %v717 = vpop.f32.mrb[0].mxu0
        %v718 = vadd.f32 %v624, %v717
        %v719 = vpop.f32.mrb[0].mxu0
        %720 = vmatprep.mubr.f32.mxu0 %v505
        %721 = vmatmul.mubr.f32.gmra.mrb[0].mxu0 %v534
        %v722 = vpop.f32.mrb[0].mxu0
        %v723 = vadd.f32 %v624, %v722
        %v724 = vpop.f32.mrb[0].mxu0
        %725 = vmatprep.mubr.f32.mxu0 %v510
        %726 = vmatmul.mubr.f32.gmra.mrb[0].mxu0 %v536
        %v727 = vpop.f32.mrb[0].mxu0
        %v728 = vadd.f32 %v624, %v727
        %v729 = vpop.f32.mrb[0].mxu0
        %730 = vdwg.mxu0
        %731 = vmatprep.subr.mxu0 0.0
        %732 = vmatpush1.msra.mxu0 %v603
        %733 = vmatprep.subr.mxu0 0.0
        %734 = vmatpush1.msra.mxu0 %v604
        %735 = vmatprep.subr.mxu0 0.0
        %736 = vmatpush1.msra.mxu0 %v605
        %737 = vmatprep.subr.mxu0 0.0
        %738 = vmatpush1.msra.mxu0 %v606
        %739 = vmatprep.subr.mxu0 0.0
        %740 = vmatpush1.msra.mxu0 %v607
        %741 = vmatprep.subr.mxu0 0.0
        %742 = vmatpush1.msra.mxu0 %v608
        %743 = vmatprep.subr.mxu0 0.0
        %744 = vmatpush1.msra.mxu0 %v609
        %745 = vmatprep.subr.mxu0 0.0
        %746 = vmatpush1.msra.mxu0 %v610
        %747 = vmatprep.subr.mxu0 0.0
        %748 = vmatpush1.msra.mxu0 %v611
        %749 = vmatprep.subr.mxu0 0.0
        %750 = vmatpush1.msra.mxu0 %v612
        %751 = vmatprep.subr.mxu0 0.0
        %752 = vmatpush1.msra.mxu0 %v613
        %753 = vmatprep.subr.mxu0 0.0
        %754 = vmatpush1.msra.mxu0 %v614
        %755 = vmatprep.subr.mxu0 0.0
        %756 = vmatpush1.msra.mxu0 %v615
        %757 = vmatprep.subr.mxu0 0.0
        %758 = vmatpush1.msra.mxu0 %v616
        %759 = vmatprep.subr.mxu0 0.0
        %760 = vmatpush1.msra.mxu0 %v617
        %761 = vmatprep.subr.mxu0 0.0
        %762 = vmatpush1.msra.mxu0 %v618
        %763 = vmatprep.subr.mxu0 0.0
        %764 = vmatpush1.msra.mxu0 0.0
        %765 = vmatprep.subr.mxu0 0.0
        %766 = vmatpush1.msra.mxu0 0.0
        %767 = vmatprep.subr.mxu0 0.0
        %768 = vmatpush1.msra.mxu0 0.0
        %769 = vmatprep.subr.mxu0 0.0
        %770 = vmatpush1.msra.mxu0 0.0
        %771 = vmatprep.subr.mxu0 0.0
        %772 = vmatpush1.msra.mxu0 0.0
        %773 = vmatprep.subr.mxu0 0.0
        %774 = vmatpush1.msra.mxu0 0.0
        %775 = vmatprep.subr.mxu0 0.0
        %776 = vmatpush1.msra.mxu0 0.0
        %777 = vmatprep.subr.mxu0 0.0
        %778 = vmatpush1.msra.mxu0 0.0
        %779 = vmatprep.subr.mxu0 0.0
        %780 = vmatpush1.msra.mxu0 0.0
        %781 = vmatprep.subr.mxu0 0.0
        %782 = vmatpush1.msra.mxu0 0.0
        %783 = vmatprep.subr.mxu0 0.0
        %784 = vmatpush1.msra.mxu0 0.0
        %785 = vmatprep.subr.mxu0 0.0
        %786 = vmatpush1.msra.mxu0 0.0
        %787 = vmatprep.subr.mxu0 0.0
        %788 = vmatpush1.msra.mxu0 0.0
        %789 = vmatprep.subr.mxu0 0.0
        %790 = vmatpush1.msra.mxu0 0.0
        %791 = vmatprep.subr.mxu0 0.0
        %792 = vmatpush1.msra.mxu0 0.0
        %793 = vmatprep.subr.mxu0 0.0
        %794 = vmatpush1.msra.mxu0 0.0
        %795 = vmatprep.mubr.f32.mxu0 0.0
        %796 = vmatmul.mubr.f32.gmra.mrb[0].mxu0 %v549
        %v797 = vpop.f32.mrb[0].mxu0
        %v798 = vadd.f32 %v693, %v797
        %v799 = vpop.f32.mrb[0].mxu0
        %800 = vmatprep.mubr.f32.mxu0 0.0
        %801 = vmatmul.mubr.f32.gmra.mrb[0].mxu0 %v551
        %v802 = vpop.f32.mrb[0].mxu0
        %v803 = vadd.f32 %v698, %v802
        %v804 = vpop.f32.mrb[0].mxu0
        %805 = vmatprep.mubr.f32.mxu0 0.0
        %806 = vmatmul.mubr.f32.gmra.mrb[0].mxu0 %v553
        %v807 = vpop.f32.mrb[0].mxu0
        %v808 = vadd.f32 %v703, %v807
        %v809 = vpop.f32.mrb[0].mxu0
        %810 = vmatprep.mubr.f32.mxu0 0.0
        %811 = vmatmul.mubr.f32.gmra.mrb[0].mxu0 %v555
        %v812 = vpop.f32.mrb[0].mxu0
        %v813 = vadd.f32 %v708, %v812
        %v814 = vpop.f32.mrb[0].mxu0
        %815 = vmatprep.mubr.f32.mxu0 0.0
        %816 = vmatmul.mubr.f32.gmra.mrb[0].mxu0 %v557
        %v817 = vpop.f32.mrb[0].mxu0
        %v818 = vadd.f32 %v713, %v817
        %v819 = vpop.f32.mrb[0].mxu0
        %820 = vmatprep.mubr.f32.mxu0 0.0
        %821 = vmatmul.mubr.f32.gmra.mrb[0].mxu0 %v559
        %v822 = vpop.f32.mrb[0].mxu0
        %v823 = vadd.f32 %v718, %v822
        %v824 = vpop.f32.mrb[0].mxu0
        %825 = vmatprep.mubr.f32.mxu0 0.0
        %826 = vmatmul.mubr.f32.gmra.mrb[0].mxu0 %v561
        %v827 = vpop.f32.mrb[0].mxu0
        %v828 = vadd.f32 %v723, %v827
        %v829 = vpop.f32.mrb[0].mxu0
        %830 = vmatprep.mubr.f32.mxu0 0.0
        %831 = vmatmul.mubr.f32.gmra.mrb[0].mxu0 %v570
        %v832 = vpop.f32.mrb[0].mxu0
        %v833 = vadd.f32 %v728, %v832
        %v834 = vpop.f32.mrb[0].mxu0
        %835 = vdwg.mxu0
        %v836 = vmax.f32 %v798, 0.0
        %v837 = vmax.f32 %v803, 0.0
        %v838 = vmax.f32 %v808, 0.0
        %v839 = vmax.f32 %v813, 0.0
        %v840 = vmax.f32 %v818, 0.0
        %v841 = vmax.f32 %v823, 0.0
        %v842 = vmax.f32 %v828, 0.0
        %v843 = vmax.f32 %v833, 0.0
        %v844 = vld [vmem:[%s5] sm:$0xff]
        %v845 = vld [vmem:[%s5 + $0x8] sm:$0xff]
        %v846 = vld [vmem:[%s5 + $0x10] sm:$0xff]
        %v847 = vld [vmem:[%s5 + $0x18] sm:$0xff]
        %v848 = vld [vmem:[%s5 + $0x20] sm:$0xff]
        %v849 = vld [vmem:[%s5 + $0x28] sm:$0xff]
        %v850 = vld [vmem:[%s5 + $0x30] sm:$0xff]
        %v851 = vld [vmem:[%s5 + $0x38] sm:$0xff]
        %v852 = vld [vmem:[%s5 + $0x40] sm:$0xff]
        %v853 = vld [vmem:[%s5 + $0x48] sm:$0xff]
        %v854 = vld [vmem:[%s5 + $0x50] sm:$0xff]
        %v855 = vld [vmem:[%s5 + $0x58] sm:$0xff]
        %v856 = vld [vmem:[%s5 + $0x60] sm:$0xff]
        %v857 = vld [vmem:[%s5 + $0x68] sm:$0xff]
        %v858 = vld [vmem:[%s5 + $0x70] sm:$0xff]
        %v859 = vld [vmem:[%s5 + $0x78] sm:$0xff]
        %v860 = vld [vmem:[%s6] sm:$0x1]
        %v862 = vlaneseq
        %v863 = vshrl.u32 %v862, 7
        %v864 = vsub.s32 0, %v863
        %v865 = vrot.slane %v860, %v864
        %867 = vmatprep.subr.mxu0 0.0
        %868 = vmatpush1.msra.mxu0 %v844
        %869 = vmatprep.subr.mxu0 0.0
        %870 = vmatpush1.msra.mxu0 %v845
        %871 = vmatprep.subr.mxu0 0.0
        %872 = vmatpush1.msra.mxu0 %v846
        %873 = vmatprep.subr.mxu0 0.0
        %874 = vmatpush1.msra.mxu0 %v847
        %875 = vmatprep.subr.mxu0 0.0
        %876 = vmatpush1.msra.mxu0 %v848
        %877 = vmatprep.subr.mxu0 0.0
        %878 = vmatpush1.msra.mxu0 %v849
        %879 = vmatprep.subr.mxu0 0.0
        %880 = vmatpush1.msra.mxu0 %v850
        %881 = vmatprep.subr.mxu0 0.0
        %882 = vmatpush1.msra.mxu0 %v851
        %883 = vmatprep.subr.mxu0 0.0
        %884 = vmatpush1.msra.mxu0 %v852
        %885 = vmatprep.subr.mxu0 0.0
        %886 = vmatpush1.msra.mxu0 %v853
        %887 = vmatprep.subr.mxu0 0.0
        %888 = vmatpush1.msra.mxu0 %v854
        %889 = vmatprep.subr.mxu0 0.0
        %890 = vmatpush1.msra.mxu0 %v855
        %891 = vmatprep.subr.mxu0 0.0
        %892 = vmatpush1.msra.mxu0 %v856
        %893 = vmatprep.subr.mxu0 0.0
        %894 = vmatpush1.msra.mxu0 %v857
        %895 = vmatprep.subr.mxu0 0.0
        %896 = vmatpush1.msra.mxu0 %v858
        %897 = vmatprep.subr.mxu0 0.0
        %898 = vmatpush1.msra.mxu0 %v859
        %899 = vmatprep.subr.mxu0 0.0
        %900 = vmatpush1.msra.mxu0 0.0
        %901 = vmatprep.subr.mxu0 0.0
        %902 = vmatpush1.msra.mxu0 0.0
        %903 = vmatprep.subr.mxu0 0.0
        %904 = vmatpush1.msra.mxu0 0.0
        %905 = vmatprep.subr.mxu0 0.0
        %906 = vmatpush1.msra.mxu0 0.0
        %907 = vmatprep.subr.mxu0 0.0
        %908 = vmatpush1.msra.mxu0 0.0
        %909 = vmatprep.subr.mxu0 0.0
        %910 = vmatpush1.msra.mxu0 0.0
        %911 = vmatprep.subr.mxu0 0.0
        %912 = vmatpush1.msra.mxu0 0.0
        %913 = vmatprep.subr.mxu0 0.0
        %914 = vmatpush1.msra.mxu0 0.0
        %915 = vmatprep.subr.mxu0 0.0
        %916 = vmatpush1.msra.mxu0 0.0
        %917 = vmatprep.subr.mxu0 0.0
        %918 = vmatpush1.msra.mxu0 0.0
        %919 = vmatprep.subr.mxu0 0.0
        %920 = vmatpush1.msra.mxu0 0.0
        %921 = vmatprep.subr.mxu0 0.0
        %922 = vmatpush1.msra.mxu0 0.0
        %923 = vmatprep.subr.mxu0 0.0
        %924 = vmatpush1.msra.mxu0 0.0
        %925 = vmatprep.subr.mxu0 0.0
        %926 = vmatpush1.msra.mxu0 0.0
        %927 = vmatprep.subr.mxu0 0.0
        %928 = vmatpush1.msra.mxu0 0.0
        %929 = vmatprep.subr.mxu0 0.0
        %930 = vmatpush1.msra.mxu0 0.0
        %931 = vmatprep.mubr.f32.mxu0 0.0
        %932 = vmatmul.mubr.f32.gmra.mrb[0].mxu0 %v836
        %v933 = vpop.f32.mrb[0].mxu0
        %v934 = vadd.f32 %v865, %v933
        %v935 = vpop.f32.mrb[0].mxu0
        %936 = vmatprep.mubr.f32.mxu0 0.0
        %937 = vmatmul.mubr.f32.gmra.mrb[0].mxu0 %v837
        %v938 = vpop.f32.mrb[0].mxu0
        %v939 = vadd.f32 %v865, %v938
        %v940 = vpop.f32.mrb[0].mxu0
        %941 = vmatprep.mubr.f32.mxu0 0.0
        %942 = vmatmul.mubr.f32.gmra.mrb[0].mxu0 %v838
        %v943 = vpop.f32.mrb[0].mxu0
        %v944 = vadd.f32 %v865, %v943
        %v945 = vpop.f32.mrb[0].mxu0
        %946 = vmatprep.mubr.f32.mxu0 0.0
        %947 = vmatmul.mubr.f32.gmra.mrb[0].mxu0 %v839
        %v948 = vpop.f32.mrb[0].mxu0
        %v949 = vadd.f32 %v865, %v948
        %v950 = vpop.f32.mrb[0].mxu0
        %951 = vmatprep.mubr.f32.mxu0 0.0
        %952 = vmatmul.mubr.f32.gmra.mrb[0].mxu0 %v840
        %v953 = vpop.f32.mrb[0].mxu0
        %v954 = vadd.f32 %v865, %v953
        %v955 = vpop.f32.mrb[0].mxu0
        %956 = vmatprep.mubr.f32.mxu0 0.0
        %957 = vmatmul.mubr.f32.gmra.mrb[0].mxu0 %v841
        %v958 = vpop.f32.mrb[0].mxu0
        %v959 = vadd.f32 %v865, %v958
        %v960 = vpop.f32.mrb[0].mxu0
        %961 = vmatprep.mubr.f32.mxu0 0.0
        %962 = vmatmul.mubr.f32.gmra.mrb[0].mxu0 %v842
        %v963 = vpop.f32.mrb[0].mxu0
        %v964 = vadd.f32 %v865, %v963
        %v965 = vpop.f32.mrb[0].mxu0
        %966 = vmatprep.mubr.f32.mxu0 0.0
        %967 = vmatmul.mubr.f32.gmra.mrb[0].mxu0 %v843
        %v968 = vpop.f32.mrb[0].mxu0
        %v969 = vadd.f32 %v865, %v968
        %v970 = vpop.f32.mrb[0].mxu0
        %971 = vdwg.mxu0
        %v972 = vadd.f32 %v475, %v934
        %v973 = vadd.f32 %v480, %v939
        %v974 = vadd.f32 %v485, %v944
        %v975 = vadd.f32 %v490, %v949
        %v976 = vadd.f32 %v495, %v954
        %v977 = vadd.f32 %v500, %v959
        %v978 = vadd.f32 %v505, %v964
        %v979 = vadd.f32 %v510, %v969
        %vm988 = vcmask 1041408
        %v989 = vrot.slane %v972, 6
        %v990 = vrot.slane %v973, 6
        %v991 = vsel %vm988, %v989, %v990
        %v992 = vrot.slane %v974, 6
        %v993 = vsel %vm988, %v990, %v992
        %v994 = vrot.slane %v975, 6
        %v995 = vsel %vm988, %v992, %v994
        %v996 = vrot.slane %v976, 6
        %v997 = vsel %vm988, %v994, %v996
        %v998 = vrot.slane %v977, 6
        %v999 = vsel %vm988, %v996, %v998
        %v1000 = vrot.slane %v978, 6
        %v1001 = vsel %vm988, %v998, %v1000
        %v1002 = vrot.slane %v979, 6
        %v1003 = vsel %vm988, %v1000, %v1002
        %v1012 = vsel %vm988, 0.0, %v989
        %vm1013 = vcmask 1045504
        %v1014 = vrot.slane %v972, 2
        %v1015 = vrot.slane %v973, 2
        %v1016 = vsel %vm1013, %v1014, %v1015
        %v1017 = vrot.slane %v974, 2
        %v1018 = vsel %vm1013, %v1015, %v1017
        %v1019 = vrot.slane %v975, 2
        %v1020 = vsel %vm1013, %v1017, %v1019
        %v1021 = vrot.slane %v976, 2
        %v1022 = vsel %vm1013, %v1019, %v1021
        %v1023 = vrot.slane %v977, 2
        %v1024 = vsel %vm1013, %v1021, %v1023
        %v1025 = vrot.slane %v978, 2
        %v1026 = vsel %vm1013, %v1023, %v1025
        %v1027 = vrot.slane %v979, 2
        %v1028 = vsel %vm1013, %v1025, %v1027
        %v1037 = vsel %vm1013, %v1027, 0.0
        %s1038 = scalar_lea.vmem [#allocation4], 384
        %v1039 = vld [vmem:[%s1038] sm:$0xff]
        %v1040 = vld [vmem:[%s1038 + $0x8] sm:$0xff]
        %v1041 = vld [vmem:[%s1038 + $0x10] sm:$0xff]
        %v1042 = vld [vmem:[%s1038 + $0x18] sm:$0xff]
        %v1043 = vld [vmem:[%s1038 + $0x20] sm:$0xff]
        %v1044 = vld [vmem:[%s1038 + $0x28] sm:$0xff]
        %v1045 = vld [vmem:[%s1038 + $0x30] sm:$0xff]
        %v1046 = vld [vmem:[%s1038 + $0x38] sm:$0xff]
        %v1047 = vld [vmem:[%s1038 + $0x40] sm:$0xff]
        %v1048 = vld [vmem:[%s1038 + $0x48] sm:$0xff]
        %v1049 = vld [vmem:[%s1038 + $0x50] sm:$0xff]
        %v1050 = vld [vmem:[%s1038 + $0x58] sm:$0xff]
        %v1051 = vld [vmem:[%s1038 + $0x60] sm:$0xff]
        %v1052 = vld [vmem:[%s1038 + $0x68] sm:$0xff]
        %v1053 = vld [vmem:[%s1038 + $0x70] sm:$0xff]
        %v1054 = vld [vmem:[%s1038 + $0x78] sm:$0xff]
        %v1055 = vld [vmem:[%s1038 + $0x80] sm:$0xff]
        %v1056 = vld [vmem:[%s1038 + $0x88] sm:$0xff]
        %v1057 = vld [vmem:[%s1038 + $0x90] sm:$0xff]
        %v1058 = vld [vmem:[%s1038 + $0x98] sm:$0xff]
        %v1059 = vld [vmem:[%s1038 + $0xa0] sm:$0xff]
        %v1060 = vld [vmem:[%s1038 + $0xa8] sm:$0xff]
        %v1061 = vld [vmem:[%s1038 + $0xb0] sm:$0xff]
        %v1062 = vld [vmem:[%s1038 + $0xb8] sm:$0xff]
        %v1063 = vld [vmem:[%s1038 + $0xc0] sm:$0xff]
        %v1064 = vld [vmem:[%s1038 + $0xc8] sm:$0xff]
        %v1065 = vld [vmem:[%s1038 + $0xd0] sm:$0xff]
        %v1066 = vld [vmem:[%s1038 + $0xd8] sm:$0xff]
        %v1067 = vld [vmem:[%s1038 + $0xe0] sm:$0xff]
        %v1068 = vld [vmem:[%s1038 + $0xe8] sm:$0xff]
        %v1069 = vld [vmem:[%s1038 + $0xf0] sm:$0xff]
        %v1070 = vld [vmem:[%s1038 + $0xf8] sm:$0xff]
        %v1071 = vld [vmem:[%s1038 + $0x100] sm:$0xff]
        %v1072 = vld [vmem:[%s1038 + $0x108] sm:$0xff]
        %v1073 = vld [vmem:[%s1038 + $0x110] sm:$0xff]
        %v1074 = vld [vmem:[%s1038 + $0x118] sm:$0xff]
        %v1075 = vld [vmem:[%s1038 + $0x120] sm:$0xff]
        %v1076 = vld [vmem:[%s1038 + $0x128] sm:$0xff]
        %v1077 = vld [vmem:[%s1038 + $0x130] sm:$0xff]
        %v1078 = vld [vmem:[%s1038 + $0x138] sm:$0xff]
        %v1079 = vld [vmem:[%s1038 + $0x140] sm:$0xff]
        %v1080 = vld [vmem:[%s1038 + $0x148] sm:$0xff]
        %v1081 = vld [vmem:[%s1038 + $0x150] sm:$0xff]
        %v1082 = vld [vmem:[%s1038 + $0x158] sm:$0xff]
        %v1083 = vld [vmem:[%s1038 + $0x160] sm:$0xff]
        %v1084 = vld [vmem:[%s1038 + $0x168] sm:$0xff]
        %v1085 = vld [vmem:[%s1038 + $0x170] sm:$0xff]
        %v1086 = vld [vmem:[%s1038 + $0x178] sm:$0xff]
        %s1087 = scalar_lea.vmem %s4, 1
        %v1088 = vld [vmem:[%s1087] sm:$0x1]
        %v1090 = vlaneseq
        %v1091 = vshrl.u32 %v1090, 7
        %v1092 = vsub.s32 0, %v1091
        %v1093 = vrot.slane %v1088, %v1092
        %1095 = vmatprep.subr.mxu0 0.0
        %1096 = vmatpush1.msra.mxu0 %v1039
        %1097 = vmatprep.subr.mxu0 0.0
        %1098 = vmatpush1.msra.mxu0 %v1040
        %1099 = vmatprep.subr.mxu0 0.0
        %1100 = vmatpush1.msra.mxu0 %v1041
        %1101 = vmatprep.subr.mxu0 0.0
        %1102 = vmatpush1.msra.mxu0 %v1042
        %1103 = vmatprep.subr.mxu0 0.0
        %1104 = vmatpush1.msra.mxu0 %v1043
        %1105 = vmatprep.subr.mxu0 0.0
        %1106 = vmatpush1.msra.mxu0 %v1044
        %1107 = vmatprep.subr.mxu0 0.0
        %1108 = vmatpush1.msra.mxu0 %v1045
        %1109 = vmatprep.subr.mxu0 0.0
        %1110 = vmatpush1.msra.mxu0 %v1046
        %1111 = vmatprep.subr.mxu0 0.0
        %1112 = vmatpush1.msra.mxu0 %v1047
        %1113 = vmatprep.subr.mxu0 0.0
        %1114 = vmatpush1.msra.mxu0 %v1048
        %1115 = vmatprep.subr.mxu0 0.0
        %1116 = vmatpush1.msra.mxu0 %v1049
        %1117 = vmatprep.subr.mxu0 0.0
        %1118 = vmatpush1.msra.mxu0 %v1050
        %1119 = vmatprep.subr.mxu0 0.0
        %1120 = vmatpush1.msra.mxu0 %v1051
        %1121 = vmatprep.subr.mxu0 0.0
        %1122 = vmatpush1.msra.mxu0 %v1052
        %1123 = vmatprep.subr.mxu0 0.0
        %1124 = vmatpush1.msra.mxu0 %v1053
        %1125 = vmatprep.subr.mxu0 0.0
        %1126 = vmatpush1.msra.mxu0 %v1054
        %1127 = vmatprep.subr.mxu0 0.0
        %1128 = vmatpush1.msra.mxu0 %v1055
        %1129 = vmatprep.subr.mxu0 0.0
        %1130 = vmatpush1.msra.mxu0 %v1056
        %1131 = vmatprep.subr.mxu0 0.0
        %1132 = vmatpush1.msra.mxu0 %v1057
        %1133 = vmatprep.subr.mxu0 0.0
        %1134 = vmatpush1.msra.mxu0 %v1058
        %1135 = vmatprep.subr.mxu0 0.0
        %1136 = vmatpush1.msra.mxu0 %v1059
        %1137 = vmatprep.subr.mxu0 0.0
        %1138 = vmatpush1.msra.mxu0 %v1060
        %1139 = vmatprep.subr.mxu0 0.0
        %1140 = vmatpush1.msra.mxu0 %v1061
        %1141 = vmatprep.subr.mxu0 0.0
        %1142 = vmatpush1.msra.mxu0 %v1062
        %1143 = vmatprep.subr.mxu0 0.0
        %1144 = vmatpush1.msra.mxu0 %v1063
        %1145 = vmatprep.subr.mxu0 0.0
        %1146 = vmatpush1.msra.mxu0 %v1064
        %1147 = vmatprep.subr.mxu0 0.0
        %1148 = vmatpush1.msra.mxu0 %v1065
        %1149 = vmatprep.subr.mxu0 0.0
        %1150 = vmatpush1.msra.mxu0 %v1066
        %1151 = vmatprep.subr.mxu0 0.0
        %1152 = vmatpush1.msra.mxu0 %v1067
        %1153 = vmatprep.subr.mxu0 0.0
        %1154 = vmatpush1.msra.mxu0 %v1068
        %1155 = vmatprep.subr.mxu0 0.0
        %1156 = vmatpush1.msra.mxu0 %v1069
        %1157 = vmatprep.subr.mxu0 0.0
        %1158 = vmatpush1.msra.mxu0 %v1070
        %1159 = vmatprep.mubr.f32.mxu0 %v972
        %1160 = vmatmul.mubr.f32.gmra.mrb[0].mxu0 %v1012
        %v1161 = vpop.f32.mrb[0].mxu0
        %v1162 = vadd.f32 %v1093, %v1161
        %v1163 = vpop.f32.mrb[0].mxu0
        %1164 = vmatprep.mubr.f32.mxu0 %v973
        %1165 = vmatmul.mubr.f32.gmra.mrb[0].mxu0 %v991
        %v1166 = vpop.f32.mrb[0].mxu0
        %v1167 = vadd.f32 %v1093, %v1166
        %v1168 = vpop.f32.mrb[0].mxu0
        %1169 = vmatprep.mubr.f32.mxu0 %v974
        %1170 = vmatmul.mubr.f32.gmra.mrb[0].mxu0 %v993
        %v1171 = vpop.f32.mrb[0].mxu0
        %v1172 = vadd.f32 %v1093, %v1171
        %v1173 = vpop.f32.mrb[0].mxu0
        %1174 = vmatprep.mubr.f32.mxu0 %v975
        %1175 = vmatmul.mubr.f32.gmra.mrb[0].mxu0 %v995
        %v1176 = vpop.f32.mrb[0].mxu0
        %v1177 = vadd.f32 %v1093, %v1176
        %v1178 = vpop.f32.mrb[0].mxu0
        %1179 = vmatprep.mubr.f32.mxu0 %v976
        %1180 = vmatmul.mubr.f32.gmra.mrb[0].mxu0 %v997
        %v1181 = vpop.f32.mrb[0].mxu0
        %v1182 = vadd.f32 %v1093, %v1181
        %v1183 = vpop.f32.mrb[0].mxu0
        %1184 = vmatprep.mubr.f32.mxu0 %v977
        %1185 = vmatmul.mubr.f32.gmra.mrb[0].mxu0 %v999
        %v1186 = vpop.f32.mrb[0].mxu0
        %v1187 = vadd.f32 %v1093, %v1186
        %v1188 = vpop.f32.mrb[0].mxu0
        %1189 = vmatprep.mubr.f32.mxu0 %v978
        %1190 = vmatmul.mubr.f32.gmra.mrb[0].mxu0 %v1001
        %v1191 = vpop.f32.mrb[0].mxu0
        %v1192 = vadd.f32 %v1093, %v1191
        %v1193 = vpop.f32.mrb[0].mxu0
        %1194 = vmatprep.mubr.f32.mxu0 %v979
        %1195 = vmatmul.mubr.f32.gmra.mrb[0].mxu0 %v1003
        %v1196 = vpop.f32.mrb[0].mxu0
        %v1197 = vadd.f32 %v1093, %v1196
        %v1198 = vpop.f32.mrb[0].mxu0
        %1199 = vdwg.mxu0
        %1200 = vmatprep.subr.mxu0 0.0
        %1201 = vmatpush1.msra.mxu0 %v1071
        %1202 = vmatprep.subr.mxu0 0.0
        %1203 = vmatpush1.msra.mxu0 %v1072
        %1204 = vmatprep.subr.mxu0 0.0
        %1205 = vmatpush1.msra.mxu0 %v1073
        %1206 = vmatprep.subr.mxu0 0.0
        %1207 = vmatpush1.msra.mxu0 %v1074
        %1208 = vmatprep.subr.mxu0 0.0
        %1209 = vmatpush1.msra.mxu0 %v1075
        %1210 = vmatprep.subr.mxu0 0.0
        %1211 = vmatpush1.msra.mxu0 %v1076
        %1212 = vmatprep.subr.mxu0 0.0
        %1213 = vmatpush1.msra.mxu0 %v1077
        %1214 = vmatprep.subr.mxu0 0.0
        %1215 = vmatpush1.msra.mxu0 %v1078
        %1216 = vmatprep.subr.mxu0 0.0
        %1217 = vmatpush1.msra.mxu0 %v1079
        %1218 = vmatprep.subr.mxu0 0.0
        %1219 = vmatpush1.msra.mxu0 %v1080
        %1220 = vmatprep.subr.mxu0 0.0
        %1221 = vmatpush1.msra.mxu0 %v1081
        %1222 = vmatprep.subr.mxu0 0.0
        %1223 = vmatpush1.msra.mxu0 %v1082
        %1224 = vmatprep.subr.mxu0 0.0
        %1225 = vmatpush1.msra.mxu0 %v1083
        %1226 = vmatprep.subr.mxu0 0.0
        %1227 = vmatpush1.msra.mxu0 %v1084
        %1228 = vmatprep.subr.mxu0 0.0
        %1229 = vmatpush1.msra.mxu0 %v1085
        %1230 = vmatprep.subr.mxu0 0.0
        %1231 = vmatpush1.msra.mxu0 %v1086
        %1232 = vmatprep.subr.mxu0 0.0
        %1233 = vmatpush1.msra.mxu0 0.0
        %1234 = vmatprep.subr.mxu0 0.0
        %1235 = vmatpush1.msra.mxu0 0.0
        %1236 = vmatprep.subr.mxu0 0.0
        %1237 = vmatpush1.msra.mxu0 0.0
        %1238 = vmatprep.subr.mxu0 0.0
        %1239 = vmatpush1.msra.mxu0 0.0
        %1240 = vmatprep.subr.mxu0 0.0
        %1241 = vmatpush1.msra.mxu0 0.0
        %1242 = vmatprep.subr.mxu0 0.0
        %1243 = vmatpush1.msra.mxu0 0.0
        %1244 = vmatprep.subr.mxu0 0.0
        %1245 = vmatpush1.msra.mxu0 0.0
        %1246 = vmatprep.subr.mxu0 0.0
        %1247 = vmatpush1.msra.mxu0 0.0
        %1248 = vmatprep.subr.mxu0 0.0
        %1249 = vmatpush1.msra.mxu0 0.0
        %1250 = vmatprep.subr.mxu0 0.0
        %1251 = vmatpush1.msra.mxu0 0.0
        %1252 = vmatprep.subr.mxu0 0.0
        %1253 = vmatpush1.msra.mxu0 0.0
        %1254 = vmatprep.subr.mxu0 0.0
        %1255 = vmatpush1.msra.mxu0 0.0
        %1256 = vmatprep.subr.mxu0 0.0
        %1257 = vmatpush1.msra.mxu0 0.0
        %1258 = vmatprep.subr.mxu0 0.0
        %1259 = vmatpush1.msra.mxu0 0.0
        %1260 = vmatprep.subr.mxu0 0.0
        %1261 = vmatpush1.msra.mxu0 0.0
        %1262 = vmatprep.subr.mxu0 0.0
        %1263 = vmatpush1.msra.mxu0 0.0
        %1264 = vmatprep.mubr.f32.mxu0 0.0
        %1265 = vmatmul.mubr.f32.gmra.mrb[0].mxu0 %v1016
        %v1266 = vpop.f32.mrb[0].mxu0
        %v1267 = vadd.f32 %v1162, %v1266
        %v1268 = vpop.f32.mrb[0].mxu0
        %1269 = vmatprep.mubr.f32.mxu0 0.0
        %1270 = vmatmul.mubr.f32.gmra.mrb[0].mxu0 %v1018
        %v1271 = vpop.f32.mrb[0].mxu0
        %v1272 = vadd.f32 %v1167, %v1271
        %v1273 = vpop.f32.mrb[0].mxu0
        %1274 = vmatprep.mubr.f32.mxu0 0.0
        %1275 = vmatmul.mubr.f32.gmra.mrb[0].mxu0 %v1020
        %v1276 = vpop.f32.mrb[0].mxu0
        %v1277 = vadd.f32 %v1172, %v1276
        %v1278 = vpop.f32.mrb[0].mxu0
        %1279 = vmatprep.mubr.f32.mxu0 0.0
        %1280 = vmatmul.mubr.f32.gmra.mrb[0].mxu0 %v1022
        %v1281 = vpop.f32.mrb[0].mxu0
        %v1282 = vadd.f32 %v1177, %v1281
        %v1283 = vpop.f32.mrb[0].mxu0
        %1284 = vmatprep.mubr.f32.mxu0 0.0
        %1285 = vmatmul.mubr.f32.gmra.mrb[0].mxu0 %v1024
        %v1286 = vpop.f32.mrb[0].mxu0
        %v1287 = vadd.f32 %v1182, %v1286
        %v1288 = vpop.f32.mrb[0].mxu0
        %1289 = vmatprep.mubr.f32.mxu0 0.0
        %1290 = vmatmul.mubr.f32.gmra.mrb[0].mxu0 %v1026
        %v1291 = vpop.f32.mrb[0].mxu0
        %v1292 = vadd.f32 %v1187, %v1291
        %v1293 = vpop.f32.mrb[0].mxu0
        %1294 = vmatprep.mubr.f32.mxu0 0.0
        %1295 = vmatmul.mubr.f32.gmra.mrb[0].mxu0 %v1028
        %v1296 = vpop.f32.mrb[0].mxu0
        %v1297 = vadd.f32 %v1192, %v1296
        %v1298 = vpop.f32.mrb[0].mxu0
        %1299 = vmatprep.mubr.f32.mxu0 0.0
        %1300 = vmatmul.mubr.f32.gmra.mrb[0].mxu0 %v1037
        %v1301 = vpop.f32.mrb[0].mxu0
        %v1302 = vadd.f32 %v1197, %v1301
        %v1303 = vpop.f32.mrb[0].mxu0
        %1304 = vdwg.mxu0
        %v1305 = vmax.f32 %v1267, 0.0
        %v1306 = vmax.f32 %v1272, 0.0
        %v1307 = vmax.f32 %v1277, 0.0
        %v1308 = vmax.f32 %v1282, 0.0
        %v1309 = vmax.f32 %v1287, 0.0
        %v1310 = vmax.f32 %v1292, 0.0
        %v1311 = vmax.f32 %v1297, 0.0
        %v1312 = vmax.f32 %v1302, 0.0
        %s1313 = scalar_lea.vmem %s5, 128
        %v1314 = vld [vmem:[%s1313] sm:$0xff]
        %v1315 = vld [vmem:[%s1313 + $0x8] sm:$0xff]
        %v1316 = vld [vmem:[%s1313 + $0x10] sm:$0xff]
        %v1317 = vld [vmem:[%s1313 + $0x18] sm:$0xff]
        %v1318 = vld [vmem:[%s1313 + $0x20] sm:$0xff]
        %v1319 = vld [vmem:[%s1313 + $0x28] sm:$0xff]
        %v1320 = vld [vmem:[%s1313 + $0x30] sm:$0xff]
        %v1321 = vld [vmem:[%s1313 + $0x38] sm:$0xff]
        %v1322 = vld [vmem:[%s1313 + $0x40] sm:$0xff]
        %v1323 = vld [vmem:[%s1313 + $0x48] sm:$0xff]
        %v1324 = vld [vmem:[%s1313 + $0x50] sm:$0xff]
        %v1325 = vld [vmem:[%s1313 + $0x58] sm:$0xff]
        %v1326 = vld [vmem:[%s1313 + $0x60] sm:$0xff]
        %v1327 = vld [vmem:[%s1313 + $0x68] sm:$0xff]
        %v1328 = vld [vmem:[%s1313 + $0x70] sm:$0xff]
        %v1329 = vld [vmem:[%s1313 + $0x78] sm:$0xff]
        %s1330 = scalar_lea.vmem %s6, 1
        %v1331 = vld [vmem:[%s1330] sm:$0x1]
        %v1333 = vlaneseq
        %v1334 = vshrl.u32 %v1333, 7
        %v1335 = vsub.s32 0, %v1334
        %v1336 = vrot.slane %v1331, %v1335
        %1338 = vmatprep.subr.mxu0 0.0
        %1339 = vmatpush1.msra.mxu0 %v1314
        %1340 = vmatprep.subr.mxu0 0.0
        %1341 = vmatpush1.msra.mxu0 %v1315
        %1342 = vmatprep.subr.mxu0 0.0
        %1343 = vmatpush1.msra.mxu0 %v1316
        %1344 = vmatprep.subr.mxu0 0.0
        %1345 = vmatpush1.msra.mxu0 %v1317
        %1346 = vmatprep.subr.mxu0 0.0
        %1347 = vmatpush1.msra.mxu0 %v1318
        %1348 = vmatprep.subr.mxu0 0.0
        %1349 = vmatpush1.msra.mxu0 %v1319
        %1350 = vmatprep.subr.mxu0 0.0
        %1351 = vmatpush1.msra.mxu0 %v1320
        %1352 = vmatprep.subr.mxu0 0.0
        %1353 = vmatpush1.msra.mxu0 %v1321
        %1354 = vmatprep.subr.mxu0 0.0
        %1355 = vmatpush1.msra.mxu0 %v1322
        %1356 = vmatprep.subr.mxu0 0.0
        %1357 = vmatpush1.msra.mxu0 %v1323
        %1358 = vmatprep.subr.mxu0 0.0
        %1359 = vmatpush1.msra.mxu0 %v1324
        %1360 = vmatprep.subr.mxu0 0.0
        %1361 = vmatpush1.msra.mxu0 %v1325
        %1362 = vmatprep.subr.mxu0 0.0
        %1363 = vmatpush1.msra.mxu0 %v1326
        %1364 = vmatprep.subr.mxu0 0.0
        %1365 = vmatpush1.msra.mxu0 %v1327
        %1366 = vmatprep.subr.mxu0 0.0
        %1367 = vmatpush1.msra.mxu0 %v1328
        %1368 = vmatprep.subr.mxu0 0.0
        %1369 = vmatpush1.msra.mxu0 %v1329
        %1370 = vmatprep.subr.mxu0 0.0
        %1371 = vmatpush1.msra.mxu0 0.0
        %1372 = vmatprep.subr.mxu0 0.0
        %1373 = vmatpush1.msra.mxu0 0.0
        %1374 = vmatprep.subr.mxu0 0.0
        %1375 = vmatpush1.msra.mxu0 0.0
        %1376 = vmatprep.subr.mxu0 0.0
        %1377 = vmatpush1.msra.mxu0 0.0
        %1378 = vmatprep.subr.mxu0 0.0
        %1379 = vmatpush1.msra.mxu0 0.0
        %1380 = vmatprep.subr.mxu0 0.0
        %1381 = vmatpush1.msra.mxu0 0.0
        %1382 = vmatprep.subr.mxu0 0.0
        %1383 = vmatpush1.msra.mxu0 0.0
        %1384 = vmatprep.subr.mxu0 0.0
        %1385 = vmatpush1.msra.mxu0 0.0
        %1386 = vmatprep.subr.mxu0 0.0
        %1387 = vmatpush1.msra.mxu0 0.0
        %1388 = vmatprep.subr.mxu0 0.0
        %1389 = vmatpush1.msra.mxu0 0.0
        %1390 = vmatprep.subr.mxu0 0.0
        %1391 = vmatpush1.msra.mxu0 0.0
        %1392 = vmatprep.subr.mxu0 0.0
        %1393 = vmatpush1.msra.mxu0 0.0
        %1394 = vmatprep.subr.mxu0 0.0
        %1395 = vmatpush1.msra.mxu0 0.0
        %1396 = vmatprep.subr.mxu0 0.0
        %1397 = vmatpush1.msra.mxu0 0.0
        %1398 = vmatprep.subr.mxu0 0.0
        %1399 = vmatpush1.msra.mxu0 0.0
        %1400 = vmatprep.subr.mxu0 0.0
        %1401 = vmatpush1.msra.mxu0 0.0
        %1402 = vmatprep.mubr.f32.mxu0 0.0
        %1403 = vmatmul.mubr.f32.gmra.mrb[0].mxu0 %v1305
        %v1404 = vpop.f32.mrb[0].mxu0
        %v1405 = vadd.f32 %v1336, %v1404
        %v1406 = vpop.f32.mrb[0].mxu0
        %1407 = vmatprep.mubr.f32.mxu0 0.0
        %1408 = vmatmul.mubr.f32.gmra.mrb[0].mxu0 %v1306
        %v1409 = vpop.f32.mrb[0].mxu0
        %v1410 = vadd.f32 %v1336, %v1409
        %v1411 = vpop.f32.mrb[0].mxu0
        %1412 = vmatprep.mubr.f32.mxu0 0.0
        %1413 = vmatmul.mubr.f32.gmra.mrb[0].mxu0 %v1307
        %v1414 = vpop.f32.mrb[0].mxu0
        %v1415 = vadd.f32 %v1336, %v1414
        %v1416 = vpop.f32.mrb[0].mxu0
        %1417 = vmatprep.mubr.f32.mxu0 0.0
        %1418 = vmatmul.mubr.f32.gmra.mrb[0].mxu0 %v1308
        %v1419 = vpop.f32.mrb[0].mxu0
        %v1420 = vadd.f32 %v1336, %v1419
        %v1421 = vpop.f32.mrb[0].mxu0
        %1422 = vmatprep.mubr.f32.mxu0 0.0
        %1423 = vmatmul.mubr.f32.gmra.mrb[0].mxu0 %v1309
        %v1424 = vpop.f32.mrb[0].mxu0
        %v1425 = vadd.f32 %v1336, %v1424
        %v1426 = vpop.f32.mrb[0].mxu0
        %1427 = vmatprep.mubr.f32.mxu0 0.0
        %1428 = vmatmul.mubr.f32.gmra.mrb[0].mxu0 %v1310
        %v1429 = vpop.f32.mrb[0].mxu0
        %v1430 = vadd.f32 %v1336, %v1429
        %v1431 = vpop.f32.mrb[0].mxu0
        %1432 = vmatprep.mubr.f32.mxu0 0.0
        %1433 = vmatmul.mubr.f32.gmra.mrb[0].mxu0 %v1311
        %v1434 = vpop.f32.mrb[0].mxu0
        %v1435 = vadd.f32 %v1336, %v1434
        %v1436 = vpop.f32.mrb[0].mxu0
        %1437 = vmatprep.mubr.f32.mxu0 0.0
        %1438 = vmatmul.mubr.f32.gmra.mrb[0].mxu0 %v1312
        %v1439 = vpop.f32.mrb[0].mxu0
        %v1440 = vadd.f32 %v1336, %v1439
        %v1441 = vpop.f32.mrb[0].mxu0
        %1442 = vdwg.mxu0
        %v1443 = vadd.f32 %v972, %v1405
        %v1444 = vadd.f32 %v973, %v1410
        %v1445 = vadd.f32 %v974, %v1415
        %v1446 = vadd.f32 %v975, %v1420
        %v1447 = vadd.f32 %v976, %v1425
        %v1448 = vadd.f32 %v977, %v1430
        %v1449 = vadd.f32 %v978, %v1435
        %v1450 = vadd.f32 %v979, %v1440
        %vm1459 = vcmask 1043456
        %v1460 = vrot.slane %v1443, 4
        %v1461 = vrot.slane %v1444, 4
        %v1462 = vsel %vm1459, %v1460, %v1461
        %v1463 = vrot.slane %v1445, 4
        %v1464 = vsel %vm1459, %v1461, %v1463
        %v1465 = vrot.slane %v1446, 4
        %v1466 = vsel %vm1459, %v1463, %v1465
        %v1467 = vrot.slane %v1447, 4
        %v1468 = vsel %vm1459, %v1465, %v1467
        %v1469 = vrot.slane %v1448, 4
        %v1470 = vsel %vm1459, %v1467, %v1469
        %v1471 = vrot.slane %v1449, 4
        %v1472 = vsel %vm1459, %v1469, %v1471
        %v1473 = vrot.slane %v1450, 4
        %v1474 = vsel %vm1459, %v1471, %v1473
        %v1483 = vsel %vm1459, 0.0, %v1460
        %v1485 = vsel %vm1459, %v1473, 0.0
        %s1486 = scalar_lea.vmem [#allocation4], 768
        %v1487 = vld [vmem:[%s1486] sm:$0xff]
        %v1488 = vld [vmem:[%s1486 + $0x8] sm:$0xff]
        %v1489 = vld [vmem:[%s1486 + $0x10] sm:$0xff]
        %v1490 = vld [vmem:[%s1486 + $0x18] sm:$0xff]
        %v1491 = vld [vmem:[%s1486 + $0x20] sm:$0xff]
        %v1492 = vld [vmem:[%s1486 + $0x28] sm:$0xff]
        %v1493 = vld [vmem:[%s1486 + $0x30] sm:$0xff]
        %v1494 = vld [vmem:[%s1486 + $0x38] sm:$0xff]
        %v1495 = vld [vmem:[%s1486 + $0x40] sm:$0xff]
        %v1496 = vld [vmem:[%s1486 + $0x48] sm:$0xff]
        %v1497 = vld [vmem:[%s1486 + $0x50] sm:$0xff]
        %v1498 = vld [vmem:[%s1486 + $0x58] sm:$0xff]
        %v1499 = vld [vmem:[%s1486 + $0x60] sm:$0xff]
        %v1500 = vld [vmem:[%s1486 + $0x68] sm:$0xff]
        %v1501 = vld [vmem:[%s1486 + $0x70] sm:$0xff]
        %v1502 = vld [vmem:[%s1486 + $0x78] sm:$0xff]
        %v1503 = vld [vmem:[%s1486 + $0x80] sm:$0xff]
        %v1504 = vld [vmem:[%s1486 + $0x88] sm:$0xff]
        %v1505 = vld [vmem:[%s1486 + $0x90] sm:$0xff]
        %v1506 = vld [vmem:[%s1486 + $0x98] sm:$0xff]
        %v1507 = vld [vmem:[%s1486 + $0xa0] sm:$0xff]
        %v1508 = vld [vmem:[%s1486 + $0xa8] sm:$0xff]
        %v1509 = vld [vmem:[%s1486 + $0xb0] sm:$0xff]
        %v1510 = vld [vmem:[%s1486 + $0xb8] sm:$0xff]
        %v1511 = vld [vmem:[%s1486 + $0xc0] sm:$0xff]
        %v1512 = vld [vmem:[%s1486 + $0xc8] sm:$0xff]
        %v1513 = vld [vmem:[%s1486 + $0xd0] sm:$0xff]
        %v1514 = vld [vmem:[%s1486 + $0xd8] sm:$0xff]
        %v1515 = vld [vmem:[%s1486 + $0xe0] sm:$0xff]
        %v1516 = vld [vmem:[%s1486 + $0xe8] sm:$0xff]
        %v1517 = vld [vmem:[%s1486 + $0xf0] sm:$0xff]
        %v1518 = vld [vmem:[%s1486 + $0xf8] sm:$0xff]
        %v1519 = vld [vmem:[%s1486 + $0x100] sm:$0xff]
        %v1520 = vld [vmem:[%s1486 + $0x108] sm:$0xff]
        %v1521 = vld [vmem:[%s1486 + $0x110] sm:$0xff]
        %v1522 = vld [vmem:[%s1486 + $0x118] sm:$0xff]
        %v1523 = vld [vmem:[%s1486 + $0x120] sm:$0xff]
        %v1524 = vld [vmem:[%s1486 + $0x128] sm:$0xff]
        %v1525 = vld [vmem:[%s1486 + $0x130] sm:$0xff]
        %v1526 = vld [vmem:[%s1486 + $0x138] sm:$0xff]
        %v1527 = vld [vmem:[%s1486 + $0x140] sm:$0xff]
        %v1528 = vld [vmem:[%s1486 + $0x148] sm:$0xff]
        %v1529 = vld [vmem:[%s1486 + $0x150] sm:$0xff]
        %v1530 = vld [vmem:[%s1486 + $0x158] sm:$0xff]
        %v1531 = vld [vmem:[%s1486 + $0x160] sm:$0xff]
        %v1532 = vld [vmem:[%s1486 + $0x168] sm:$0xff]
        %v1533 = vld [vmem:[%s1486 + $0x170] sm:$0xff]
        %v1534 = vld [vmem:[%s1486 + $0x178] sm:$0xff]
        %s1535 = scalar_lea.vmem %s4, 2
        %v1536 = vld [vmem:[%s1535] sm:$0x1]
        %v1538 = vlaneseq
        %v1539 = vshrl.u32 %v1538, 7
        %v1540 = vsub.s32 0, %v1539
        %v1541 = vrot.slane %v1536, %v1540
        %1543 = vmatprep.subr.mxu0 0.0
        %1544 = vmatpush1.msra.mxu0 %v1487
        %1545 = vmatprep.subr.mxu0 0.0
        %1546 = vmatpush1.msra.mxu0 %v1488
        %1547 = vmatprep.subr.mxu0 0.0
        %1548 = vmatpush1.msra.mxu0 %v1489
        %1549 = vmatprep.subr.mxu0 0.0
        %1550 = vmatpush1.msra.mxu0 %v1490
        %1551 = vmatprep.subr.mxu0 0.0
        %1552 = vmatpush1.msra.mxu0 %v1491
        %1553 = vmatprep.subr.mxu0 0.0
        %1554 = vmatpush1.msra.mxu0 %v1492
        %1555 = vmatprep.subr.mxu0 0.0
        %1556 = vmatpush1.msra.mxu0 %v1493
        %1557 = vmatprep.subr.mxu0 0.0
        %1558 = vmatpush1.msra.mxu0 %v1494
        %1559 = vmatprep.subr.mxu0 0.0
        %1560 = vmatpush1.msra.mxu0 %v1495
        %1561 = vmatprep.subr.mxu0 0.0
        %1562 = vmatpush1.msra.mxu0 %v1496
        %1563 = vmatprep.subr.mxu0 0.0
        %1564 = vmatpush1.msra.mxu0 %v1497
        %1565 = vmatprep.subr.mxu0 0.0
        %1566 = vmatpush1.msra.mxu0 %v1498
        %1567 = vmatprep.subr.mxu0 0.0
        %1568 = vmatpush1.msra.mxu0 %v1499
        %1569 = vmatprep.subr.mxu0 0.0
        %1570 = vmatpush1.msra.mxu0 %v1500
        %1571 = vmatprep.subr.mxu0 0.0
        %1572 = vmatpush1.msra.mxu0 %v1501
        %1573 = vmatprep.subr.mxu0 0.0
        %1574 = vmatpush1.msra.mxu0 %v1502
        %1575 = vmatprep.subr.mxu0 0.0
        %1576 = vmatpush1.msra.mxu0 %v1503
        %1577 = vmatprep.subr.mxu0 0.0
        %1578 = vmatpush1.msra.mxu0 %v1504
        %1579 = vmatprep.subr.mxu0 0.0
        %1580 = vmatpush1.msra.mxu0 %v1505
        %1581 = vmatprep.subr.mxu0 0.0
        %1582 = vmatpush1.msra.mxu0 %v1506
        %1583 = vmatprep.subr.mxu0 0.0
        %1584 = vmatpush1.msra.mxu0 %v1507
        %1585 = vmatprep.subr.mxu0 0.0
        %1586 = vmatpush1.msra.mxu0 %v1508
        %1587 = vmatprep.subr.mxu0 0.0
        %1588 = vmatpush1.msra.mxu0 %v1509
        %1589 = vmatprep.subr.mxu0 0.0
        %1590 = vmatpush1.msra.mxu0 %v1510
        %1591 = vmatprep.subr.mxu0 0.0
        %1592 = vmatpush1.msra.mxu0 %v1511
        %1593 = vmatprep.subr.mxu0 0.0
        %1594 = vmatpush1.msra.mxu0 %v1512
        %1595 = vmatprep.subr.mxu0 0.0
        %1596 = vmatpush1.msra.mxu0 %v1513
        %1597 = vmatprep.subr.mxu0 0.0
        %1598 = vmatpush1.msra.mxu0 %v1514
        %1599 = vmatprep.subr.mxu0 0.0
        %1600 = vmatpush1.msra.mxu0 %v1515
        %1601 = vmatprep.subr.mxu0 0.0
        %1602 = vmatpush1.msra.mxu0 %v1516
        %1603 = vmatprep.subr.mxu0 0.0
        %1604 = vmatpush1.msra.mxu0 %v1517
        %1605 = vmatprep.subr.mxu0 0.0
        %1606 = vmatpush1.msra.mxu0 %v1518
        %1607 = vmatprep.mubr.f32.mxu0 %v1443
        %1608 = vmatmul.mubr.f32.gmra.mrb[0].mxu0 %v1483
        %v1609 = vpop.f32.mrb[0].mxu0
        %v1610 = vadd.f32 %v1541, %v1609
        %v1611 = vpop.f32.mrb[0].mxu0
        %1612 = vmatprep.mubr.f32.mxu0 %v1444
        %1613 = vmatmul.mubr.f32.gmra.mrb[0].mxu0 %v1462
        %v1614 = vpop.f32.mrb[0].mxu0
        %v1615 = vadd.f32 %v1541, %v1614
        %v1616 = vpop.f32.mrb[0].mxu0
        %1617 = vmatprep.mubr.f32.mxu0 %v1445
        %1618 = vmatmul.mubr.f32.gmra.mrb[0].mxu0 %v1464
        %v1619 = vpop.f32.mrb[0].mxu0
        %v1620 = vadd.f32 %v1541, %v1619
        %v1621 = vpop.f32.mrb[0].mxu0
        %1622 = vmatprep.mubr.f32.mxu0 %v1446
        %1623 = vmatmul.mubr.f32.gmra.mrb[0].mxu0 %v1466
        %v1624 = vpop.f32.mrb[0].mxu0
        %v1625 = vadd.f32 %v1541, %v1624
        %v1626 = vpop.f32.mrb[0].mxu0
        %1627 = vmatprep.mubr.f32.mxu0 %v1447
        %1628 = vmatmul.mubr.f32.gmra.mrb[0].mxu0 %v1468
        %v1629 = vpop.f32.mrb[0].mxu0
        %v1630 = vadd.f32 %v1541, %v1629
        %v1631 = vpop.f32.mrb[0].mxu0
        %1632 = vmatprep.mubr.f32.mxu0 %v1448
        %1633 = vmatmul.mubr.f32.gmra.mrb[0].mxu0 %v1470
        %v1634 = vpop.f32.mrb[0].mxu0
        %v1635 = vadd.f32 %v1541, %v1634
        %v1636 = vpop.f32.mrb[0].mxu0
        %1637 = vmatprep.mubr.f32.mxu0 %v1449
        %1638 = vmatmul.mubr.f32.gmra.mrb[0].mxu0 %v1472
        %v1639 = vpop.f32.mrb[0].mxu0
        %v1640 = vadd.f32 %v1541, %v1639
        %v1641 = vpop.f32.mrb[0].mxu0
        %1642 = vmatprep.mubr.f32.mxu0 %v1450
        %1643 = vmatmul.mubr.f32.gmra.mrb[0].mxu0 %v1474
        %v1644 = vpop.f32.mrb[0].mxu0
        %v1645 = vadd.f32 %v1541, %v1644
        %v1646 = vpop.f32.mrb[0].mxu0
        %1647 = vdwg.mxu0
        %1648 = vmatprep.subr.mxu0 0.0
        %1649 = vmatpush1.msra.mxu0 %v1519
        %1650 = vmatprep.subr.mxu0 0.0
        %1651 = vmatpush1.msra.mxu0 %v1520
        %1652 = vmatprep.subr.mxu0 0.0
        %1653 = vmatpush1.msra.mxu0 %v1521
        %1654 = vmatprep.subr.mxu0 0.0
        %1655 = vmatpush1.msra.mxu0 %v1522
        %1656 = vmatprep.subr.mxu0 0.0
        %1657 = vmatpush1.msra.mxu0 %v1523
        %1658 = vmatprep.subr.mxu0 0.0
        %1659 = vmatpush1.msra.mxu0 %v1524
        %1660 = vmatprep.subr.mxu0 0.0
        %1661 = vmatpush1.msra.mxu0 %v1525
        %1662 = vmatprep.subr.mxu0 0.0
        %1663 = vmatpush1.msra.mxu0 %v1526
        %1664 = vmatprep.subr.mxu0 0.0
        %1665 = vmatpush1.msra.mxu0 %v1527
        %1666 = vmatprep.subr.mxu0 0.0
        %1667 = vmatpush1.msra.mxu0 %v1528
        %1668 = vmatprep.subr.mxu0 0.0
        %1669 = vmatpush1.msra.mxu0 %v1529
        %1670 = vmatprep.subr.mxu0 0.0
        %1671 = vmatpush1.msra.mxu0 %v1530
        %1672 = vmatprep.subr.mxu0 0.0
        %1673 = vmatpush1.msra.mxu0 %v1531
        %1674 = vmatprep.subr.mxu0 0.0
        %1675 = vmatpush1.msra.mxu0 %v1532
        %1676 = vmatprep.subr.mxu0 0.0
        %1677 = vmatpush1.msra.mxu0 %v1533
        %1678 = vmatprep.subr.mxu0 0.0
        %1679 = vmatpush1.msra.mxu0 %v1534
        %1680 = vmatprep.subr.mxu0 0.0
        %1681 = vmatpush1.msra.mxu0 0.0
        %1682 = vmatprep.subr.mxu0 0.0
        %1683 = vmatpush1.msra.mxu0 0.0
        %1684 = vmatprep.subr.mxu0 0.0
        %1685 = vmatpush1.msra.mxu0 0.0
        %1686 = vmatprep.subr.mxu0 0.0
        %1687 = vmatpush1.msra.mxu0 0.0
        %1688 = vmatprep.subr.mxu0 0.0
        %1689 = vmatpush1.msra.mxu0 0.0
        %1690 = vmatprep.subr.mxu0 0.0
        %1691 = vmatpush1.msra.mxu0 0.0
        %1692 = vmatprep.subr.mxu0 0.0
        %1693 = vmatpush1.msra.mxu0 0.0
        %1694 = vmatprep.subr.mxu0 0.0
        %1695 = vmatpush1.msra.mxu0 0.0
        %1696 = vmatprep.subr.mxu0 0.0
        %1697 = vmatpush1.msra.mxu0 0.0
        %1698 = vmatprep.subr.mxu0 0.0
        %1699 = vmatpush1.msra.mxu0 0.0
        %1700 = vmatprep.subr.mxu0 0.0
        %1701 = vmatpush1.msra.mxu0 0.0
        %1702 = vmatprep.subr.mxu0 0.0
        %1703 = vmatpush1.msra.mxu0 0.0
        %1704 = vmatprep.subr.mxu0 0.0
        %1705 = vmatpush1.msra.mxu0 0.0
        %1706 = vmatprep.subr.mxu0 0.0
        %1707 = vmatpush1.msra.mxu0 0.0
        %1708 = vmatprep.subr.mxu0 0.0
        %1709 = vmatpush1.msra.mxu0 0.0
        %1710 = vmatprep.subr.mxu0 0.0
        %1711 = vmatpush1.msra.mxu0 0.0
        %1712 = vmatprep.mubr.f32.mxu0 0.0
        %1713 = vmatmul.mubr.f32.gmra.mrb[0].mxu0 %v1462
        %v1714 = vpop.f32.mrb[0].mxu0
        %v1715 = vadd.f32 %v1610, %v1714
        %v1716 = vpop.f32.mrb[0].mxu0
        %1717 = vmatprep.mubr.f32.mxu0 0.0
        %1718 = vmatmul.mubr.f32.gmra.mrb[0].mxu0 %v1464
        %v1719 = vpop.f32.mrb[0].mxu0
        %v1720 = vadd.f32 %v1615, %v1719
        %v1721 = vpop.f32.mrb[0].mxu0
        %1722 = vmatprep.mubr.f32.mxu0 0.0
        %1723 = vmatmul.mubr.f32.gmra.mrb[0].mxu0 %v1466
        %v1724 = vpop.f32.mrb[0].mxu0
        %v1725 = vadd.f32 %v1620, %v1724
        %v1726 = vpop.f32.mrb[0].mxu0
        %1727 = vmatprep.mubr.f32.mxu0 0.0
        %1728 = vmatmul.mubr.f32.gmra.mrb[0].mxu0 %v1468
        %v1729 = vpop.f32.mrb[0].mxu0
        %v1730 = vadd.f32 %v1625, %v1729
        %v1731 = vpop.f32.mrb[0].mxu0
        %1732 = vmatprep.mubr.f32.mxu0 0.0
        %1733 = vmatmul.mubr.f32.gmra.mrb[0].mxu0 %v1470
        %v1734 = vpop.f32.mrb[0].mxu0
        %v1735 = vadd.f32 %v1630, %v1734
        %v1736 = vpop.f32.mrb[0].mxu0
        %1737 = vmatprep.mubr.f32.mxu0 0.0
        %1738 = vmatmul.mubr.f32.gmra.mrb[0].mxu0 %v1472
        %v1739 = vpop.f32.mrb[0].mxu0
        %v1740 = vadd.f32 %v1635, %v1739
        %v1741 = vpop.f32.mrb[0].mxu0
        %1742 = vmatprep.mubr.f32.mxu0 0.0
        %1743 = vmatmul.mubr.f32.gmra.mrb[0].mxu0 %v1474
        %v1744 = vpop.f32.mrb[0].mxu0
        %v1745 = vadd.f32 %v1640, %v1744
        %v1746 = vpop.f32.mrb[0].mxu0
        %1747 = vmatprep.mubr.f32.mxu0 0.0
        %1748 = vmatmul.mubr.f32.gmra.mrb[0].mxu0 %v1485
        %v1749 = vpop.f32.mrb[0].mxu0
        %v1750 = vadd.f32 %v1645, %v1749
        %v1751 = vpop.f32.mrb[0].mxu0
        %1752 = vdwg.mxu0
        %v1753 = vmax.f32 %v1715, 0.0
        %v1754 = vmax.f32 %v1720, 0.0
        %v1755 = vmax.f32 %v1725, 0.0
        %v1756 = vmax.f32 %v1730, 0.0
        %v1757 = vmax.f32 %v1735, 0.0
        %v1758 = vmax.f32 %v1740, 0.0
        %v1759 = vmax.f32 %v1745, 0.0
        %v1760 = vmax.f32 %v1750, 0.0
        %s1761 = scalar_lea.vmem %s5, 256
        %v1762 = vld [vmem:[%s1761] sm:$0xff]
        %v1763 = vld [vmem:[%s1761 + $0x8] sm:$0xff]
        %v1764 = vld [vmem:[%s1761 + $0x10] sm:$0xff]
        %v1765 = vld [vmem:[%s1761 + $0x18] sm:$0xff]
        %v1766 = vld [vmem:[%s1761 + $0x20] sm:$0xff]
        %v1767 = vld [vmem:[%s1761 + $0x28] sm:$0xff]
        %v1768 = vld [vmem:[%s1761 + $0x30] sm:$0xff]
        %v1769 = vld [vmem:[%s1761 + $0x38] sm:$0xff]
        %v1770 = vld [vmem:[%s1761 + $0x40] sm:$0xff]
        %v1771 = vld [vmem:[%s1761 + $0x48] sm:$0xff]
        %v1772 = vld [vmem:[%s1761 + $0x50] sm:$0xff]
        %v1773 = vld [vmem:[%s1761 + $0x58] sm:$0xff]
        %v1774 = vld [vmem:[%s1761 + $0x60] sm:$0xff]
        %v1775 = vld [vmem:[%s1761 + $0x68] sm:$0xff]
        %v1776 = vld [vmem:[%s1761 + $0x70] sm:$0xff]
        %v1777 = vld [vmem:[%s1761 + $0x78] sm:$0xff]
        %s1778 = scalar_lea.vmem %s6, 2
        %v1779 = vld [vmem:[%s1778] sm:$0x1]
        %v1781 = vlaneseq
        %v1782 = vshrl.u32 %v1781, 7
        %v1783 = vsub.s32 0, %v1782
        %v1784 = vrot.slane %v1779, %v1783
        %1786 = vmatprep.subr.mxu0 0.0
        %1787 = vmatpush1.msra.mxu0 %v1762
        %1788 = vmatprep.subr.mxu0 0.0
        %1789 = vmatpush1.msra.mxu0 %v1763
        %1790 = vmatprep.subr.mxu0 0.0
        %1791 = vmatpush1.msra.mxu0 %v1764
        %1792 = vmatprep.subr.mxu0 0.0
        %1793 = vmatpush1.msra.mxu0 %v1765
        %1794 = vmatprep.subr.mxu0 0.0
        %1795 = vmatpush1.msra.mxu0 %v1766
        %1796 = vmatprep.subr.mxu0 0.0
        %1797 = vmatpush1.msra.mxu0 %v1767
        %1798 = vmatprep.subr.mxu0 0.0
        %1799 = vmatpush1.msra.mxu0 %v1768
        %1800 = vmatprep.subr.mxu0 0.0
        %1801 = vmatpush1.msra.mxu0 %v1769
        %1802 = vmatprep.subr.mxu0 0.0
        %1803 = vmatpush1.msra.mxu0 %v1770
        %1804 = vmatprep.subr.mxu0 0.0
        %1805 = vmatpush1.msra.mxu0 %v1771
        %1806 = vmatprep.subr.mxu0 0.0
        %1807 = vmatpush1.msra.mxu0 %v1772
        %1808 = vmatprep.subr.mxu0 0.0
        %1809 = vmatpush1.msra.mxu0 %v1773
        %1810 = vmatprep.subr.mxu0 0.0
        %1811 = vmatpush1.msra.mxu0 %v1774
        %1812 = vmatprep.subr.mxu0 0.0
        %1813 = vmatpush1.msra.mxu0 %v1775
        %1814 = vmatprep.subr.mxu0 0.0
        %1815 = vmatpush1.msra.mxu0 %v1776
        %1816 = vmatprep.subr.mxu0 0.0
        %1817 = vmatpush1.msra.mxu0 %v1777
        %1818 = vmatprep.subr.mxu0 0.0
        %1819 = vmatpush1.msra.mxu0 0.0
        %1820 = vmatprep.subr.mxu0 0.0
        %1821 = vmatpush1.msra.mxu0 0.0
        %1822 = vmatprep.subr.mxu0 0.0
        %1823 = vmatpush1.msra.mxu0 0.0
        %1824 = vmatprep.subr.mxu0 0.0
        %1825 = vmatpush1.msra.mxu0 0.0
        %1826 = vmatprep.subr.mxu0 0.0
        %1827 = vmatpush1.msra.mxu0 0.0
        %1828 = vmatprep.subr.mxu0 0.0
        %1829 = vmatpush1.msra.mxu0 0.0
        %1830 = vmatprep.subr.mxu0 0.0
        %1831 = vmatpush1.msra.mxu0 0.0
        %1832 = vmatprep.subr.mxu0 0.0
        %1833 = vmatpush1.msra.mxu0 0.0
        %1834 = vmatprep.subr.mxu0 0.0
        %1835 = vmatpush1.msra.mxu0 0.0
        %1836 = vmatprep.subr.mxu0 0.0
        %1837 = vmatpush1.msra.mxu0 0.0
        %1838 = vmatprep.subr.mxu0 0.0
        %1839 = vmatpush1.msra.mxu0 0.0
        %1840 = vmatprep.subr.mxu0 0.0
        %1841 = vmatpush1.msra.mxu0 0.0
        %1842 = vmatprep.subr.mxu0 0.0
        %1843 = vmatpush1.msra.mxu0 0.0
        %1844 = vmatprep.subr.mxu0 0.0
        %1845 = vmatpush1.msra.mxu0 0.0
        %1846 = vmatprep.subr.mxu0 0.0
        %1847 = vmatpush1.msra.mxu0 0.0
        %1848 = vmatprep.subr.mxu0 0.0
        %1849 = vmatpush1.msra.mxu0 0.0
        %1850 = vmatprep.mubr.f32.mxu0 0.0
        %1851 = vmatmul.mubr.f32.gmra.mrb[0].mxu0 %v1753
        %v1852 = vpop.f32.mrb[0].mxu0
        %v1853 = vadd.f32 %v1784, %v1852
        %v1854 = vpop.f32.mrb[0].mxu0
        %1855 = vmatprep.mubr.f32.mxu0 0.0
        %1856 = vmatmul.mubr.f32.gmra.mrb[0].mxu0 %v1754
        %v1857 = vpop.f32.mrb[0].mxu0
        %v1858 = vadd.f32 %v1784, %v1857
        %v1859 = vpop.f32.mrb[0].mxu0
        %1860 = vmatprep.mubr.f32.mxu0 0.0
        %1861 = vmatmul.mubr.f32.gmra.mrb[0].mxu0 %v1755
        %v1862 = vpop.f32.mrb[0].mxu0
        %v1863 = vadd.f32 %v1784, %v1862
        %v1864 = vpop.f32.mrb[0].mxu0
        %1865 = vmatprep.mubr.f32.mxu0 0.0
        %1866 = vmatmul.mubr.f32.gmra.mrb[0].mxu0 %v1756
        %v1867 = vpop.f32.mrb[0].mxu0
        %v1868 = vadd.f32 %v1784, %v1867
        %v1869 = vpop.f32.mrb[0].mxu0
        %1870 = vmatprep.mubr.f32.mxu0 0.0
        %1871 = vmatmul.mubr.f32.gmra.mrb[0].mxu0 %v1757
        %v1872 = vpop.f32.mrb[0].mxu0
        %v1873 = vadd.f32 %v1784, %v1872
        %v1874 = vpop.f32.mrb[0].mxu0
        %1875 = vmatprep.mubr.f32.mxu0 0.0
        %1876 = vmatmul.mubr.f32.gmra.mrb[0].mxu0 %v1758
        %v1877 = vpop.f32.mrb[0].mxu0
        %v1878 = vadd.f32 %v1784, %v1877
        %v1879 = vpop.f32.mrb[0].mxu0
        %1880 = vmatprep.mubr.f32.mxu0 0.0
        %1881 = vmatmul.mubr.f32.gmra.mrb[0].mxu0 %v1759
        %v1882 = vpop.f32.mrb[0].mxu0
        %v1883 = vadd.f32 %v1784, %v1882
        %v1884 = vpop.f32.mrb[0].mxu0
        %1885 = vmatprep.mubr.f32.mxu0 0.0
        %1886 = vmatmul.mubr.f32.gmra.mrb[0].mxu0 %v1760
        %v1887 = vpop.f32.mrb[0].mxu0
        %v1888 = vadd.f32 %v1784, %v1887
        %v1889 = vpop.f32.mrb[0].mxu0
        %1890 = vdwg.mxu0
        %v1891 = vadd.f32 %v1443, %v1853
        %v1892 = vadd.f32 %v1444, %v1858
        %v1893 = vadd.f32 %v1445, %v1863
        %v1894 = vadd.f32 %v1446, %v1868
        %v1895 = vadd.f32 %v1447, %v1873
        %v1896 = vadd.f32 %v1448, %v1878
        %v1897 = vadd.f32 %v1449, %v1883
        %v1898 = vadd.f32 %v1450, %v1888
        %v1899 = vld [vmem:[#allocation6] sm:$0xff]
        %v1900 = vld [vmem:[#allocation6 + $0x8] sm:$0xff]
        %v1901 = vld [vmem:[#allocation6 + $0x10] sm:$0xff]
        %v1902 = vld [vmem:[#allocation6 + $0x18] sm:$0xff]
        %v1903 = vld [vmem:[#allocation6 + $0x20] sm:$0xff]
        %v1904 = vld [vmem:[#allocation6 + $0x28] sm:$0xff]
        %v1905 = vld [vmem:[#allocation6 + $0x30] sm:$0xff]
        %v1906 = vld [vmem:[#allocation6 + $0x38] sm:$0xff]
        %v1907 = vld [vmem:[#allocation6 + $0x40] sm:$0xff]
        %v1908 = vld [vmem:[#allocation6 + $0x48] sm:$0xff]
        %v1909 = vld [vmem:[#allocation6 + $0x50] sm:$0xff]
        %v1910 = vld [vmem:[#allocation6 + $0x58] sm:$0xff]
        %v1911 = vld [vmem:[#allocation6 + $0x60] sm:$0xff]
        %v1912 = vld [vmem:[#allocation6 + $0x68] sm:$0xff]
        %v1913 = vld [vmem:[#allocation6 + $0x70] sm:$0xff]
        %v1914 = vld [vmem:[#allocation6 + $0x78] sm:$0xff]
        %v1915 = vld [vmem:[%s8] sm:$0x1]
        %v1917 = vlaneseq
        %v1918 = vshrl.u32 %v1917, 7
        %v1919 = vsub.s32 0, %v1918
        %v1920 = vrot.slane %v1915, %v1919
        %1922 = vmatprep.subr.mxu0 0.0
        %1923 = vmatpush1.msra.mxu0 %v1899
        %1924 = vmatprep.subr.mxu0 0.0
        %1925 = vmatpush1.msra.mxu0 %v1900
        %1926 = vmatprep.subr.mxu0 0.0
        %1927 = vmatpush1.msra.mxu0 %v1901
        %1928 = vmatprep.subr.mxu0 0.0
        %1929 = vmatpush1.msra.mxu0 %v1902
        %1930 = vmatprep.subr.mxu0 0.0
        %1931 = vmatpush1.msra.mxu0 %v1903
        %1932 = vmatprep.subr.mxu0 0.0
        %1933 = vmatpush1.msra.mxu0 %v1904
        %1934 = vmatprep.subr.mxu0 0.0
        %1935 = vmatpush1.msra.mxu0 %v1905
        %1936 = vmatprep.subr.mxu0 0.0
        %1937 = vmatpush1.msra.mxu0 %v1906
        %1938 = vmatprep.subr.mxu0 0.0
        %1939 = vmatpush1.msra.mxu0 %v1907
        %1940 = vmatprep.subr.mxu0 0.0
        %1941 = vmatpush1.msra.mxu0 %v1908
        %1942 = vmatprep.subr.mxu0 0.0
        %1943 = vmatpush1.msra.mxu0 %v1909
        %1944 = vmatprep.subr.mxu0 0.0
        %1945 = vmatpush1.msra.mxu0 %v1910
        %1946 = vmatprep.subr.mxu0 0.0
        %1947 = vmatpush1.msra.mxu0 %v1911
        %1948 = vmatprep.subr.mxu0 0.0
        %1949 = vmatpush1.msra.mxu0 %v1912
        %1950 = vmatprep.subr.mxu0 0.0
        %1951 = vmatpush1.msra.mxu0 %v1913
        %1952 = vmatprep.subr.mxu0 0.0
        %1953 = vmatpush1.msra.mxu0 %v1914
        %1954 = vmatprep.subr.mxu0 0.0
        %1955 = vmatpush1.msra.mxu0 0.0
        %1956 = vmatprep.subr.mxu0 0.0
        %1957 = vmatpush1.msra.mxu0 0.0
        %1958 = vmatprep.subr.mxu0 0.0
        %1959 = vmatpush1.msra.mxu0 0.0
        %1960 = vmatprep.subr.mxu0 0.0
        %1961 = vmatpush1.msra.mxu0 0.0
        %1962 = vmatprep.subr.mxu0 0.0
        %1963 = vmatpush1.msra.mxu0 0.0
        %1964 = vmatprep.subr.mxu0 0.0
        %1965 = vmatpush1.msra.mxu0 0.0
        %1966 = vmatprep.subr.mxu0 0.0
        %1967 = vmatpush1.msra.mxu0 0.0
        %1968 = vmatprep.subr.mxu0 0.0
        %1969 = vmatpush1.msra.mxu0 0.0
        %1970 = vmatprep.subr.mxu0 0.0
        %1971 = vmatpush1.msra.mxu0 0.0
        %1972 = vmatprep.subr.mxu0 0.0
        %1973 = vmatpush1.msra.mxu0 0.0
        %1974 = vmatprep.subr.mxu0 0.0
        %1975 = vmatpush1.msra.mxu0 0.0
        %1976 = vmatprep.subr.mxu0 0.0
        %1977 = vmatpush1.msra.mxu0 0.0
        %1978 = vmatprep.subr.mxu0 0.0
        %1979 = vmatpush1.msra.mxu0 0.0
        %1980 = vmatprep.subr.mxu0 0.0
        %1981 = vmatpush1.msra.mxu0 0.0
        %1982 = vmatprep.subr.mxu0 0.0
        %1983 = vmatpush1.msra.mxu0 0.0
        %1984 = vmatprep.subr.mxu0 0.0
        %1985 = vmatpush1.msra.mxu0 0.0
        %1986 = vmatprep.mubr.f32.mxu0 0.0
        %1987 = vmatmul.mubr.f32.gmra.mrb[0].mxu0 %v1891
        %v1988 = vpop.f32.mrb[0].mxu0
        %v1989 = vadd.f32 %v1920, %v1988
        %v1990 = vpop.f32.mrb[0].mxu0
        %1991 = vmatprep.mubr.f32.mxu0 0.0
        %1992 = vmatmul.mubr.f32.gmra.mrb[0].mxu0 %v1892
        %v1993 = vpop.f32.mrb[0].mxu0
        %v1994 = vadd.f32 %v1920, %v1993
        %v1995 = vpop.f32.mrb[0].mxu0
        %1996 = vmatprep.mubr.f32.mxu0 0.0
        %1997 = vmatmul.mubr.f32.gmra.mrb[0].mxu0 %v1893
        %v1998 = vpop.f32.mrb[0].mxu0
        %v1999 = vadd.f32 %v1920, %v1998
        %v2000 = vpop.f32.mrb[0].mxu0
        %2001 = vmatprep.mubr.f32.mxu0 0.0
        %2002 = vmatmul.mubr.f32.gmra.mrb[0].mxu0 %v1894
        %v2003 = vpop.f32.mrb[0].mxu0
        %v2004 = vadd.f32 %v1920, %v2003
        %v2005 = vpop.f32.mrb[0].mxu0
        %2006 = vmatprep.mubr.f32.mxu0 0.0
        %2007 = vmatmul.mubr.f32.gmra.mrb[0].mxu0 %v1895
        %v2008 = vpop.f32.mrb[0].mxu0
        %v2009 = vadd.f32 %v1920, %v2008
        %v2010 = vpop.f32.mrb[0].mxu0
        %2011 = vmatprep.mubr.f32.mxu0 0.0
        %2012 = vmatmul.mubr.f32.gmra.mrb[0].mxu0 %v1896
        %v2013 = vpop.f32.mrb[0].mxu0
        %v2014 = vadd.f32 %v1920, %v2013
        %v2015 = vpop.f32.mrb[0].mxu0
        %2016 = vmatprep.mubr.f32.mxu0 0.0
        %2017 = vmatmul.mubr.f32.gmra.mrb[0].mxu0 %v1897
        %v2018 = vpop.f32.mrb[0].mxu0
        %v2019 = vadd.f32 %v1920, %v2018
        %v2020 = vpop.f32.mrb[0].mxu0
        %2021 = vmatprep.mubr.f32.mxu0 0.0
        %2022 = vmatmul.mubr.f32.gmra.mrb[0].mxu0 %v1898
        %v2023 = vpop.f32.mrb[0].mxu0
        %v2024 = vadd.f32 %v1920, %v2023
        %v2025 = vpop.f32.mrb[0].mxu0
        %2026 = vdwg.mxu0
        %2027 = vst [vmem:[%s376] sm:$0xff] %v1989
        %2028 = vst [vmem:[%s376 + $0x8] sm:$0xff] %v1994
        %2029 = vst [vmem:[%s376 + $0x10] sm:$0xff] %v1999
        %2030 = vst [vmem:[%s376 + $0x18] sm:$0xff] %v2004
        %2031 = vst [vmem:[%s376 + $0x20] sm:$0xff] %v2009
        %2032 = vst [vmem:[%s376 + $0x28] sm:$0xff] %v2014
        %2033 = vst [vmem:[%s376 + $0x30] sm:$0xff] %v2019
        %2034 = vst [vmem:[%s376 + $0x38] sm:$0xff] %v2024
        %p2035 = scmp.lt.s32.totalorder %s22, 1
        %s2036 = scalar_select %p2035, %s22, 1
        %s2037 = smul.addr %s2036, 8
        %s2038 = smul.addr %s2037, 8
        %s2039 = scalar_lea.vmem %s9, %s2038
        // Predicated region
        $region69: #{ms_tcn_forward.2} parent=55 // pred_check
          %p2040 = pneg %p234
        $region70: #{ms_tcn_forward.2} parent=55 // pred_check_branch
          %2042 = sbr.rel (%p2040) target = $region72
        $region71: #{ms_tcn_forward.2} parent=55 // pred_region
          _
        $region72: #{ms_tcn_forward.2} parent=55 // pred_fallthru
          _
      $region56: #{ms_tcn_forward.2} parent=5 // pred_fallthru
        _
      %p2043 = scmp.le.s32.totalorder 2, %s17
      // Predicated region
      $region73: #{ms_tcn_forward.2} parent=5 // pred_check
        %p2044 = pneg %p2043
      $region74: #{ms_tcn_forward.2} parent=5 // pred_check_branch
        %2046 = sbr.rel (%p2044) target = $region76
      $region75: #{ms_tcn_forward.2} parent=5 // pred_region
        %s2047 = ssub.s32 %s17, 2
        // Predicated region
        $region77: #{ms_tcn_forward.2} parent=75 // pred_check
          %p2048 = pneg %p240
        $region78: #{ms_tcn_forward.2} parent=75 // pred_check_branch
          %2050 = sbr.rel (%p2048) target = $region80
        $region79: #{ms_tcn_forward.2} parent=75 // pred_region
          %p2051 = scmp.lt.s32.totalorder %s23, 1
          %s2052 = scalar_select %p2051, %s23, 1
          %s2053 = smul.addr %s2052, 8
          %s2054 = smul.addr %s2053, 8
          %s2055 = scalar_lea.vmem %s9, %s2054
        $region80: #{ms_tcn_forward.2} parent=75 // pred_fallthru
          _
      $region76: #{ms_tcn_forward.2} parent=5 // pred_fallthru
        _
    $region6: #{ms_tcn_forward.2} parent=1 // loop_footer
      %s21 = sadd.s32 1, %s17
    $region7: #{ms_tcn_forward.2} parent=1 // loop_footer_branch
      %16 = sbr.rel target = $region3
    $region8: #{ms_tcn_forward.2} parent=1 // loop_exit
      _
    %2056 = vsyncpa [#allocation3], 1
    %s2057 = scalar_lea.sflag [#allocation3], 1
    %2058 = vsyncpa %s2057, 1
    %2059 = vsyncpa [#allocation5], 1

</llo_original>
